<compile_context>
chip_gen: v7x
topology: tpu7x:2x2x1
jax: 0.10.0
libtpu: 0.0.40
codegen_flags: <defaults>
</compile_context>

<pallas_src>
import math
import functools

import jax
import jax.numpy as jnp
from jax import lax
from jax.experimental import pallas as pl
from jax.experimental.pallas import tpu as pltpu

D_MODEL = 32
NHEAD = 4
DIM_FF = 64
EPS = 1e-5
HEAD_DIM = D_MODEL // NHEAD


def decoder_cfa_kernel(tgt_ref, mem_ref, posd_ref, pose_ref,
                       wqkv_ref,   # (3*NHEAD, D, hd)   pre-transposed, head-sliced
                       bqkv_ref,   # (3*NHEAD, 1, hd)
                       wo_ref,     # (NHEAD, hd, D)     pre-transposed, head-sliced
                       w1_ref,     # (D, DIM_FF)        pre-transposed
                       b1_ref,     # (1, DIM_FF)
                       w2_ref,     # (DIM_FF, D)        pre-transposed
                       vec_ref,    # (6, 1, D): [bo, b2, g1, be1, g2, be2]
                       out_ref,
                       *, bb, lt, lm):
    f32 = jnp.float32
    scale = 1.0 / math.sqrt(HEAD_DIM)

    tgt = tgt_ref[...]                      # (bb*lt, D)
    mem = mem_ref[...]                      # (bb*lm, D)
    q_in = tgt + posd_ref[...]              # query  = tgt + pos_dec
    k_in = mem + pose_ref[...]              # key    = memory + pos_enc
    v_in = mem                              # value  = memory

    mq = bb * lt
    attn = jnp.zeros((mq, D_MODEL), f32)

    # Static unroll over heads; out_proj fused into the accumulation so no
    # lane-wise concatenate of head outputs is needed.
    for h in range(NHEAD):
        qh = jnp.dot(q_in, wqkv_ref[h], preferred_element_type=f32) + bqkv_ref[h]
        kh = jnp.dot(k_in, wqkv_ref[NHEAD + h], preferred_element_type=f32) \
            + bqkv_ref[NHEAD + h]
        vh = jnp.dot(v_in, wqkv_ref[2 * NHEAD + h], preferred_element_type=f32) \
            + bqkv_ref[2 * NHEAD + h]
        qh = qh * scale

        ho_parts = []
        for b in range(bb):                 # attention is block-diagonal over batch
            qs = qh[b * lt:(b + 1) * lt]    # (lt, hd)  sublane-aligned row slice
            ks = kh[b * lm:(b + 1) * lm]    # (lm, hd)
            vs = vh[b * lm:(b + 1) * lm]    # (lm, hd)
            s = lax.dot_general(qs, ks, (((1,), (1,)), ((), ())),
                                preferred_element_type=f32)       # (lt, lm)
            s = s - jnp.max(s, axis=-1, keepdims=True)
            p = jnp.exp(s)
            p = p * pl.reciprocal(jnp.sum(p, axis=-1, keepdims=True), approx=True)
            ho_parts.append(jnp.dot(p, vs, preferred_element_type=f32))  # (lt, hd)

        ho = ho_parts[0] if bb == 1 else jnp.concatenate(ho_parts, axis=0)
        attn = attn + jnp.dot(ho, wo_ref[h], preferred_element_type=f32)  # (mq, D)

    attn = attn + vec_ref[0]                # + out_proj bias

    def layer_norm(x, g, beta):
        mu = jnp.mean(x, axis=-1, keepdims=True)
        var = jnp.mean((x - mu) ** 2, axis=-1, keepdims=True)
        return (x - mu) * lax.rsqrt(var + EPS) * g + beta

    # residual + LayerNorm1
    x = layer_norm(tgt + attn, vec_ref[2], vec_ref[3])

    # FFN (linear1 -> ReLU -> linear2), residual + LayerNorm2
    h1 = jnp.maximum(jnp.dot(x, w1_ref[...], preferred_element_type=f32)
                     + b1_ref[...], 0.0)                          # (mq, DIM_FF)
    ff = jnp.dot(h1, w2_ref[...], preferred_element_type=f32) + vec_ref[1]
    y = layer_norm(x + ff, vec_ref[4], vec_ref[5])

    # NOTE: output is (mq, 32) -> masked lane stores; a 128-lane-dense reshape of
    # the output slab was considered but skipped (in-kernel minor-dim reshape risk
    # outweighs the gain at these tiny sizes).
    out_ref[...] = y


def init_params(key):
    ks = jax.random.split(key, 12)
    s = 0.05
    return {
        "in_proj_w": jax.random.normal(ks[0], (3 * D_MODEL, D_MODEL), jnp.float32) * s,
        "in_proj_b": jax.random.normal(ks[1], (3 * D_MODEL,), jnp.float32) * s,
        "out_w": jax.random.normal(ks[2], (D_MODEL, D_MODEL), jnp.float32) * s,
        "out_b": jax.random.normal(ks[3], (D_MODEL,), jnp.float32) * s,
        "w1": jax.random.normal(ks[4], (DIM_FF, D_MODEL), jnp.float32) * s,
        "b1": jax.random.normal(ks[5], (DIM_FF,), jnp.float32) * s,
        "w2": jax.random.normal(ks[6], (D_MODEL, DIM_FF), jnp.float32) * s,
        "b2": jax.random.normal(ks[7], (D_MODEL,), jnp.float32) * s,
        "g1": jnp.ones((D_MODEL,), jnp.float32),
        "be1": jnp.zeros((D_MODEL,), jnp.float32),
        "g2": jnp.ones((D_MODEL,), jnp.float32),
        "be2": jnp.zeros((D_MODEL,), jnp.float32),
    }


def _prepare_params(p):
    """Host-side weight packing: pre-transpose to (in, out), pre-slice per head."""
    wq, wk, wv = jnp.split(p["in_proj_w"], 3, axis=0)   # each (D, D), torch (out,in)
    bq, bk, bv = jnp.split(p["in_proj_b"], 3, axis=0)   # each (D,)

    def per_head_w(w):
        wt = w.T                                        # (in=D, out=D)
        return wt.reshape(D_MODEL, NHEAD, HEAD_DIM).transpose(1, 0, 2)  # (NHEAD,D,hd)

    def per_head_b(b):
        return b.reshape(NHEAD, 1, HEAD_DIM)            # (NHEAD, 1, hd)

    wqkv_h = jnp.concatenate([per_head_w(wq), per_head_w(wk), per_head_w(wv)], axis=0)
    bqkv_h = jnp.concatenate([per_head_b(bq), per_head_b(bk), per_head_b(bv)], axis=0)

    wo_h = p["out_w"].T.reshape(NHEAD, HEAD_DIM, D_MODEL)   # (NHEAD, hd, D)

    w1t = p["w1"].T                                     # (D, DIM_FF)
    b1 = p["b1"].reshape(1, DIM_FF)
    w2t = p["w2"].T                                     # (DIM_FF, D)

    vecs = jnp.stack([p["out_b"], p["b2"], p["g1"], p["be1"], p["g2"], p["be2"]],
                     axis=0).reshape(6, 1, D_MODEL)

    return (wqkv_h, bqkv_h, wo_h, w1t, b1, w2t, vecs)


@jax.jit
def decoder_forward(tgt, memory, pos_enc, pos_dec, params):
    """tgt/pos_dec: (Lt, B, D); memory/pos_enc: (Lm, B, D). Returns (Lt, B, D)."""
    Lt, B, D = tgt.shape
    Lm = memory.shape[0]

    # seq-first (L, B, D) -> flattened batch-major (B*L, D); transpose fuses with
    # the reshape into a single copy per tensor under jit.
    def flat(x, L):
        return jnp.transpose(x, (1, 0, 2)).reshape(B * L, D)

    tgt2d, posd2d = flat(tgt, Lt), flat(pos_dec, Lt)
    mem2d, pose2d = flat(memory, Lm), flat(pos_enc, Lm)

    flat_w = _prepare_params(params)

    # Batch block: fold the whole (small) batch into one grid step; for larger
    # batches keep >=2 parallel steps so v7x's two TensorCores both get work.
    if B <= 4:
        bb = B
    else:
        bb = max(1, B // 2)
        while B % bb:
            bb -= 1
    n_blocks = B // bb

    tensor_specs = [
        pl.BlockSpec((bb * Lt, D), lambda b: (b, 0)),
        pl.BlockSpec((bb * Lm, D), lambda b: (b, 0)),
        pl.BlockSpec((bb * Lt, D), lambda b: (b, 0)),
        pl.BlockSpec((bb * Lm, D), lambda b: (b, 0)),
    ]
    weight_specs = [
        pl.BlockSpec(w.shape, lambda b, _nd=w.ndim: (0,) * _nd) for w in flat_w
    ]

    kernel = functools.partial(decoder_cfa_kernel, bb=bb, lt=Lt, lm=Lm)

    out = pl.pallas_call(
        kernel,
        out_shape=jax.ShapeDtypeStruct((B * Lt, D), jnp.float32),
        grid_spec=pltpu.PrefetchScalarGridSpec(
            num_scalar_prefetch=0,
            grid=(n_blocks,),
            in_specs=tensor_specs + weight_specs,
            out_specs=pl.BlockSpec((bb * Lt, D), lambda b: (b, 0)),
        ),
        compiler_params=pltpu.CompilerParams(
            dimension_semantics=("parallel",)),
    )(tgt2d, mem2d, posd2d, pose2d, *flat_w)

    return jnp.transpose(out.reshape(B, Lt, D), (1, 0, 2))   # back to (Lt, B, D)


def decoder_reference(tgt, memory, pos_enc, pos_dec, params):
    """Pure-JAX reference mirroring PyTorch DecoderCFALayer.forward_post (eval)."""
    wq, wk, wv = jnp.split(params["in_proj_w"], 3, axis=0)
    bq, bk, bv = jnp.split(params["in_proj_b"], 3, axis=0)
    wo, bo = params["out_w"], params["out_b"]
    w1, b1, w2, b2 = params["w1"], params["b1"], params["w2"], params["b2"]
    g1, be1, g2, be2 = params["g1"], params["be1"], params["g2"], params["be2"]

    def one_batch(t, m, pd, pe):
        q = (t + pd) @ wq.T + bq
        k = (m + pe) @ wk.T + bk
        v = m @ wv.T + bv
        outs = []
        for h in range(NHEAD):
            sl = slice(h * HEAD_DIM, (h + 1) * HEAD_DIM)
            s = (q[:, sl] / math.sqrt(HEAD_DIM)) @ k[:, sl].T
            p = jax.nn.softmax(s, axis=-1)
            outs.append(p @ v[:, sl])
        attn = jnp.concatenate(outs, axis=-1) @ wo.T + bo
        x = t + attn
        mu = x.mean(-1, keepdims=True)
        var = ((x - mu) ** 2).mean(-1, keepdims=True)
        x = (x - mu) / jnp.sqrt(var + EPS) * g1 + be1
        ff = jnp.maximum(x @ w1.T + b1, 0.0) @ w2.T + b2
        y = x + ff
        mu2 = y.mean(-1, keepdims=True)
        var2 = ((y - mu2) ** 2).mean(-1, keepdims=True)
        return (y - mu2) / jnp.sqrt(var2 + EPS) * g2 + be2

    return jax.vmap(one_batch, in_axes=(1, 1, 1, 1), out_axes=1)(
        tgt, memory, pos_dec, pos_enc)


if __name__ == "__main__":
    key = jax.random.PRNGKey(0)
    k_t, k_m, k_pe, k_pd, k_p = jax.random.split(key, 5)

    Lt, Lm, B = 8, 16, 2
    tgt = jax.random.normal(k_t, (Lt, B, D_MODEL), jnp.float32)
    memory = jax.random.normal(k_m, (Lm, B, D_MODEL), jnp.float32)
    pos_enc = jax.random.normal(k_pe, (Lm, B, D_MODEL), jnp.float32)
    pos_dec = jax.random.normal(k_pd, (Lt, B, D_MODEL), jnp.float32)
    params = init_params(k_p)

    out = decoder_forward(tgt, memory, pos_enc, pos_dec, params)
    out = jax.block_until_ready(out)

    ref = decoder_reference(tgt, memory, pos_enc, pos_dec, params)
    assert out.shape == (Lt, B, D_MODEL)
    assert jnp.allclose(out, ref, atol=1e-2, rtol=1e-2), "mismatch vs reference"

    print("KERNEL_OK")
</pallas_src>

<mosaic_0001>
module attributes {stable_mosaic.version = 11 : i64} {
  func.func @decoder_cfa_kernel(%arg0: i32, %arg1: memref<16x32xf32, #tpu.memory_space<vmem>>, %arg2: memref<32x32xf32, #tpu.memory_space<vmem>>, %arg3: memref<16x32xf32, #tpu.memory_space<vmem>>, %arg4: memref<32x32xf32, #tpu.memory_space<vmem>>, %arg5: memref<12x32x8xf32, #tpu.memory_space<vmem>>, %arg6: memref<12x1x8xf32, #tpu.memory_space<vmem>>, %arg7: memref<4x8x32xf32, #tpu.memory_space<vmem>>, %arg8: memref<32x64xf32, #tpu.memory_space<vmem>>, %arg9: memref<1x64xf32, #tpu.memory_space<vmem>>, %arg10: memref<64x32xf32, #tpu.memory_space<vmem>>, %arg11: memref<6x1x32xf32, #tpu.memory_space<vmem>>, %arg12: memref<16x32xf32, #tpu.memory_space<vmem>>) attributes {dimension_semantics = [#tpu.dimension_semantics<parallel>], iteration_bounds = array<i64: 1>, scalar_prefetch = 0 : i64, scratch_operands = 0 : i64, tpu.core_type = #tpu.core_type<tc>, window_params = [{transform_indices = @transform_0, window_bounds = array<i64: 16, 32>}, {transform_indices = @transform_1, window_bounds = array<i64: 32, 32>}, {transform_indices = @transform_2, window_bounds = array<i64: 16, 32>}, {transform_indices = @transform_3, window_bounds = array<i64: 32, 32>}, {pipeline_mode = #tpu.pipeline_mode<synchronous>, transform_indices = @transform_4, window_bounds = array<i64: 12, 32, 8>}, {pipeline_mode = #tpu.pipeline_mode<synchronous>, transform_indices = @transform_5, window_bounds = array<i64: 12, 1, 8>}, {pipeline_mode = #tpu.pipeline_mode<synchronous>, transform_indices = @transform_6, window_bounds = array<i64: 4, 8, 32>}, {pipeline_mode = #tpu.pipeline_mode<synchronous>, transform_indices = @transform_7, window_bounds = array<i64: 32, 64>}, {pipeline_mode = #tpu.pipeline_mode<synchronous>, transform_indices = @transform_8, window_bounds = array<i64: 1, 64>}, {pipeline_mode = #tpu.pipeline_mode<synchronous>, transform_indices = @transform_9, window_bounds = array<i64: 64, 32>}, {pipeline_mode = #tpu.pipeline_mode<synchronous>, transform_indices = @transform_10, window_bounds = array<i64: 6, 1, 32>}, {transform_indices = @transform_11, window_bounds = array<i64: 16, 32>}]} {
    %c0 = arith.constant 0 : index
    %c0_0 = arith.constant 0 : index
    %0 = vector.load %arg1[%c0, %c0_0] : memref<16x32xf32, #tpu.memory_space<vmem>>, vector<16x32xf32>
    %c0_1 = arith.constant 0 : index
    %c0_2 = arith.constant 0 : index
    %1 = vector.load %arg2[%c0_1, %c0_2] : memref<32x32xf32, #tpu.memory_space<vmem>>, vector<32x32xf32>
    %c0_3 = arith.constant 0 : index
    %c0_4 = arith.constant 0 : index
    %2 = vector.load %arg3[%c0_3, %c0_4] : memref<16x32xf32, #tpu.memory_space<vmem>>, vector<16x32xf32>
    %3 = arith.addf %0, %2 : vector<16x32xf32>
    %c0_5 = arith.constant 0 : index
    %c0_6 = arith.constant 0 : index
    %4 = vector.load %arg4[%c0_5, %c0_6] : memref<32x32xf32, #tpu.memory_space<vmem>>, vector<32x32xf32>
    %5 = arith.addf %1, %4 : vector<32x32xf32>
    %cst = arith.constant 0.000000e+00 : f32
    %6 = vector.broadcast %cst : f32 to vector<16x32xf32>
    %c0_7 = arith.constant 0 : index
    %c0_8 = arith.constant 0 : index
    %c0_9 = arith.constant 0 : index
    %7 = vector.load %arg5[%c0_7, %c0_8, %c0_9] : memref<12x32x8xf32, #tpu.memory_space<vmem>>, vector<1x32x8xf32>
    %8 = vector.shape_cast %7 : vector<1x32x8xf32> to vector<32x8xf32>
    %cst_10 = arith.constant dense<0.000000e+00> : vector<16x8xf32>
    %9 = tpu.matmul %3, %8, %cst_10 {dimension_numbers = #tpu.dot_dimension_numbers<[1], [0], [0], [1], [0, 0, 1, 1], [], []>} : vector<16x32xf32>, vector<32x8xf32>, vector<16x8xf32> -> vector<16x8xf32>
    %c0_11 = arith.constant 0 : index
    %c0_12 = arith.constant 0 : index
    %c0_13 = arith.constant 0 : index
    %10 = vector.load %arg6[%c0_11, %c0_12, %c0_13] : memref<12x1x8xf32, #tpu.memory_space<vmem>>, vector<1x1x8xf32>
    %11 = vector.shape_cast %10 : vector<1x1x8xf32> to vector<1x8xf32>
    %12 = vector.broadcast %11 : vector<1x8xf32> to vector<16x8xf32>
    %13 = arith.addf %9, %12 : vector<16x8xf32>
    %c4 = arith.constant 4 : index
    %c0_14 = arith.constant 0 : index
    %c0_15 = arith.constant 0 : index
    %14 = vector.load %arg5[%c4, %c0_14, %c0_15] : memref<12x32x8xf32, #tpu.memory_space<vmem>>, vector<1x32x8xf32>
    %15 = vector.shape_cast %14 : vector<1x32x8xf32> to vector<32x8xf32>
    %cst_16 = arith.constant dense<0.000000e+00> : vector<32x8xf32>
    %16 = tpu.matmul %5, %15, %cst_16 {dimension_numbers = #tpu.dot_dimension_numbers<[1], [0], [0], [1], [0, 0, 1, 1], [], []>} : vector<32x32xf32>, vector<32x8xf32>, vector<32x8xf32> -> vector<32x8xf32>
    %c4_17 = arith.constant 4 : index
    %c0_18 = arith.constant 0 : index
    %c0_19 = arith.constant 0 : index
    %17 = vector.load %arg6[%c4_17, %c0_18, %c0_19] : memref<12x1x8xf32, #tpu.memory_space<vmem>>, vector<1x1x8xf32>
    %18 = vector.shape_cast %17 : vector<1x1x8xf32> to vector<1x8xf32>
    %19 = vector.broadcast %18 : vector<1x8xf32> to vector<32x8xf32>
    %20 = arith.addf %16, %19 : vector<32x8xf32>
    %c8 = arith.constant 8 : index
    %c0_20 = arith.constant 0 : index
    %c0_21 = arith.constant 0 : index
    %21 = vector.load %arg5[%c8, %c0_20, %c0_21] : memref<12x32x8xf32, #tpu.memory_space<vmem>>, vector<1x32x8xf32>
    %22 = vector.shape_cast %21 : vector<1x32x8xf32> to vector<32x8xf32>
    %cst_22 = arith.constant dense<0.000000e+00> : vector<32x8xf32>
    %23 = tpu.matmul %1, %22, %cst_22 {dimension_numbers = #tpu.dot_dimension_numbers<[1], [0], [0], [1], [0, 0, 1, 1], [], []>} : vector<32x32xf32>, vector<32x8xf32>, vector<32x8xf32> -> vector<32x8xf32>
    %c8_23 = arith.constant 8 : index
    %c0_24 = arith.constant 0 : index
    %c0_25 = arith.constant 0 : index
    %24 = vector.load %arg6[%c8_23, %c0_24, %c0_25] : memref<12x1x8xf32, #tpu.memory_space<vmem>>, vector<1x1x8xf32>
    %25 = vector.shape_cast %24 : vector<1x1x8xf32> to vector<1x8xf32>
    %26 = vector.broadcast %25 : vector<1x8xf32> to vector<32x8xf32>
    %27 = arith.addf %23, %26 : vector<32x8xf32>
    %cst_26 = arith.constant 0.353553385 : f32
    %28 = vector.broadcast %cst_26 : f32 to vector<16x8xf32>
    %29 = arith.mulf %13, %28 : vector<16x8xf32>
    %30 = vector.extract_strided_slice %29 {offsets = [0, 0], sizes = [8, 8], strides = [1, 1]} : vector<16x8xf32> to vector<8x8xf32>
    %31 = vector.extract_strided_slice %20 {offsets = [0, 0], sizes = [16, 8], strides = [1, 1]} : vector<32x8xf32> to vector<16x8xf32>
    %32 = vector.extract_strided_slice %27 {offsets = [0, 0], sizes = [16, 8], strides = [1, 1]} : vector<32x8xf32> to vector<16x8xf32>
    %cst_27 = arith.constant dense<0.000000e+00> : vector<8x16xf32>
    %33 = tpu.matmul %30, %31, %cst_27 {dimension_numbers = #tpu.dot_dimension_numbers<[1], [1], [0], [0], [0, 0, 1, 0], [], []>} : vector<8x8xf32>, vector<16x8xf32>, vector<8x16xf32> -> vector<8x16xf32>
    %cst_28 = arith.constant dense<0xFF800000> : vector<8xf32>
    %34 = vector.multi_reduction <maximumf>, %33, %cst_28 [1] : vector<8x16xf32> to vector<8xf32>
    %35 = vector.shape_cast %34 : vector<8xf32> to vector<8x1xf32>
    %36 = vector.broadcast %35 : vector<8x1xf32> to vector<8x16xf32>
    %37 = arith.subf %33, %36 : vector<8x16xf32>
    %38 = math.exp %37 : vector<8x16xf32>
    %cst_29 = arith.constant dense<0.000000e+00> : vector<8xf32>
    %39 = vector.multi_reduction <add>, %38, %cst_29 [1] : vector<8x16xf32> to vector<8xf32>
    %40 = vector.shape_cast %39 : vector<8xf32> to vector<8x1xf32>
    %41 = tpu.reciprocal %40 {approx = true} : vector<8x1xf32> -> vector<8x1xf32>
    %42 = vector.broadcast %41 : vector<8x1xf32> to vector<8x16xf32>
    %43 = arith.mulf %38, %42 : vector<8x16xf32>
    %cst_30 = arith.constant dense<0.000000e+00> : vector<8x8xf32>
    %44 = tpu.matmul %43, %32, %cst_30 {dimension_numbers = #tpu.dot_dimension_numbers<[1], [0], [0], [1], [0, 0, 1, 1], [], []>} : vector<8x16xf32>, vector<16x8xf32>, vector<8x8xf32> -> vector<8x8xf32>
    %45 = vector.extract_strided_slice %29 {offsets = [8, 0], sizes = [8, 8], strides = [1, 1]} : vector<16x8xf32> to vector<8x8xf32>
    %46 = vector.extract_strided_slice %20 {offsets = [16, 0], sizes = [16, 8], strides = [1, 1]} : vector<32x8xf32> to vector<16x8xf32>
    %47 = vector.extract_strided_slice %27 {offsets = [16, 0], sizes = [16, 8], strides = [1, 1]} : vector<32x8xf32> to vector<16x8xf32>
    %cst_31 = arith.constant dense<0.000000e+00> : vector<8x16xf32>
    %48 = tpu.matmul %45, %46, %cst_31 {dimension_numbers = #tpu.dot_dimension_numbers<[1], [1], [0], [0], [0, 0, 1, 0], [], []>} : vector<8x8xf32>, vector<16x8xf32>, vector<8x16xf32> -> vector<8x16xf32>
    %cst_32 = arith.constant dense<0xFF800000> : vector<8xf32>
    %49 = vector.multi_reduction <maximumf>, %48, %cst_32 [1] : vector<8x16xf32> to vector<8xf32>
    %50 = vector.shape_cast %49 : vector<8xf32> to vector<8x1xf32>
    %51 = vector.broadcast %50 : vector<8x1xf32> to vector<8x16xf32>
    %52 = arith.subf %48, %51 : vector<8x16xf32>
    %53 = math.exp %52 : vector<8x16xf32>
    %cst_33 = arith.constant dense<0.000000e+00> : vector<8xf32>
    %54 = vector.multi_reduction <add>, %53, %cst_33 [1] : vector<8x16xf32> to vector<8xf32>
    %55 = vector.shape_cast %54 : vector<8xf32> to vector<8x1xf32>
    %56 = tpu.reciprocal %55 {approx = true} : vector<8x1xf32> -> vector<8x1xf32>
    %57 = vector.broadcast %56 : vector<8x1xf32> to vector<8x16xf32>
    %58 = arith.mulf %53, %57 : vector<8x16xf32>
    %cst_34 = arith.constant dense<0.000000e+00> : vector<8x8xf32>
    %59 = tpu.matmul %58, %47, %cst_34 {dimension_numbers = #tpu.dot_dimension_numbers<[1], [0], [0], [1], [0, 0, 1, 1], [], []>} : vector<8x16xf32>, vector<16x8xf32>, vector<8x8xf32> -> vector<8x8xf32>
    %60 = tpu.concatenate %44, %59 in 0 : vector<8x8xf32>, vector<8x8xf32> -> vector<16x8xf32>
    %c0_35 = arith.constant 0 : index
    %c0_36 = arith.constant 0 : index
    %c0_37 = arith.constant 0 : index
    %61 = vector.load %arg7[%c0_35, %c0_36, %c0_37] : memref<4x8x32xf32, #tpu.memory_space<vmem>>, vector<1x8x32xf32>
    %62 = vector.shape_cast %61 : vector<1x8x32xf32> to vector<8x32xf32>
    %cst_38 = arith.constant dense<0.000000e+00> : vector<16x32xf32>
    %63 = tpu.matmul %60, %62, %cst_38 {dimension_numbers = #tpu.dot_dimension_numbers<[1], [0], [0], [1], [0, 0, 1, 1], [], []>} : vector<16x8xf32>, vector<8x32xf32>, vector<16x32xf32> -> vector<16x32xf32>
    %64 = arith.addf %6, %63 : vector<16x32xf32>
    %c1 = arith.constant 1 : index
    %c0_39 = arith.constant 0 : index
    %c0_40 = arith.constant 0 : index
    %65 = vector.load %arg5[%c1, %c0_39, %c0_40] : memref<12x32x8xf32, #tpu.memory_space<vmem>>, vector<1x32x8xf32>
    %66 = vector.shape_cast %65 : vector<1x32x8xf32> to vector<32x8xf32>
    %cst_41 = arith.constant dense<0.000000e+00> : vector<16x8xf32>
    %67 = tpu.matmul %3, %66, %cst_41 {dimension_numbers = #tpu.dot_dimension_numbers<[1], [0], [0], [1], [0, 0, 1, 1], [], []>} : vector<16x32xf32>, vector<32x8xf32>, vector<16x8xf32> -> vector<16x8xf32>
    %c1_42 = arith.constant 1 : index
    %c0_43 = arith.constant 0 : index
    %c0_44 = arith.constant 0 : index
    %68 = vector.load %arg6[%c1_42, %c0_43, %c0_44] : memref<12x1x8xf32, #tpu.memory_space<vmem>>, vector<1x1x8xf32>
    %69 = vector.shape_cast %68 : vector<1x1x8xf32> to vector<1x8xf32>
    %70 = vector.broadcast %69 : vector<1x8xf32> to vector<16x8xf32>
    %71 = arith.addf %67, %70 : vector<16x8xf32>
    %c5 = arith.constant 5 : index
    %c0_45 = arith.constant 0 : index
    %c0_46 = arith.constant 0 : index
    %72 = vector.load %arg5[%c5, %c0_45, %c0_46] : memref<12x32x8xf32, #tpu.memory_space<vmem>>, vector<1x32x8xf32>
    %73 = vector.shape_cast %72 : vector<1x32x8xf32> to vector<32x8xf32>
    %cst_47 = arith.constant dense<0.000000e+00> : vector<32x8xf32>
    %74 = tpu.matmul %5, %73, %cst_47 {dimension_numbers = #tpu.dot_dimension_numbers<[1], [0], [0], [1], [0, 0, 1, 1], [], []>} : vector<32x32xf32>, vector<32x8xf32>, vector<32x8xf32> -> vector<32x8xf32>
    %c5_48 = arith.constant 5 : index
    %c0_49 = arith.constant 0 : index
    %c0_50 = arith.constant 0 : index
    %75 = vector.load %arg6[%c5_48, %c0_49, %c0_50] : memref<12x1x8xf32, #tpu.memory_space<vmem>>, vector<1x1x8xf32>
    %76 = vector.shape_cast %75 : vector<1x1x8xf32> to vector<1x8xf32>
    %77 = vector.broadcast %76 : vector<1x8xf32> to vector<32x8xf32>
    %78 = arith.addf %74, %77 : vector<32x8xf32>
    %c9 = arith.constant 9 : index
    %c0_51 = arith.constant 0 : index
    %c0_52 = arith.constant 0 : index
    %79 = vector.load %arg5[%c9, %c0_51, %c0_52] : memref<12x32x8xf32, #tpu.memory_space<vmem>>, vector<1x32x8xf32>
    %80 = vector.shape_cast %79 : vector<1x32x8xf32> to vector<32x8xf32>
    %cst_53 = arith.constant dense<0.000000e+00> : vector<32x8xf32>
    %81 = tpu.matmul %1, %80, %cst_53 {dimension_numbers = #tpu.dot_dimension_numbers<[1], [0], [0], [1], [0, 0, 1, 1], [], []>} : vector<32x32xf32>, vector<32x8xf32>, vector<32x8xf32> -> vector<32x8xf32>
    %c9_54 = arith.constant 9 : index
    %c0_55 = arith.constant 0 : index
    %c0_56 = arith.constant 0 : index
    %82 = vector.load %arg6[%c9_54, %c0_55, %c0_56] : memref<12x1x8xf32, #tpu.memory_space<vmem>>, vector<1x1x8xf32>
    %83 = vector.shape_cast %82 : vector<1x1x8xf32> to vector<1x8xf32>
    %84 = vector.broadcast %83 : vector<1x8xf32> to vector<32x8xf32>
    %85 = arith.addf %81, %84 : vector<32x8xf32>
    %cst_57 = arith.constant 0.353553385 : f32
    %86 = vector.broadcast %cst_57 : f32 to vector<16x8xf32>
    %87 = arith.mulf %71, %86 : vector<16x8xf32>
    %88 = vector.extract_strided_slice %87 {offsets = [0, 0], sizes = [8, 8], strides = [1, 1]} : vector<16x8xf32> to vector<8x8xf32>
    %89 = vector.extract_strided_slice %78 {offsets = [0, 0], sizes = [16, 8], strides = [1, 1]} : vector<32x8xf32> to vector<16x8xf32>
    %90 = vector.extract_strided_slice %85 {offsets = [0, 0], sizes = [16, 8], strides = [1, 1]} : vector<32x8xf32> to vector<16x8xf32>
    %cst_58 = arith.constant dense<0.000000e+00> : vector<8x16xf32>
    %91 = tpu.matmul %88, %89, %cst_58 {dimension_numbers = #tpu.dot_dimension_numbers<[1], [1], [0], [0], [0, 0, 1, 0], [], []>} : vector<8x8xf32>, vector<16x8xf32>, vector<8x16xf32> -> vector<8x16xf32>
    %cst_59 = arith.constant dense<0xFF800000> : vector<8xf32>
    %92 = vector.multi_reduction <maximumf>, %91, %cst_59 [1] : vector<8x16xf32> to vector<8xf32>
    %93 = vector.shape_cast %92 : vector<8xf32> to vector<8x1xf32>
    %94 = vector.broadcast %93 : vector<8x1xf32> to vector<8x16xf32>
    %95 = arith.subf %91, %94 : vector<8x16xf32>
    %96 = math.exp %95 : vector<8x16xf32>
    %cst_60 = arith.constant dense<0.000000e+00> : vector<8xf32>
    %97 = vector.multi_reduction <add>, %96, %cst_60 [1] : vector<8x16xf32> to vector<8xf32>
    %98 = vector.shape_cast %97 : vector<8xf32> to vector<8x1xf32>
    %99 = tpu.reciprocal %98 {approx = true} : vector<8x1xf32> -> vector<8x1xf32>
    %100 = vector.broadcast %99 : vector<8x1xf32> to vector<8x16xf32>
    %101 = arith.mulf %96, %100 : vector<8x16xf32>
    %cst_61 = arith.constant dense<0.000000e+00> : vector<8x8xf32>
    %102 = tpu.matmul %101, %90, %cst_61 {dimension_numbers = #tpu.dot_dimension_numbers<[1], [0], [0], [1], [0, 0, 1, 1], [], []>} : vector<8x16xf32>, vector<16x8xf32>, vector<8x8xf32> -> vector<8x8xf32>
    %103 = vector.extract_strided_slice %87 {offsets = [8, 0], sizes = [8, 8], strides = [1, 1]} : vector<16x8xf32> to vector<8x8xf32>
    %104 = vector.extract_strided_slice %78 {offsets = [16, 0], sizes = [16, 8], strides = [1, 1]} : vector<32x8xf32> to vector<16x8xf32>
    %105 = vector.extract_strided_slice %85 {offsets = [16, 0], sizes = [16, 8], strides = [1, 1]} : vector<32x8xf32> to vector<16x8xf32>
    %cst_62 = arith.constant dense<0.000000e+00> : vector<8x16xf32>
    %106 = tpu.matmul %103, %104, %cst_62 {dimension_numbers = #tpu.dot_dimension_numbers<[1], [1], [0], [0], [0, 0, 1, 0], [], []>} : vector<8x8xf32>, vector<16x8xf32>, vector<8x16xf32> -> vector<8x16xf32>
    %cst_63 = arith.constant dense<0xFF800000> : vector<8xf32>
    %107 = vector.multi_reduction <maximumf>, %106, %cst_63 [1] : vector<8x16xf32> to vector<8xf32>
    %108 = vector.shape_cast %107 : vector<8xf32> to vector<8x1xf32>
    %109 = vector.broadcast %108 : vector<8x1xf32> to vector<8x16xf32>
    %110 = arith.subf %106, %109 : vector<8x16xf32>
    %111 = math.exp %110 : vector<8x16xf32>
    %cst_64 = arith.constant dense<0.000000e+00> : vector<8xf32>
    %112 = vector.multi_reduction <add>, %111, %cst_64 [1] : vector<8x16xf32> to vector<8xf32>
    %113 = vector.shape_cast %112 : vector<8xf32> to vector<8x1xf32>
    %114 = tpu.reciprocal %113 {approx = true} : vector<8x1xf32> -> vector<8x1xf32>
    %115 = vector.broadcast %114 : vector<8x1xf32> to vector<8x16xf32>
    %116 = arith.mulf %111, %115 : vector<8x16xf32>
    %cst_65 = arith.constant dense<0.000000e+00> : vector<8x8xf32>
    %117 = tpu.matmul %116, %105, %cst_65 {dimension_numbers = #tpu.dot_dimension_numbers<[1], [0], [0], [1], [0, 0, 1, 1], [], []>} : vector<8x16xf32>, vector<16x8xf32>, vector<8x8xf32> -> vector<8x8xf32>
    %118 = tpu.concatenate %102, %117 in 0 : vector<8x8xf32>, vector<8x8xf32> -> vector<16x8xf32>
    %c1_66 = arith.constant 1 : index
    %c0_67 = arith.constant 0 : index
    %c0_68 = arith.constant 0 : index
    %119 = vector.load %arg7[%c1_66, %c0_67, %c0_68] : memref<4x8x32xf32, #tpu.memory_space<vmem>>, vector<1x8x32xf32>
    %120 = vector.shape_cast %119 : vector<1x8x32xf32> to vector<8x32xf32>
    %cst_69 = arith.constant dense<0.000000e+00> : vector<16x32xf32>
    %121 = tpu.matmul %118, %120, %cst_69 {dimension_numbers = #tpu.dot_dimension_numbers<[1], [0], [0], [1], [0, 0, 1, 1], [], []>} : vector<16x8xf32>, vector<8x32xf32>, vector<16x32xf32> -> vector<16x32xf32>
    %122 = arith.addf %64, %121 : vector<16x32xf32>
    %c2 = arith.constant 2 : index
    %c0_70 = arith.constant 0 : index
    %c0_71 = arith.constant 0 : index
    %123 = vector.load %arg5[%c2, %c0_70, %c0_71] : memref<12x32x8xf32, #tpu.memory_space<vmem>>, vector<1x32x8xf32>
    %124 = vector.shape_cast %123 : vector<1x32x8xf32> to vector<32x8xf32>
    %cst_72 = arith.constant dense<0.000000e+00> : vector<16x8xf32>
    %125 = tpu.matmul %3, %124, %cst_72 {dimension_numbers = #tpu.dot_dimension_numbers<[1], [0], [0], [1], [0, 0, 1, 1], [], []>} : vector<16x32xf32>, vector<32x8xf32>, vector<16x8xf32> -> vector<16x8xf32>
    %c2_73 = arith.constant 2 : index
    %c0_74 = arith.constant 0 : index
    %c0_75 = arith.constant 0 : index
    %126 = vector.load %arg6[%c2_73, %c0_74, %c0_75] : memref<12x1x8xf32, #tpu.memory_space<vmem>>, vector<1x1x8xf32>
    %127 = vector.shape_cast %126 : vector<1x1x8xf32> to vector<1x8xf32>
    %128 = vector.broadcast %127 : vector<1x8xf32> to vector<16x8xf32>
    %129 = arith.addf %125, %128 : vector<16x8xf32>
    %c6 = arith.constant 6 : index
    %c0_76 = arith.constant 0 : index
    %c0_77 = arith.constant 0 : index
    %130 = vector.load %arg5[%c6, %c0_76, %c0_77] : memref<12x32x8xf32, #tpu.memory_space<vmem>>, vector<1x32x8xf32>
    %131 = vector.shape_cast %130 : vector<1x32x8xf32> to vector<32x8xf32>
    %cst_78 = arith.constant dense<0.000000e+00> : vector<32x8xf32>
    %132 = tpu.matmul %5, %131, %cst_78 {dimension_numbers = #tpu.dot_dimension_numbers<[1], [0], [0], [1], [0, 0, 1, 1], [], []>} : vector<32x32xf32>, vector<32x8xf32>, vector<32x8xf32> -> vector<32x8xf32>
    %c6_79 = arith.constant 6 : index
    %c0_80 = arith.constant 0 : index
    %c0_81 = arith.constant 0 : index
    %133 = vector.load %arg6[%c6_79, %c0_80, %c0_81] : memref<12x1x8xf32, #tpu.memory_space<vmem>>, vector<1x1x8xf32>
    %134 = vector.shape_cast %133 : vector<1x1x8xf32> to vector<1x8xf32>
    %135 = vector.broadcast %134 : vector<1x8xf32> to vector<32x8xf32>
    %136 = arith.addf %132, %135 : vector<32x8xf32>
    %c10 = arith.constant 10 : index
    %c0_82 = arith.constant 0 : index
    %c0_83 = arith.constant 0 : index
    %137 = vector.load %arg5[%c10, %c0_82, %c0_83] : memref<12x32x8xf32, #tpu.memory_space<vmem>>, vector<1x32x8xf32>
    %138 = vector.shape_cast %137 : vector<1x32x8xf32> to vector<32x8xf32>
    %cst_84 = arith.constant dense<0.000000e+00> : vector<32x8xf32>
    %139 = tpu.matmul %1, %138, %cst_84 {dimension_numbers = #tpu.dot_dimension_numbers<[1], [0], [0], [1], [0, 0, 1, 1], [], []>} : vector<32x32xf32>, vector<32x8xf32>, vector<32x8xf32> -> vector<32x8xf32>
    %c10_85 = arith.constant 10 : index
    %c0_86 = arith.constant 0 : index
    %c0_87 = arith.constant 0 : index
    %140 = vector.load %arg6[%c10_85, %c0_86, %c0_87] : memref<12x1x8xf32, #tpu.memory_space<vmem>>, vector<1x1x8xf32>
    %141 = vector.shape_cast %140 : vector<1x1x8xf32> to vector<1x8xf32>
    %142 = vector.broadcast %141 : vector<1x8xf32> to vector<32x8xf32>
    %143 = arith.addf %139, %142 : vector<32x8xf32>
    %cst_88 = arith.constant 0.353553385 : f32
    %144 = vector.broadcast %cst_88 : f32 to vector<16x8xf32>
    %145 = arith.mulf %129, %144 : vector<16x8xf32>
    %146 = vector.extract_strided_slice %145 {offsets = [0, 0], sizes = [8, 8], strides = [1, 1]} : vector<16x8xf32> to vector<8x8xf32>
    %147 = vector.extract_strided_slice %136 {offsets = [0, 0], sizes = [16, 8], strides = [1, 1]} : vector<32x8xf32> to vector<16x8xf32>
    %148 = vector.extract_strided_slice %143 {offsets = [0, 0], sizes = [16, 8], strides = [1, 1]} : vector<32x8xf32> to vector<16x8xf32>
    %cst_89 = arith.constant dense<0.000000e+00> : vector<8x16xf32>
    %149 = tpu.matmul %146, %147, %cst_89 {dimension_numbers = #tpu.dot_dimension_numbers<[1], [1], [0], [0], [0, 0, 1, 0], [], []>} : vector<8x8xf32>, vector<16x8xf32>, vector<8x16xf32> -> vector<8x16xf32>
    %cst_90 = arith.constant dense<0xFF800000> : vector<8xf32>
    %150 = vector.multi_reduction <maximumf>, %149, %cst_90 [1] : vector<8x16xf32> to vector<8xf32>
    %151 = vector.shape_cast %150 : vector<8xf32> to vector<8x1xf32>
    %152 = vector.broadcast %151 : vector<8x1xf32> to vector<8x16xf32>
    %153 = arith.subf %149, %152 : vector<8x16xf32>
    %154 = math.exp %153 : vector<8x16xf32>
    %cst_91 = arith.constant dense<0.000000e+00> : vector<8xf32>
    %155 = vector.multi_reduction <add>, %154, %cst_91 [1] : vector<8x16xf32> to vector<8xf32>
    %156 = vector.shape_cast %155 : vector<8xf32> to vector<8x1xf32>
    %157 = tpu.reciprocal %156 {approx = true} : vector<8x1xf32> -> vector<8x1xf32>
    %158 = vector.broadcast %157 : vector<8x1xf32> to vector<8x16xf32>
    %159 = arith.mulf %154, %158 : vector<8x16xf32>
    %cst_92 = arith.constant dense<0.000000e+00> : vector<8x8xf32>
    %160 = tpu.matmul %159, %148, %cst_92 {dimension_numbers = #tpu.dot_dimension_numbers<[1], [0], [0], [1], [0, 0, 1, 1], [], []>} : vector<8x16xf32>, vector<16x8xf32>, vector<8x8xf32> -> vector<8x8xf32>
    %161 = vector.extract_strided_slice %145 {offsets = [8, 0], sizes = [8, 8], strides = [1, 1]} : vector<16x8xf32> to vector<8x8xf32>
    %162 = vector.extract_strided_slice %136 {offsets = [16, 0], sizes = [16, 8], strides = [1, 1]} : vector<32x8xf32> to vector<16x8xf32>
    %163 = vector.extract_strided_slice %143 {offsets = [16, 0], sizes = [16, 8], strides = [1, 1]} : vector<32x8xf32> to vector<16x8xf32>
    %cst_93 = arith.constant dense<0.000000e+00> : vector<8x16xf32>
    %164 = tpu.matmul %161, %162, %cst_93 {dimension_numbers = #tpu.dot_dimension_numbers<[1], [1], [0], [0], [0, 0, 1, 0], [], []>} : vector<8x8xf32>, vector<16x8xf32>, vector<8x16xf32> -> vector<8x16xf32>
    %cst_94 = arith.constant dense<0xFF800000> : vector<8xf32>
    %165 = vector.multi_reduction <maximumf>, %164, %cst_94 [1] : vector<8x16xf32> to vector<8xf32>
    %166 = vector.shape_cast %165 : vector<8xf32> to vector<8x1xf32>
    %167 = vector.broadcast %166 : vector<8x1xf32> to vector<8x16xf32>
    %168 = arith.subf %164, %167 : vector<8x16xf32>
    %169 = math.exp %168 : vector<8x16xf32>
    %cst_95 = arith.constant dense<0.000000e+00> : vector<8xf32>
    %170 = vector.multi_reduction <add>, %169, %cst_95 [1] : vector<8x16xf32> to vector<8xf32>
    %171 = vector.shape_cast %170 : vector<8xf32> to vector<8x1xf32>
    %172 = tpu.reciprocal %171 {approx = true} : vector<8x1xf32> -> vector<8x1xf32>
    %173 = vector.broadcast %172 : vector<8x1xf32> to vector<8x16xf32>
    %174 = arith.mulf %169, %173 : vector<8x16xf32>
    %cst_96 = arith.constant dense<0.000000e+00> : vector<8x8xf32>
    %175 = tpu.matmul %174, %163, %cst_96 {dimension_numbers = #tpu.dot_dimension_numbers<[1], [0], [0], [1], [0, 0, 1, 1], [], []>} : vector<8x16xf32>, vector<16x8xf32>, vector<8x8xf32> -> vector<8x8xf32>
    %176 = tpu.concatenate %160, %175 in 0 : vector<8x8xf32>, vector<8x8xf32> -> vector<16x8xf32>
    %c2_97 = arith.constant 2 : index
    %c0_98 = arith.constant 0 : index
    %c0_99 = arith.constant 0 : index
    %177 = vector.load %arg7[%c2_97, %c0_98, %c0_99] : memref<4x8x32xf32, #tpu.memory_space<vmem>>, vector<1x8x32xf32>
    %178 = vector.shape_cast %177 : vector<1x8x32xf32> to vector<8x32xf32>
    %cst_100 = arith.constant dense<0.000000e+00> : vector<16x32xf32>
    %179 = tpu.matmul %176, %178, %cst_100 {dimension_numbers = #tpu.dot_dimension_numbers<[1], [0], [0], [1], [0, 0, 1, 1], [], []>} : vector<16x8xf32>, vector<8x32xf32>, vector<16x32xf32> -> vector<16x32xf32>
    %180 = arith.addf %122, %179 : vector<16x32xf32>
    %c3 = arith.constant 3 : index
    %c0_101 = arith.constant 0 : index
    %c0_102 = arith.constant 0 : index
    %181 = vector.load %arg5[%c3, %c0_101, %c0_102] : memref<12x32x8xf32, #tpu.memory_space<vmem>>, vector<1x32x8xf32>
    %182 = vector.shape_cast %181 : vector<1x32x8xf32> to vector<32x8xf32>
    %cst_103 = arith.constant dense<0.000000e+00> : vector<16x8xf32>
    %183 = tpu.matmul %3, %182, %cst_103 {dimension_numbers = #tpu.dot_dimension_numbers<[1], [0], [0], [1], [0, 0, 1, 1], [], []>} : vector<16x32xf32>, vector<32x8xf32>, vector<16x8xf32> -> vector<16x8xf32>
    %c3_104 = arith.constant 3 : index
    %c0_105 = arith.constant 0 : index
    %c0_106 = arith.constant 0 : index
    %184 = vector.load %arg6[%c3_104, %c0_105, %c0_106] : memref<12x1x8xf32, #tpu.memory_space<vmem>>, vector<1x1x8xf32>
    %185 = vector.shape_cast %184 : vector<1x1x8xf32> to vector<1x8xf32>
    %186 = vector.broadcast %185 : vector<1x8xf32> to vector<16x8xf32>
    %187 = arith.addf %183, %186 : vector<16x8xf32>
    %c7 = arith.constant 7 : index
    %c0_107 = arith.constant 0 : index
    %c0_108 = arith.constant 0 : index
    %188 = vector.load %arg5[%c7, %c0_107, %c0_108] : memref<12x32x8xf32, #tpu.memory_space<vmem>>, vector<1x32x8xf32>
    %189 = vector.shape_cast %188 : vector<1x32x8xf32> to vector<32x8xf32>
    %cst_109 = arith.constant dense<0.000000e+00> : vector<32x8xf32>
    %190 = tpu.matmul %5, %189, %cst_109 {dimension_numbers = #tpu.dot_dimension_numbers<[1], [0], [0], [1], [0, 0, 1, 1], [], []>} : vector<32x32xf32>, vector<32x8xf32>, vector<32x8xf32> -> vector<32x8xf32>
    %c7_110 = arith.constant 7 : index
    %c0_111 = arith.constant 0 : index
    %c0_112 = arith.constant 0 : index
    %191 = vector.load %arg6[%c7_110, %c0_111, %c0_112] : memref<12x1x8xf32, #tpu.memory_space<vmem>>, vector<1x1x8xf32>
    %192 = vector.shape_cast %191 : vector<1x1x8xf32> to vector<1x8xf32>
    %193 = vector.broadcast %192 : vector<1x8xf32> to vector<32x8xf32>
    %194 = arith.addf %190, %193 : vector<32x8xf32>
    %c11 = arith.constant 11 : index
    %c0_113 = arith.constant 0 : index
    %c0_114 = arith.constant 0 : index
    %195 = vector.load %arg5[%c11, %c0_113, %c0_114] : memref<12x32x8xf32, #tpu.memory_space<vmem>>, vector<1x32x8xf32>
    %196 = vector.shape_cast %195 : vector<1x32x8xf32> to vector<32x8xf32>
    %cst_115 = arith.constant dense<0.000000e+00> : vector<32x8xf32>
    %197 = tpu.matmul %1, %196, %cst_115 {dimension_numbers = #tpu.dot_dimension_numbers<[1], [0], [0], [1], [0, 0, 1, 1], [], []>} : vector<32x32xf32>, vector<32x8xf32>, vector<32x8xf32> -> vector<32x8xf32>
    %c11_116 = arith.constant 11 : index
    %c0_117 = arith.constant 0 : index
    %c0_118 = arith.constant 0 : index
    %198 = vector.load %arg6[%c11_116, %c0_117, %c0_118] : memref<12x1x8xf32, #tpu.memory_space<vmem>>, vector<1x1x8xf32>
    %199 = vector.shape_cast %198 : vector<1x1x8xf32> to vector<1x8xf32>
    %200 = vector.broadcast %199 : vector<1x8xf32> to vector<32x8xf32>
    %201 = arith.addf %197, %200 : vector<32x8xf32>
    %cst_119 = arith.constant 0.353553385 : f32
    %202 = vector.broadcast %cst_119 : f32 to vector<16x8xf32>
    %203 = arith.mulf %187, %202 : vector<16x8xf32>
    %204 = vector.extract_strided_slice %203 {offsets = [0, 0], sizes = [8, 8], strides = [1, 1]} : vector<16x8xf32> to vector<8x8xf32>
    %205 = vector.extract_strided_slice %194 {offsets = [0, 0], sizes = [16, 8], strides = [1, 1]} : vector<32x8xf32> to vector<16x8xf32>
    %206 = vector.extract_strided_slice %201 {offsets = [0, 0], sizes = [16, 8], strides = [1, 1]} : vector<32x8xf32> to vector<16x8xf32>
    %cst_120 = arith.constant dense<0.000000e+00> : vector<8x16xf32>
    %207 = tpu.matmul %204, %205, %cst_120 {dimension_numbers = #tpu.dot_dimension_numbers<[1], [1], [0], [0], [0, 0, 1, 0], [], []>} : vector<8x8xf32>, vector<16x8xf32>, vector<8x16xf32> -> vector<8x16xf32>
    %cst_121 = arith.constant dense<0xFF800000> : vector<8xf32>
    %208 = vector.multi_reduction <maximumf>, %207, %cst_121 [1] : vector<8x16xf32> to vector<8xf32>
    %209 = vector.shape_cast %208 : vector<8xf32> to vector<8x1xf32>
    %210 = vector.broadcast %209 : vector<8x1xf32> to vector<8x16xf32>
    %211 = arith.subf %207, %210 : vector<8x16xf32>
    %212 = math.exp %211 : vector<8x16xf32>
    %cst_122 = arith.constant dense<0.000000e+00> : vector<8xf32>
    %213 = vector.multi_reduction <add>, %212, %cst_122 [1] : vector<8x16xf32> to vector<8xf32>
    %214 = vector.shape_cast %213 : vector<8xf32> to vector<8x1xf32>
    %215 = tpu.reciprocal %214 {approx = true} : vector<8x1xf32> -> vector<8x1xf32>
    %216 = vector.broadcast %215 : vector<8x1xf32> to vector<8x16xf32>
    %217 = arith.mulf %212, %216 : vector<8x16xf32>
    %cst_123 = arith.constant dense<0.000000e+00> : vector<8x8xf32>
    %218 = tpu.matmul %217, %206, %cst_123 {dimension_numbers = #tpu.dot_dimension_numbers<[1], [0], [0], [1], [0, 0, 1, 1], [], []>} : vector<8x16xf32>, vector<16x8xf32>, vector<8x8xf32> -> vector<8x8xf32>
    %219 = vector.extract_strided_slice %203 {offsets = [8, 0], sizes = [8, 8], strides = [1, 1]} : vector<16x8xf32> to vector<8x8xf32>
    %220 = vector.extract_strided_slice %194 {offsets = [16, 0], sizes = [16, 8], strides = [1, 1]} : vector<32x8xf32> to vector<16x8xf32>
    %221 = vector.extract_strided_slice %201 {offsets = [16, 0], sizes = [16, 8], strides = [1, 1]} : vector<32x8xf32> to vector<16x8xf32>
    %cst_124 = arith.constant dense<0.000000e+00> : vector<8x16xf32>
    %222 = tpu.matmul %219, %220, %cst_124 {dimension_numbers = #tpu.dot_dimension_numbers<[1], [1], [0], [0], [0, 0, 1, 0], [], []>} : vector<8x8xf32>, vector<16x8xf32>, vector<8x16xf32> -> vector<8x16xf32>
    %cst_125 = arith.constant dense<0xFF800000> : vector<8xf32>
    %223 = vector.multi_reduction <maximumf>, %222, %cst_125 [1] : vector<8x16xf32> to vector<8xf32>
    %224 = vector.shape_cast %223 : vector<8xf32> to vector<8x1xf32>
    %225 = vector.broadcast %224 : vector<8x1xf32> to vector<8x16xf32>
    %226 = arith.subf %222, %225 : vector<8x16xf32>
    %227 = math.exp %226 : vector<8x16xf32>
    %cst_126 = arith.constant dense<0.000000e+00> : vector<8xf32>
    %228 = vector.multi_reduction <add>, %227, %cst_126 [1] : vector<8x16xf32> to vector<8xf32>
    %229 = vector.shape_cast %228 : vector<8xf32> to vector<8x1xf32>
    %230 = tpu.reciprocal %229 {approx = true} : vector<8x1xf32> -> vector<8x1xf32>
    %231 = vector.broadcast %230 : vector<8x1xf32> to vector<8x16xf32>
    %232 = arith.mulf %227, %231 : vector<8x16xf32>
    %cst_127 = arith.constant dense<0.000000e+00> : vector<8x8xf32>
    %233 = tpu.matmul %232, %221, %cst_127 {dimension_numbers = #tpu.dot_dimension_numbers<[1], [0], [0], [1], [0, 0, 1, 1], [], []>} : vector<8x16xf32>, vector<16x8xf32>, vector<8x8xf32> -> vector<8x8xf32>
    %234 = tpu.concatenate %218, %233 in 0 : vector<8x8xf32>, vector<8x8xf32> -> vector<16x8xf32>
    %c3_128 = arith.constant 3 : index
    %c0_129 = arith.constant 0 : index
    %c0_130 = arith.constant 0 : index
    %235 = vector.load %arg7[%c3_128, %c0_129, %c0_130] : memref<4x8x32xf32, #tpu.memory_space<vmem>>, vector<1x8x32xf32>
    %236 = vector.shape_cast %235 : vector<1x8x32xf32> to vector<8x32xf32>
    %cst_131 = arith.constant dense<0.000000e+00> : vector<16x32xf32>
    %237 = tpu.matmul %234, %236, %cst_131 {dimension_numbers = #tpu.dot_dimension_numbers<[1], [0], [0], [1], [0, 0, 1, 1], [], []>} : vector<16x8xf32>, vector<8x32xf32>, vector<16x32xf32> -> vector<16x32xf32>
    %238 = arith.addf %180, %237 : vector<16x32xf32>
    %c0_132 = arith.constant 0 : index
    %c0_133 = arith.constant 0 : index
    %c0_134 = arith.constant 0 : index
    %239 = vector.load %arg11[%c0_132, %c0_133, %c0_134] : memref<6x1x32xf32, #tpu.memory_space<vmem>>, vector<1x1x32xf32>
    %240 = vector.shape_cast %239 : vector<1x1x32xf32> to vector<1x32xf32>
    %241 = vector.broadcast %240 : vector<1x32xf32> to vector<16x32xf32>
    %242 = arith.addf %238, %241 : vector<16x32xf32>
    %243 = arith.addf %0, %242 : vector<16x32xf32>
    %c2_135 = arith.constant 2 : index
    %c0_136 = arith.constant 0 : index
    %c0_137 = arith.constant 0 : index
    %244 = vector.load %arg11[%c2_135, %c0_136, %c0_137] : memref<6x1x32xf32, #tpu.memory_space<vmem>>, vector<1x1x32xf32>
    %245 = vector.shape_cast %244 : vector<1x1x32xf32> to vector<1x32xf32>
    %c3_138 = arith.constant 3 : index
    %c0_139 = arith.constant 0 : index
    %c0_140 = arith.constant 0 : index
    %246 = vector.load %arg11[%c3_138, %c0_139, %c0_140] : memref<6x1x32xf32, #tpu.memory_space<vmem>>, vector<1x1x32xf32>
    %247 = vector.shape_cast %246 : vector<1x1x32xf32> to vector<1x32xf32>
    %cst_141 = arith.constant dense<0.000000e+00> : vector<16xf32>
    %248 = vector.multi_reduction <add>, %243, %cst_141 [1] : vector<16x32xf32> to vector<16xf32>
    %249 = vector.shape_cast %248 : vector<16xf32> to vector<16x1xf32>
    %cst_142 = arith.constant 3.200000e+01 : f32
    %250 = vector.broadcast %cst_142 : f32 to vector<16x1xf32>
    %251 = arith.divf %249, %250 : vector<16x1xf32>
    %252 = vector.broadcast %251 : vector<16x1xf32> to vector<16x32xf32>
    %253 = arith.subf %243, %252 : vector<16x32xf32>
    %254 = arith.mulf %253, %253 : vector<16x32xf32>
    %cst_143 = arith.constant dense<0.000000e+00> : vector<16xf32>
    %255 = vector.multi_reduction <add>, %254, %cst_143 [1] : vector<16x32xf32> to vector<16xf32>
    %256 = vector.shape_cast %255 : vector<16xf32> to vector<16x1xf32>
    %cst_144 = arith.constant 3.200000e+01 : f32
    %257 = vector.broadcast %cst_144 : f32 to vector<16x1xf32>
    %258 = arith.divf %256, %257 : vector<16x1xf32>
    %259 = vector.broadcast %251 : vector<16x1xf32> to vector<16x32xf32>
    %260 = arith.subf %243, %259 : vector<16x32xf32>
    %cst_145 = arith.constant 9.99999974E-6 : f32
    %261 = vector.broadcast %cst_145 : f32 to vector<16x1xf32>
    %262 = arith.addf %258, %261 : vector<16x1xf32>
    %263 = math.rsqrt %262 : vector<16x1xf32>
    %264 = vector.broadcast %263 : vector<16x1xf32> to vector<16x32xf32>
    %265 = arith.mulf %260, %264 : vector<16x32xf32>
    %266 = vector.broadcast %245 : vector<1x32xf32> to vector<16x32xf32>
    %267 = arith.mulf %265, %266 : vector<16x32xf32>
    %268 = vector.broadcast %247 : vector<1x32xf32> to vector<16x32xf32>
    %269 = arith.addf %267, %268 : vector<16x32xf32>
    %c0_146 = arith.constant 0 : index
    %c0_147 = arith.constant 0 : index
    %270 = vector.load %arg8[%c0_146, %c0_147] : memref<32x64xf32, #tpu.memory_space<vmem>>, vector<32x64xf32>
    %cst_148 = arith.constant dense<0.000000e+00> : vector<16x64xf32>
    %271 = tpu.matmul %269, %270, %cst_148 {dimension_numbers = #tpu.dot_dimension_numbers<[1], [0], [0], [1], [0, 0, 1, 1], [], []>} : vector<16x32xf32>, vector<32x64xf32>, vector<16x64xf32> -> vector<16x64xf32>
    %c0_149 = arith.constant 0 : index
    %c0_150 = arith.constant 0 : index
    %272 = vector.load %arg9[%c0_149, %c0_150] : memref<1x64xf32, #tpu.memory_space<vmem>>, vector<1x64xf32>
    %273 = vector.broadcast %272 : vector<1x64xf32> to vector<16x64xf32>
    %274 = arith.addf %271, %273 : vector<16x64xf32>
    %cst_151 = arith.constant 0.000000e+00 : f32
    %275 = vector.broadcast %cst_151 : f32 to vector<16x64xf32>
    %276 = arith.maximumf %274, %275 : vector<16x64xf32>
    %c0_152 = arith.constant 0 : index
    %c0_153 = arith.constant 0 : index
    %277 = vector.load %arg10[%c0_152, %c0_153] : memref<64x32xf32, #tpu.memory_space<vmem>>, vector<64x32xf32>
    %cst_154 = arith.constant dense<0.000000e+00> : vector<16x32xf32>
    %278 = tpu.matmul %276, %277, %cst_154 {dimension_numbers = #tpu.dot_dimension_numbers<[1], [0], [0], [1], [0, 0, 1, 1], [], []>} : vector<16x64xf32>, vector<64x32xf32>, vector<16x32xf32> -> vector<16x32xf32>
    %c1_155 = arith.constant 1 : index
    %c0_156 = arith.constant 0 : index
    %c0_157 = arith.constant 0 : index
    %279 = vector.load %arg11[%c1_155, %c0_156, %c0_157] : memref<6x1x32xf32, #tpu.memory_space<vmem>>, vector<1x1x32xf32>
    %280 = vector.shape_cast %279 : vector<1x1x32xf32> to vector<1x32xf32>
    %281 = vector.broadcast %280 : vector<1x32xf32> to vector<16x32xf32>
    %282 = arith.addf %278, %281 : vector<16x32xf32>
    %283 = arith.addf %269, %282 : vector<16x32xf32>
    %c4_158 = arith.constant 4 : index
    %c0_159 = arith.constant 0 : index
    %c0_160 = arith.constant 0 : index
    %284 = vector.load %arg11[%c4_158, %c0_159, %c0_160] : memref<6x1x32xf32, #tpu.memory_space<vmem>>, vector<1x1x32xf32>
    %285 = vector.shape_cast %284 : vector<1x1x32xf32> to vector<1x32xf32>
    %c5_161 = arith.constant 5 : index
    %c0_162 = arith.constant 0 : index
    %c0_163 = arith.constant 0 : index
    %286 = vector.load %arg11[%c5_161, %c0_162, %c0_163] : memref<6x1x32xf32, #tpu.memory_space<vmem>>, vector<1x1x32xf32>
    %287 = vector.shape_cast %286 : vector<1x1x32xf32> to vector<1x32xf32>
    %cst_164 = arith.constant dense<0.000000e+00> : vector<16xf32>
    %288 = vector.multi_reduction <add>, %283, %cst_164 [1] : vector<16x32xf32> to vector<16xf32>
    %289 = vector.shape_cast %288 : vector<16xf32> to vector<16x1xf32>
    %cst_165 = arith.constant 3.200000e+01 : f32
    %290 = vector.broadcast %cst_165 : f32 to vector<16x1xf32>
    %291 = arith.divf %289, %290 : vector<16x1xf32>
    %292 = vector.broadcast %291 : vector<16x1xf32> to vector<16x32xf32>
    %293 = arith.subf %283, %292 : vector<16x32xf32>
    %294 = arith.mulf %293, %293 : vector<16x32xf32>
    %cst_166 = arith.constant dense<0.000000e+00> : vector<16xf32>
    %295 = vector.multi_reduction <add>, %294, %cst_166 [1] : vector<16x32xf32> to vector<16xf32>
    %296 = vector.shape_cast %295 : vector<16xf32> to vector<16x1xf32>
    %cst_167 = arith.constant 3.200000e+01 : f32
    %297 = vector.broadcast %cst_167 : f32 to vector<16x1xf32>
    %298 = arith.divf %296, %297 : vector<16x1xf32>
    %299 = vector.broadcast %291 : vector<16x1xf32> to vector<16x32xf32>
    %300 = arith.subf %283, %299 : vector<16x32xf32>
    %cst_168 = arith.constant 9.99999974E-6 : f32
    %301 = vector.broadcast %cst_168 : f32 to vector<16x1xf32>
    %302 = arith.addf %298, %301 : vector<16x1xf32>
    %303 = math.rsqrt %302 : vector<16x1xf32>
    %304 = vector.broadcast %303 : vector<16x1xf32> to vector<16x32xf32>
    %305 = arith.mulf %300, %304 : vector<16x32xf32>
    %306 = vector.broadcast %285 : vector<1x32xf32> to vector<16x32xf32>
    %307 = arith.mulf %305, %306 : vector<16x32xf32>
    %308 = vector.broadcast %287 : vector<1x32xf32> to vector<16x32xf32>
    %309 = arith.addf %307, %308 : vector<16x32xf32>
    %c0_169 = arith.constant 0 : index
    %c0_170 = arith.constant 0 : index
    %310 = vector.load %arg12[%c0_169, %c0_170] : memref<16x32xf32, #tpu.memory_space<vmem>>, vector<16x32xf32>
    tpu.vector_store %arg12[%c0_169, %c0_170], %309 {strides = array<i32>} : memref<16x32xf32, #tpu.memory_space<vmem>>, vector<16x32xf32>,
    return
  }
  func.func @transform_0(%arg0: i32) -> (i32, i32) {
    %c0_i32 = arith.constant 0 : i32
    %c0_i32_0 = arith.constant 0 : i32
    return %arg0, %c0_i32 : i32, i32
  }
  func.func @transform_1(%arg0: i32) -> (i32, i32) {
    %c0_i32 = arith.constant 0 : i32
    %c0_i32_0 = arith.constant 0 : i32
    return %arg0, %c0_i32 : i32, i32
  }
  func.func @transform_2(%arg0: i32) -> (i32, i32) {
    %c0_i32 = arith.constant 0 : i32
    %c0_i32_0 = arith.constant 0 : i32
    return %arg0, %c0_i32 : i32, i32
  }
  func.func @transform_3(%arg0: i32) -> (i32, i32) {
    %c0_i32 = arith.constant 0 : i32
    %c0_i32_0 = arith.constant 0 : i32
    return %arg0, %c0_i32 : i32, i32
  }
  func.func @transform_4(%arg0: i32) -> (i32, i32, i32) {
    %c0_i32 = arith.constant 0 : i32
    %c0_i32_0 = arith.constant 0 : i32
    %c0_i32_1 = arith.constant 0 : i32
    %c0_i32_2 = arith.constant 0 : i32
    return %c0_i32, %c0_i32_0, %c0_i32_1 : i32, i32, i32
  }
  func.func @transform_5(%arg0: i32) -> (i32, i32, i32) {
    %c0_i32 = arith.constant 0 : i32
    %c0_i32_0 = arith.constant 0 : i32
    %c0_i32_1 = arith.constant 0 : i32
    %c0_i32_2 = arith.constant 0 : i32
    return %c0_i32, %c0_i32_0, %c0_i32_1 : i32, i32, i32
  }
  func.func @transform_6(%arg0: i32) -> (i32, i32, i32) {
    %c0_i32 = arith.constant 0 : i32
    %c0_i32_0 = arith.constant 0 : i32
    %c0_i32_1 = arith.constant 0 : i32
    %c0_i32_2 = arith.constant 0 : i32
    return %c0_i32, %c0_i32_0, %c0_i32_1 : i32, i32, i32
  }
  func.func @transform_7(%arg0: i32) -> (i32, i32) {
    %c0_i32 = arith.constant 0 : i32
    %c0_i32_0 = arith.constant 0 : i32
    %c0_i32_1 = arith.constant 0 : i32
    return %c0_i32, %c0_i32_0 : i32, i32
  }
  func.func @transform_8(%arg0: i32) -> (i32, i32) {
    %c0_i32 = arith.constant 0 : i32
    %c0_i32_0 = arith.constant 0 : i32
    %c0_i32_1 = arith.constant 0 : i32
    return %c0_i32, %c0_i32_0 : i32, i32
  }
  func.func @transform_9(%arg0: i32) -> (i32, i32) {
    %c0_i32 = arith.constant 0 : i32
    %c0_i32_0 = arith.constant 0 : i32
    %c0_i32_1 = arith.constant 0 : i32
    return %c0_i32, %c0_i32_0 : i32, i32
  }
  func.func @transform_10(%arg0: i32) -> (i32, i32, i32) {
    %c0_i32 = arith.constant 0 : i32
    %c0_i32_0 = arith.constant 0 : i32
    %c0_i32_1 = arith.constant 0 : i32
    %c0_i32_2 = arith.constant 0 : i32
    return %c0_i32, %c0_i32_0, %c0_i32_1 : i32, i32, i32
  }
  func.func @transform_11(%arg0: i32) -> (i32, i32) {
    %c0_i32 = arith.constant 0 : i32
    %c0_i32_0 = arith.constant 0 : i32
    return %arg0, %c0_i32 : i32, i32
  }
}

</mosaic_0001>

<llo_original>
// kernel: decoder_forward.1
$region0: #{decoder_forward.1}
  #allocation0 [shape = 'u32[]', space=smem, size = 0x4, offset = 0x4, fixed_abs, tag = 'smem constant byte address 0x4 - core index']
  #allocation1 [shape = 'u32[144,128]{1,0:T(1,128)}', space=vmem, size = 0x12000, scoped, tag = 'internal scratch']
  %s0 = inlined_call_operand.vmem [shape: f32[16,32], index: 0, kind: input, shape index: {}]
  %s1 = inlined_call_operand.vmem [shape: f32[32,32], index: 1, kind: input, shape index: {}]
  %s2 = inlined_call_operand.vmem [shape: f32[16,32], index: 2, kind: input, shape index: {}]
  %s3 = inlined_call_operand.vmem [shape: f32[32,32], index: 3, kind: input, shape index: {}]
  %s4 = inlined_call_operand.vmem [shape: f32[12,32,8], index: 4, kind: input, shape index: {}]
  %s5 = inlined_call_operand.vmem [shape: f32[12,1,8], index: 5, kind: input, shape index: {}]
  %s6 = inlined_call_operand.vmem [shape: f32[4,8,32], index: 6, kind: input, shape index: {}]
  %s7 = inlined_call_operand.vmem [shape: f32[32,64], index: 7, kind: input, shape index: {}]
  %s8 = inlined_call_operand.vmem [shape: f32[1,64], index: 8, kind: input, shape index: {}]
  %s9 = inlined_call_operand.vmem [shape: f32[64,32], index: 9, kind: input, shape index: {}]
  %s10 = inlined_call_operand.vmem [shape: f32[6,1,32], index: 10, kind: input, shape index: {}]
  %s11 = inlined_call_operand.vmem [shape: f32[16,32], index: 11, kind: output, shape index: {}]
  %s12 = sld [smem:[#allocation0]]
  $region54: #{decoder_forward.1} parent=0
    _
  %s14 = ssub.s32 1, %s12
  %s15 = scalar_select 0, %s14, %s12
  // Predicated region
  $region2: #{decoder_forward.1} parent=0 // pred_check
    _
  $region3: #{decoder_forward.1} parent=0 // pred_check_branch
    %17 = sbr.rel (0) target = $region5
  $region4: #{decoder_forward.1} parent=0 // pred_region
    _
  $region5: #{decoder_forward.1} parent=0 // pred_fallthru
    _
  // Predicated region
  $region6: #{decoder_forward.1} parent=0 // pred_check
    _
  $region7: #{decoder_forward.1} parent=0 // pred_check_branch
    %19 = sbr.rel (0) target = $region9
  $region8: #{decoder_forward.1} parent=0 // pred_region
    _
  $region9: #{decoder_forward.1} parent=0 // pred_fallthru
    _
  // Predicated region
  $region10: #{decoder_forward.1} parent=0 // pred_check
    _
  $region11: #{decoder_forward.1} parent=0 // pred_check_branch
    %21 = sbr.rel (0) target = $region13
  $region12: #{decoder_forward.1} parent=0 // pred_region
    _
  $region13: #{decoder_forward.1} parent=0 // pred_fallthru
    _
  // Predicated region
  $region14: #{decoder_forward.1} parent=0 // pred_check
    _
  $region15: #{decoder_forward.1} parent=0 // pred_check_branch
    %23 = sbr.rel (0) target = $region17
  $region16: #{decoder_forward.1} parent=0 // pred_region
    _
  $region17: #{decoder_forward.1} parent=0 // pred_fallthru
    _
  // Predicated region
  $region18: #{decoder_forward.1} parent=0 // pred_check
    _
  $region19: #{decoder_forward.1} parent=0 // pred_check_branch
    %25 = sbr.rel (0) target = $region21
  $region20: #{decoder_forward.1} parent=0 // pred_region
    _
  $region21: #{decoder_forward.1} parent=0 // pred_fallthru
    _
  // Predicated region
  $region22: #{decoder_forward.1} parent=0 // pred_check
    _
  $region23: #{decoder_forward.1} parent=0 // pred_check_branch
    %27 = sbr.rel (0) target = $region25
  $region24: #{decoder_forward.1} parent=0 // pred_region
    _
  $region25: #{decoder_forward.1} parent=0 // pred_fallthru
    _
  // Predicated region
  $region26: #{decoder_forward.1} parent=0 // pred_check
    _
  $region27: #{decoder_forward.1} parent=0 // pred_check_branch
    %29 = sbr.rel (0) target = $region29
  $region28: #{decoder_forward.1} parent=0 // pred_region
    _
  $region29: #{decoder_forward.1} parent=0 // pred_fallthru
    _
  // Predicated region
  $region30: #{decoder_forward.1} parent=0 // pred_check
    _
  $region31: #{decoder_forward.1} parent=0 // pred_check_branch
    %31 = sbr.rel (0) target = $region33
  $region32: #{decoder_forward.1} parent=0 // pred_region
    _
  $region33: #{decoder_forward.1} parent=0 // pred_fallthru
    _
  // Predicated region
  $region34: #{decoder_forward.1} parent=0 // pred_check
    _
  $region35: #{decoder_forward.1} parent=0 // pred_check_branch
    %33 = sbr.rel (0) target = $region37
  $region36: #{decoder_forward.1} parent=0 // pred_region
    _
  $region37: #{decoder_forward.1} parent=0 // pred_fallthru
    _
  // Predicated region
  $region38: #{decoder_forward.1} parent=0 // pred_check
    _
  $region39: #{decoder_forward.1} parent=0 // pred_check_branch
    %35 = sbr.rel (0) target = $region41
  $region40: #{decoder_forward.1} parent=0 // pred_region
    _
  $region41: #{decoder_forward.1} parent=0 // pred_fallthru
    _
  // Predicated region
  $region42: #{decoder_forward.1} parent=0 // pred_check
    _
  $region43: #{decoder_forward.1} parent=0 // pred_check_branch
    %37 = sbr.rel (0) target = $region45
  $region44: #{decoder_forward.1} parent=0 // pred_region
    _
  $region45: #{decoder_forward.1} parent=0 // pred_fallthru
    _
  %v38 = vld [vmem:[%s0] sm:$0xff]
  %v39 = vld [vmem:[%s0 + $0x8] sm:$0xff]
  %v40 = vld [vmem:[%s1] sm:$0xff]
  %v41 = vld [vmem:[%s1 + $0x8] sm:$0xff]
  %v42 = vld [vmem:[%s1 + $0x10] sm:$0xff]
  %v43 = vld [vmem:[%s1 + $0x18] sm:$0xff]
  %v44 = vld [vmem:[%s2] sm:$0xff]
  %v45 = vld [vmem:[%s2 + $0x8] sm:$0xff]
  %v46 = vadd.f32 %v38, %v44
  %v47 = vadd.f32 %v39, %v45
  %v48 = vld [vmem:[%s3] sm:$0xff]
  %v49 = vld [vmem:[%s3 + $0x8] sm:$0xff]
  %v50 = vld [vmem:[%s3 + $0x10] sm:$0xff]
  %v51 = vld [vmem:[%s3 + $0x18] sm:$0xff]
  %v52 = vadd.f32 %v40, %v48
  %v53 = vadd.f32 %v41, %v49
  %v54 = vadd.f32 %v42, %v50
  %v55 = vadd.f32 %v43, %v51
  %v56 = vld [vmem:[%s4] sm:$0xff]
  %v57 = vld [vmem:[%s4 + $0x8] sm:$0xff]
  %v58 = vld [vmem:[%s4 + $0x10] sm:$0xff]
  %v59 = vld [vmem:[%s4 + $0x18] sm:$0xff]
  %v60 = vld [vmem:[%s5] sm:$0x1]
  %v62 = vlaneseq
  %v63 = vshrl.u32 %v62, 7
  %v64 = vsub.s32 0, %v63
  %v65 = vrot.slane %v60, %v64
  %vm67 = vcmask 261120
  %v69 = vsel %vm67, %v46, 0
  %v72 = vsel %vm67, %v47, 0
  %74 = vmatprep.subr.mxu0 0.0
  %75 = vmatpush1.msra.mxu0 %v56
  %76 = vmatprep.subr.mxu0 0.0
  %77 = vmatpush1.msra.mxu0 %v57
  %78 = vmatprep.subr.mxu0 0.0
  %79 = vmatpush1.msra.mxu0 %v58
  %80 = vmatprep.subr.mxu0 0.0
  %81 = vmatpush1.msra.mxu0 %v59
  %82 = vmatprep.subr.mxu0 0.0
  %83 = vmatpush1.msra.mxu0 0.0
  %84 = vmatprep.subr.mxu0 0.0
  %85 = vmatpush1.msra.mxu0 0.0
  %86 = vmatprep.subr.mxu0 0.0
  %87 = vmatpush1.msra.mxu0 0.0
  %88 = vmatprep.subr.mxu0 0.0
  %89 = vmatpush1.msra.mxu0 0.0
  %90 = vmatprep.subr.mxu0 0.0
  %91 = vmatpush1.msra.mxu0 0.0
  %92 = vmatprep.subr.mxu0 0.0
  %93 = vmatpush1.msra.mxu0 0.0
  %94 = vmatprep.subr.mxu0 0.0
  %95 = vmatpush1.msra.mxu0 0.0
  %96 = vmatprep.subr.mxu0 0.0
  %97 = vmatpush1.msra.mxu0 0.0
  %98 = vmatprep.subr.mxu0 0.0
  %99 = vmatpush1.msra.mxu0 0.0
  %100 = vmatprep.subr.mxu0 0.0
  %101 = vmatpush1.msra.mxu0 0.0
  %102 = vmatprep.subr.mxu0 0.0
  %103 = vmatpush1.msra.mxu0 0.0
  %104 = vmatprep.subr.mxu0 0.0
  %105 = vmatpush1.msra.mxu0 0.0
  %106 = vmatprep.subr.mxu0 0.0
  %107 = vmatpush1.msra.mxu0 0.0
  %108 = vmatprep.subr.mxu0 0.0
  %109 = vmatpush1.msra.mxu0 0.0
  %110 = vmatprep.subr.mxu0 0.0
  %111 = vmatpush1.msra.mxu0 0.0
  %112 = vmatprep.subr.mxu0 0.0
  %113 = vmatpush1.msra.mxu0 0.0
  %114 = vmatprep.subr.mxu0 0.0
  %115 = vmatpush1.msra.mxu0 0.0
  %116 = vmatprep.subr.mxu0 0.0
  %117 = vmatpush1.msra.mxu0 0.0
  %118 = vmatprep.subr.mxu0 0.0
  %119 = vmatpush1.msra.mxu0 0.0
  %120 = vmatprep.subr.mxu0 0.0
  %121 = vmatpush1.msra.mxu0 0.0
  %122 = vmatprep.subr.mxu0 0.0
  %123 = vmatpush1.msra.mxu0 0.0
  %124 = vmatprep.subr.mxu0 0.0
  %125 = vmatpush1.msra.mxu0 0.0
  %126 = vmatprep.subr.mxu0 0.0
  %127 = vmatpush1.msra.mxu0 0.0
  %128 = vmatprep.subr.mxu0 0.0
  %129 = vmatpush1.msra.mxu0 0.0
  %130 = vmatprep.subr.mxu0 0.0
  %131 = vmatpush1.msra.mxu0 0.0
  %132 = vmatprep.subr.mxu0 0.0
  %133 = vmatpush1.msra.mxu0 0.0
  %134 = vmatprep.subr.mxu0 0.0
  %135 = vmatpush1.msra.mxu0 0.0
  %136 = vmatprep.subr.mxu0 0.0
  %137 = vmatpush1.msra.mxu0 0.0
  %138 = vmatprep.mubr.f32.mxu0 0.0
  %139 = vmatmul.mubr.f32.gmra.mrb[0].mxu0 %v69
  %v140 = vpop.f32.mrb[0].mxu0
  %v141 = vadd.f32 %v65, %v140
  %v142 = vpop.f32.mrb[0].mxu0
  %143 = vmatprep.mubr.f32.mxu0 0.0
  %144 = vmatmul.mubr.f32.gmra.mrb[0].mxu0 %v72
  %v145 = vpop.f32.mrb[0].mxu0
  %v146 = vadd.f32 %v65, %v145
  %v147 = vpop.f32.mrb[0].mxu0
  %148 = vdwg.mxu0
  %s149 = scalar_lea.vmem %s4, 128
  %v150 = vld [vmem:[%s149] sm:$0xff]
  %v151 = vld [vmem:[%s149 + $0x8] sm:$0xff]
  %v152 = vld [vmem:[%s149 + $0x10] sm:$0xff]
  %v153 = vld [vmem:[%s149 + $0x18] sm:$0xff]
  %s154 = scalar_lea.vmem %s5, 4
  %v155 = vld [vmem:[%s154] sm:$0x1]
  %v157 = vlaneseq
  %v158 = vshrl.u32 %v157, 7
  %v159 = vsub.s32 0, %v158
  %v160 = vrot.slane %v155, %v159
  %v163 = vsel %vm67, %v52, 0
  %v166 = vsel %vm67, %v53, 0
  %v169 = vsel %vm67, %v54, 0
  %v172 = vsel %vm67, %v55, 0
  %174 = vmatprep.subr.mxu0 0.0
  %175 = vmatpush1.msra.mxu0 %v150
  %176 = vmatprep.subr.mxu0 0.0
  %177 = vmatpush1.msra.mxu0 %v151
  %178 = vmatprep.subr.mxu0 0.0
  %179 = vmatpush1.msra.mxu0 %v152
  %180 = vmatprep.subr.mxu0 0.0
  %181 = vmatpush1.msra.mxu0 %v153
  %182 = vmatprep.subr.mxu0 0.0
  %183 = vmatpush1.msra.mxu0 0.0
  %184 = vmatprep.subr.mxu0 0.0
  %185 = vmatpush1.msra.mxu0 0.0
  %186 = vmatprep.subr.mxu0 0.0
  %187 = vmatpush1.msra.mxu0 0.0
  %188 = vmatprep.subr.mxu0 0.0
  %189 = vmatpush1.msra.mxu0 0.0
  %190 = vmatprep.subr.mxu0 0.0
  %191 = vmatpush1.msra.mxu0 0.0
  %192 = vmatprep.subr.mxu0 0.0
  %193 = vmatpush1.msra.mxu0 0.0
  %194 = vmatprep.subr.mxu0 0.0
  %195 = vmatpush1.msra.mxu0 0.0
  %196 = vmatprep.subr.mxu0 0.0
  %197 = vmatpush1.msra.mxu0 0.0
  %198 = vmatprep.subr.mxu0 0.0
  %199 = vmatpush1.msra.mxu0 0.0
  %200 = vmatprep.subr.mxu0 0.0
  %201 = vmatpush1.msra.mxu0 0.0
  %202 = vmatprep.subr.mxu0 0.0
  %203 = vmatpush1.msra.mxu0 0.0
  %204 = vmatprep.subr.mxu0 0.0
  %205 = vmatpush1.msra.mxu0 0.0
  %206 = vmatprep.subr.mxu0 0.0
  %207 = vmatpush1.msra.mxu0 0.0
  %208 = vmatprep.subr.mxu0 0.0
  %209 = vmatpush1.msra.mxu0 0.0
  %210 = vmatprep.subr.mxu0 0.0
  %211 = vmatpush1.msra.mxu0 0.0
  %212 = vmatprep.subr.mxu0 0.0
  %213 = vmatpush1.msra.mxu0 0.0
  %214 = vmatprep.subr.mxu0 0.0
  %215 = vmatpush1.msra.mxu0 0.0
  %216 = vmatprep.subr.mxu0 0.0
  %217 = vmatpush1.msra.mxu0 0.0
  %218 = vmatprep.subr.mxu0 0.0
  %219 = vmatpush1.msra.mxu0 0.0
  %220 = vmatprep.subr.mxu0 0.0
  %221 = vmatpush1.msra.mxu0 0.0
  %222 = vmatprep.subr.mxu0 0.0
  %223 = vmatpush1.msra.mxu0 0.0
  %224 = vmatprep.subr.mxu0 0.0
  %225 = vmatpush1.msra.mxu0 0.0
  %226 = vmatprep.subr.mxu0 0.0
  %227 = vmatpush1.msra.mxu0 0.0
  %228 = vmatprep.subr.mxu0 0.0
  %229 = vmatpush1.msra.mxu0 0.0
  %230 = vmatprep.subr.mxu0 0.0
  %231 = vmatpush1.msra.mxu0 0.0
  %232 = vmatprep.subr.mxu0 0.0
  %233 = vmatpush1.msra.mxu0 0.0
  %234 = vmatprep.subr.mxu0 0.0
  %235 = vmatpush1.msra.mxu0 0.0
  %236 = vmatprep.subr.mxu0 0.0
  %237 = vmatpush1.msra.mxu0 0.0
  %238 = vmatprep.mubr.f32.mxu0 0.0
  %239 = vmatmul.mubr.f32.gmra.mrb[0].mxu0 %v163
  %v240 = vpop.f32.mrb[0].mxu0
  %v241 = vadd.f32 %v160, %v240
  %v242 = vpop.f32.mrb[0].mxu0
  %243 = vmatprep.mubr.f32.mxu0 0.0
  %244 = vmatmul.mubr.f32.gmra.mrb[0].mxu0 %v166
  %v245 = vpop.f32.mrb[0].mxu0
  %v246 = vadd.f32 %v160, %v245
  %v247 = vpop.f32.mrb[0].mxu0
  %248 = vmatprep.mubr.f32.mxu0 0.0
  %249 = vmatmul.mubr.f32.gmra.mrb[0].mxu0 %v169
  %v250 = vpop.f32.mrb[0].mxu0
  %v251 = vadd.f32 %v160, %v250
  %v252 = vpop.f32.mrb[0].mxu0
  %253 = vmatprep.mubr.f32.mxu0 0.0
  %254 = vmatmul.mubr.f32.gmra.mrb[0].mxu0 %v172
  %v255 = vpop.f32.mrb[0].mxu0
  %v256 = vadd.f32 %v160, %v255
  %v257 = vpop.f32.mrb[0].mxu0
  %258 = vdwg.mxu0
  %s259 = scalar_lea.vmem %s4, 256
  %v260 = vld [vmem:[%s259] sm:$0xff]
  %v261 = vld [vmem:[%s259 + $0x8] sm:$0xff]
  %v262 = vld [vmem:[%s259 + $0x10] sm:$0xff]
  %v263 = vld [vmem:[%s259 + $0x18] sm:$0xff]
  %s264 = scalar_lea.vmem %s5, 8
  %v265 = vld [vmem:[%s264] sm:$0x1]
  %v267 = vlaneseq
  %v268 = vshrl.u32 %v267, 7
  %v269 = vsub.s32 0, %v268
  %v270 = vrot.slane %v265, %v269
  %v273 = vsel %vm67, %v40, 0
  %v276 = vsel %vm67, %v41, 0
  %v279 = vsel %vm67, %v42, 0
  %v282 = vsel %vm67, %v43, 0
  %284 = vmatprep.subr.mxu0 0.0
  %285 = vmatpush1.msra.mxu0 %v260
  %286 = vmatprep.subr.mxu0 0.0
  %287 = vmatpush1.msra.mxu0 %v261
  %288 = vmatprep.subr.mxu0 0.0
  %289 = vmatpush1.msra.mxu0 %v262
  %290 = vmatprep.subr.mxu0 0.0
  %291 = vmatpush1.msra.mxu0 %v263
  %292 = vmatprep.subr.mxu0 0.0
  %293 = vmatpush1.msra.mxu0 0.0
  %294 = vmatprep.subr.mxu0 0.0
  %295 = vmatpush1.msra.mxu0 0.0
  %296 = vmatprep.subr.mxu0 0.0
  %297 = vmatpush1.msra.mxu0 0.0
  %298 = vmatprep.subr.mxu0 0.0
  %299 = vmatpush1.msra.mxu0 0.0
  %300 = vmatprep.subr.mxu0 0.0
  %301 = vmatpush1.msra.mxu0 0.0
  %302 = vmatprep.subr.mxu0 0.0
  %303 = vmatpush1.msra.mxu0 0.0
  %304 = vmatprep.subr.mxu0 0.0
  %305 = vmatpush1.msra.mxu0 0.0
  %306 = vmatprep.subr.mxu0 0.0
  %307 = vmatpush1.msra.mxu0 0.0
  %308 = vmatprep.subr.mxu0 0.0
  %309 = vmatpush1.msra.mxu0 0.0
  %310 = vmatprep.subr.mxu0 0.0
  %311 = vmatpush1.msra.mxu0 0.0
  %312 = vmatprep.subr.mxu0 0.0
  %313 = vmatpush1.msra.mxu0 0.0
  %314 = vmatprep.subr.mxu0 0.0
  %315 = vmatpush1.msra.mxu0 0.0
  %316 = vmatprep.subr.mxu0 0.0
  %317 = vmatpush1.msra.mxu0 0.0
  %318 = vmatprep.subr.mxu0 0.0
  %319 = vmatpush1.msra.mxu0 0.0
  %320 = vmatprep.subr.mxu0 0.0
  %321 = vmatpush1.msra.mxu0 0.0
  %322 = vmatprep.subr.mxu0 0.0
  %323 = vmatpush1.msra.mxu0 0.0
  %324 = vmatprep.subr.mxu0 0.0
  %325 = vmatpush1.msra.mxu0 0.0
  %326 = vmatprep.subr.mxu0 0.0
  %327 = vmatpush1.msra.mxu0 0.0
  %328 = vmatprep.subr.mxu0 0.0
  %329 = vmatpush1.msra.mxu0 0.0
  %330 = vmatprep.subr.mxu0 0.0
  %331 = vmatpush1.msra.mxu0 0.0
  %332 = vmatprep.subr.mxu0 0.0
  %333 = vmatpush1.msra.mxu0 0.0
  %334 = vmatprep.subr.mxu0 0.0
  %335 = vmatpush1.msra.mxu0 0.0
  %336 = vmatprep.subr.mxu0 0.0
  %337 = vmatpush1.msra.mxu0 0.0
  %338 = vmatprep.subr.mxu0 0.0
  %339 = vmatpush1.msra.mxu0 0.0
  %340 = vmatprep.subr.mxu0 0.0
  %341 = vmatpush1.msra.mxu0 0.0
  %342 = vmatprep.subr.mxu0 0.0
  %343 = vmatpush1.msra.mxu0 0.0
  %344 = vmatprep.subr.mxu0 0.0
  %345 = vmatpush1.msra.mxu0 0.0
  %346 = vmatprep.subr.mxu0 0.0
  %347 = vmatpush1.msra.mxu0 0.0
  %348 = vmatprep.mubr.f32.mxu0 0.0
  %349 = vmatmul.mubr.f32.gmra.mrb[0].mxu0 %v273
  %v350 = vpop.f32.mrb[0].mxu0
  %v351 = vadd.f32 %v270, %v350
  %v352 = vpop.f32.mrb[0].mxu0
  %353 = vmatprep.mubr.f32.mxu0 0.0
  %354 = vmatmul.mubr.f32.gmra.mrb[0].mxu0 %v276
  %v355 = vpop.f32.mrb[0].mxu0
  %v356 = vadd.f32 %v270, %v355
  %v357 = vpop.f32.mrb[0].mxu0
  %358 = vmatprep.mubr.f32.mxu0 0.0
  %359 = vmatmul.mubr.f32.gmra.mrb[0].mxu0 %v279
  %v360 = vpop.f32.mrb[0].mxu0
  %v361 = vadd.f32 %v270, %v360
  %v362 = vpop.f32.mrb[0].mxu0
  %363 = vmatprep.mubr.f32.mxu0 0.0
  %364 = vmatmul.mubr.f32.gmra.mrb[0].mxu0 %v282
  %v365 = vpop.f32.mrb[0].mxu0
  %v366 = vadd.f32 %v270, %v365
  %v367 = vpop.f32.mrb[0].mxu0
  %368 = vdwg.mxu0
  %v369 = vmul.f32 %v141, 0.35355338
  %v370 = vmul.f32 %v146, 0.35355338
  %vm371 = vcmask 64512
  %v373 = vsel %vm371, %v369, 0
  %v376 = vsel %vm371, %v241, 0
  %v379 = vsel %vm371, %v246, 0
  %381 = vmatprep.subr.mxu0 0.0
  %382 = vmatpush1.xpose.msra.mxu0 %v376
  %383 = vmatprep.subr.mxu0 0.0
  %384 = vmatpush1.xpose.msra.mxu0 %v379
  %385 = vmatprep.subr.mxu0 0.0
  %386 = vmatpush1.xpose.msra.mxu0 0.0
  %387 = vmatprep.subr.mxu0 0.0
  %388 = vmatpush1.xpose.msra.mxu0 0.0
  %389 = vmatprep.subr.mxu0 0.0
  %390 = vmatpush1.xpose.msra.mxu0 0.0
  %391 = vmatprep.subr.mxu0 0.0
  %392 = vmatpush1.xpose.msra.mxu0 0.0
  %393 = vmatprep.subr.mxu0 0.0
  %394 = vmatpush1.xpose.msra.mxu0 0.0
  %395 = vmatprep.subr.mxu0 0.0
  %396 = vmatpush1.xpose.msra.mxu0 0.0
  %397 = vmatprep.subr.mxu0 0.0
  %398 = vmatpush1.xpose.msra.mxu0 0.0
  %399 = vmatprep.subr.mxu0 0.0
  %400 = vmatpush1.xpose.msra.mxu0 0.0
  %401 = vmatprep.subr.mxu0 0.0
  %402 = vmatpush1.xpose.msra.mxu0 0.0
  %403 = vmatprep.subr.mxu0 0.0
  %404 = vmatpush1.xpose.msra.mxu0 0.0
  %405 = vmatprep.subr.mxu0 0.0
  %406 = vmatpush1.xpose.msra.mxu0 0.0
  %407 = vmatprep.subr.mxu0 0.0
  %408 = vmatpush1.xpose.msra.mxu0 0.0
  %409 = vmatprep.subr.mxu0 0.0
  %410 = vmatpush1.xpose.msra.mxu0 0.0
  %411 = vmatprep.subr.mxu0 0.0
  %412 = vmatpush1.xpose.msra.mxu0 0.0
  %413 = vmatprep.subr.mxu0 0.0
  %414 = vmatpush1.xpose.msra.mxu0 0.0
  %415 = vmatprep.subr.mxu0 0.0
  %416 = vmatpush1.xpose.msra.mxu0 0.0
  %417 = vmatprep.subr.mxu0 0.0
  %418 = vmatpush1.xpose.msra.mxu0 0.0
  %419 = vmatprep.subr.mxu0 0.0
  %420 = vmatpush1.xpose.msra.mxu0 0.0
  %421 = vmatprep.subr.mxu0 0.0
  %422 = vmatpush1.xpose.msra.mxu0 0.0
  %423 = vmatprep.subr.mxu0 0.0
  %424 = vmatpush1.xpose.msra.mxu0 0.0
  %425 = vmatprep.subr.mxu0 0.0
  %426 = vmatpush1.xpose.msra.mxu0 0.0
  %427 = vmatprep.subr.mxu0 0.0
  %428 = vmatpush1.xpose.msra.mxu0 0.0
  %429 = vmatprep.subr.mxu0 0.0
  %430 = vmatpush1.xpose.msra.mxu0 0.0
  %431 = vmatprep.subr.mxu0 0.0
  %432 = vmatpush1.xpose.msra.mxu0 0.0
  %433 = vmatprep.subr.mxu0 0.0
  %434 = vmatpush1.xpose.msra.mxu0 0.0
  %435 = vmatprep.subr.mxu0 0.0
  %436 = vmatpush1.xpose.msra.mxu0 0.0
  %437 = vmatprep.subr.mxu0 0.0
  %438 = vmatpush1.xpose.msra.mxu0 0.0
  %439 = vmatprep.subr.mxu0 0.0
  %440 = vmatpush1.xpose.msra.mxu0 0.0
  %441 = vmatprep.subr.mxu0 0.0
  %442 = vmatpush1.xpose.msra.mxu0 0.0
  %443 = vmatprep.subr.mxu0 0.0
  %444 = vmatpush1.xpose.msra.mxu0 0.0
  %445 = vmatprep.mubr.f32.mxu0 0.0
  %446 = vmatmul.mubr.f32.gmra.mrb[0].mxu0 %v373
  %v447 = vpop.f32.mrb[0].mxu0
  %v448 = vadd.f32 0.0, %v447
  %v449 = vpop.f32.mrb[0].mxu0
  %450 = vdwg.mxu0
  %vm451 = vcmask 130048
  %v452 = vsel %vm451, %v448, -inf
  %453 = vmax.xlane.f32.xlu0 %v452
  %v454 = vpop.xlane.xlu0 %453
  %v455 = vsub.f32 %v448, %v454
  %v456 = vmul.f32 %v455, 1.442695
  %v457 = vpow.pop %v456
  %v458 = vsel %vm451, %v457, 0.0
  %459 = vadd.xlane.f32.xlu0 %v458
  %v460 = vpop.xlane.xlu0 %459
  %v461 = vrcp.pop %v460
  %v462 = vmul.f32 %v457, %v461
  %v464 = vsel %vm451, %v462, 0
  %466 = vmatprep.subr.mxu0 0.0
  %467 = vmatpush1.msra.mxu0 %v351
  %468 = vmatprep.subr.mxu0 0.0
  %469 = vmatpush1.msra.mxu0 %v356
  %470 = vmatprep.subr.mxu0 0.0
  %471 = vmatpush1.msra.mxu0 0.0
  %472 = vmatprep.subr.mxu0 0.0
  %473 = vmatpush1.msra.mxu0 0.0
  %474 = vmatprep.subr.mxu0 0.0
  %475 = vmatpush1.msra.mxu0 0.0
  %476 = vmatprep.subr.mxu0 0.0
  %477 = vmatpush1.msra.mxu0 0.0
  %478 = vmatprep.subr.mxu0 0.0
  %479 = vmatpush1.msra.mxu0 0.0
  %480 = vmatprep.subr.mxu0 0.0
  %481 = vmatpush1.msra.mxu0 0.0
  %482 = vmatprep.subr.mxu0 0.0
  %483 = vmatpush1.msra.mxu0 0.0
  %484 = vmatprep.subr.mxu0 0.0
  %485 = vmatpush1.msra.mxu0 0.0
  %486 = vmatprep.subr.mxu0 0.0
  %487 = vmatpush1.msra.mxu0 0.0
  %488 = vmatprep.subr.mxu0 0.0
  %489 = vmatpush1.msra.mxu0 0.0
  %490 = vmatprep.subr.mxu0 0.0
  %491 = vmatpush1.msra.mxu0 0.0
  %492 = vmatprep.subr.mxu0 0.0
  %493 = vmatpush1.msra.mxu0 0.0
  %494 = vmatprep.subr.mxu0 0.0
  %495 = vmatpush1.msra.mxu0 0.0
  %496 = vmatprep.subr.mxu0 0.0
  %497 = vmatpush1.msra.mxu0 0.0
  %498 = vmatprep.subr.mxu0 0.0
  %499 = vmatpush1.msra.mxu0 0.0
  %500 = vmatprep.subr.mxu0 0.0
  %501 = vmatpush1.msra.mxu0 0.0
  %502 = vmatprep.subr.mxu0 0.0
  %503 = vmatpush1.msra.mxu0 0.0
  %504 = vmatprep.subr.mxu0 0.0
  %505 = vmatpush1.msra.mxu0 0.0
  %506 = vmatprep.subr.mxu0 0.0
  %507 = vmatpush1.msra.mxu0 0.0
  %508 = vmatprep.subr.mxu0 0.0
  %509 = vmatpush1.msra.mxu0 0.0
  %510 = vmatprep.subr.mxu0 0.0
  %511 = vmatpush1.msra.mxu0 0.0
  %512 = vmatprep.subr.mxu0 0.0
  %513 = vmatpush1.msra.mxu0 0.0
  %514 = vmatprep.subr.mxu0 0.0
  %515 = vmatpush1.msra.mxu0 0.0
  %516 = vmatprep.subr.mxu0 0.0
  %517 = vmatpush1.msra.mxu0 0.0
  %518 = vmatprep.subr.mxu0 0.0
  %519 = vmatpush1.msra.mxu0 0.0
  %520 = vmatprep.subr.mxu0 0.0
  %521 = vmatpush1.msra.mxu0 0.0
  %522 = vmatprep.subr.mxu0 0.0
  %523 = vmatpush1.msra.mxu0 0.0
  %524 = vmatprep.subr.mxu0 0.0
  %525 = vmatpush1.msra.mxu0 0.0
  %526 = vmatprep.subr.mxu0 0.0
  %527 = vmatpush1.msra.mxu0 0.0
  %528 = vmatprep.subr.mxu0 0.0
  %529 = vmatpush1.msra.mxu0 0.0
  %530 = vmatprep.mubr.f32.mxu0 0.0
  %531 = vmatmul.mubr.f32.gmra.mrb[0].mxu0 %v464
  %v532 = vpop.f32.mrb[0].mxu0
  %v533 = vadd.f32 0.0, %v532
  %v534 = vpop.f32.mrb[0].mxu0
  %535 = vdwg.mxu0
  %v537 = vsel %vm371, %v370, 0
  %v540 = vsel %vm371, %v251, 0
  %v543 = vsel %vm371, %v256, 0
  %545 = vmatprep.subr.mxu0 0.0
  %546 = vmatpush1.xpose.msra.mxu0 %v540
  %547 = vmatprep.subr.mxu0 0.0
  %548 = vmatpush1.xpose.msra.mxu0 %v543
  %549 = vmatprep.subr.mxu0 0.0
  %550 = vmatpush1.xpose.msra.mxu0 0.0
  %551 = vmatprep.subr.mxu0 0.0
  %552 = vmatpush1.xpose.msra.mxu0 0.0
  %553 = vmatprep.subr.mxu0 0.0
  %554 = vmatpush1.xpose.msra.mxu0 0.0
  %555 = vmatprep.subr.mxu0 0.0
  %556 = vmatpush1.xpose.msra.mxu0 0.0
  %557 = vmatprep.subr.mxu0 0.0
  %558 = vmatpush1.xpose.msra.mxu0 0.0
  %559 = vmatprep.subr.mxu0 0.0
  %560 = vmatpush1.xpose.msra.mxu0 0.0
  %561 = vmatprep.subr.mxu0 0.0
  %562 = vmatpush1.xpose.msra.mxu0 0.0
  %563 = vmatprep.subr.mxu0 0.0
  %564 = vmatpush1.xpose.msra.mxu0 0.0
  %565 = vmatprep.subr.mxu0 0.0
  %566 = vmatpush1.xpose.msra.mxu0 0.0
  %567 = vmatprep.subr.mxu0 0.0
  %568 = vmatpush1.xpose.msra.mxu0 0.0
  %569 = vmatprep.subr.mxu0 0.0
  %570 = vmatpush1.xpose.msra.mxu0 0.0
  %571 = vmatprep.subr.mxu0 0.0
  %572 = vmatpush1.xpose.msra.mxu0 0.0
  %573 = vmatprep.subr.mxu0 0.0
  %574 = vmatpush1.xpose.msra.mxu0 0.0
  %575 = vmatprep.subr.mxu0 0.0
  %576 = vmatpush1.xpose.msra.mxu0 0.0
  %577 = vmatprep.subr.mxu0 0.0
  %578 = vmatpush1.xpose.msra.mxu0 0.0
  %579 = vmatprep.subr.mxu0 0.0
  %580 = vmatpush1.xpose.msra.mxu0 0.0
  %581 = vmatprep.subr.mxu0 0.0
  %582 = vmatpush1.xpose.msra.mxu0 0.0
  %583 = vmatprep.subr.mxu0 0.0
  %584 = vmatpush1.xpose.msra.mxu0 0.0
  %585 = vmatprep.subr.mxu0 0.0
  %586 = vmatpush1.xpose.msra.mxu0 0.0
  %587 = vmatprep.subr.mxu0 0.0
  %588 = vmatpush1.xpose.msra.mxu0 0.0
  %589 = vmatprep.subr.mxu0 0.0
  %590 = vmatpush1.xpose.msra.mxu0 0.0
  %591 = vmatprep.subr.mxu0 0.0
  %592 = vmatpush1.xpose.msra.mxu0 0.0
  %593 = vmatprep.subr.mxu0 0.0
  %594 = vmatpush1.xpose.msra.mxu0 0.0
  %595 = vmatprep.subr.mxu0 0.0
  %596 = vmatpush1.xpose.msra.mxu0 0.0
  %597 = vmatprep.subr.mxu0 0.0
  %598 = vmatpush1.xpose.msra.mxu0 0.0
  %599 = vmatprep.subr.mxu0 0.0
  %600 = vmatpush1.xpose.msra.mxu0 0.0
  %601 = vmatprep.subr.mxu0 0.0
  %602 = vmatpush1.xpose.msra.mxu0 0.0
  %603 = vmatprep.subr.mxu0 0.0
  %604 = vmatpush1.xpose.msra.mxu0 0.0
  %605 = vmatprep.subr.mxu0 0.0
  %606 = vmatpush1.xpose.msra.mxu0 0.0
  %607 = vmatprep.subr.mxu0 0.0
  %608 = vmatpush1.xpose.msra.mxu0 0.0
  %609 = vmatprep.mubr.f32.mxu0 0.0
  %610 = vmatmul.mubr.f32.gmra.mrb[0].mxu0 %v537
  %v611 = vpop.f32.mrb[0].mxu0
  %v612 = vadd.f32 0.0, %v611
  %v613 = vpop.f32.mrb[0].mxu0
  %614 = vdwg.mxu0
  %v615 = vsel %vm451, %v612, -inf
  %616 = vmax.xlane.f32.xlu0 %v615
  %v617 = vpop.xlane.xlu0 %616
  %v618 = vsub.f32 %v612, %v617
  %v619 = vmul.f32 %v618, 1.442695
  %v620 = vpow.pop %v619
  %v621 = vsel %vm451, %v620, 0.0
  %622 = vadd.xlane.f32.xlu0 %v621
  %v623 = vpop.xlane.xlu0 %622
  %v624 = vrcp.pop %v623
  %v625 = vmul.f32 %v620, %v624
  %v627 = vsel %vm451, %v625, 0
  %629 = vmatprep.subr.mxu0 0.0
  %630 = vmatpush1.msra.mxu0 %v361
  %631 = vmatprep.subr.mxu0 0.0
  %632 = vmatpush1.msra.mxu0 %v366
  %633 = vmatprep.subr.mxu0 0.0
  %634 = vmatpush1.msra.mxu0 0.0
  %635 = vmatprep.subr.mxu0 0.0
  %636 = vmatpush1.msra.mxu0 0.0
  %637 = vmatprep.subr.mxu0 0.0
  %638 = vmatpush1.msra.mxu0 0.0
  %639 = vmatprep.subr.mxu0 0.0
  %640 = vmatpush1.msra.mxu0 0.0
  %641 = vmatprep.subr.mxu0 0.0
  %642 = vmatpush1.msra.mxu0 0.0
  %643 = vmatprep.subr.mxu0 0.0
  %644 = vmatpush1.msra.mxu0 0.0
  %645 = vmatprep.subr.mxu0 0.0
  %646 = vmatpush1.msra.mxu0 0.0
  %647 = vmatprep.subr.mxu0 0.0
  %648 = vmatpush1.msra.mxu0 0.0
  %649 = vmatprep.subr.mxu0 0.0
  %650 = vmatpush1.msra.mxu0 0.0
  %651 = vmatprep.subr.mxu0 0.0
  %652 = vmatpush1.msra.mxu0 0.0
  %653 = vmatprep.subr.mxu0 0.0
  %654 = vmatpush1.msra.mxu0 0.0
  %655 = vmatprep.subr.mxu0 0.0
  %656 = vmatpush1.msra.mxu0 0.0
  %657 = vmatprep.subr.mxu0 0.0
  %658 = vmatpush1.msra.mxu0 0.0
  %659 = vmatprep.subr.mxu0 0.0
  %660 = vmatpush1.msra.mxu0 0.0
  %661 = vmatprep.subr.mxu0 0.0
  %662 = vmatpush1.msra.mxu0 0.0
  %663 = vmatprep.subr.mxu0 0.0
  %664 = vmatpush1.msra.mxu0 0.0
  %665 = vmatprep.subr.mxu0 0.0
  %666 = vmatpush1.msra.mxu0 0.0
  %667 = vmatprep.subr.mxu0 0.0
  %668 = vmatpush1.msra.mxu0 0.0
  %669 = vmatprep.subr.mxu0 0.0
  %670 = vmatpush1.msra.mxu0 0.0
  %671 = vmatprep.subr.mxu0 0.0
  %672 = vmatpush1.msra.mxu0 0.0
  %673 = vmatprep.subr.mxu0 0.0
  %674 = vmatpush1.msra.mxu0 0.0
  %675 = vmatprep.subr.mxu0 0.0
  %676 = vmatpush1.msra.mxu0 0.0
  %677 = vmatprep.subr.mxu0 0.0
  %678 = vmatpush1.msra.mxu0 0.0
  %679 = vmatprep.subr.mxu0 0.0
  %680 = vmatpush1.msra.mxu0 0.0
  %681 = vmatprep.subr.mxu0 0.0
  %682 = vmatpush1.msra.mxu0 0.0
  %683 = vmatprep.subr.mxu0 0.0
  %684 = vmatpush1.msra.mxu0 0.0
  %685 = vmatprep.subr.mxu0 0.0
  %686 = vmatpush1.msra.mxu0 0.0
  %687 = vmatprep.subr.mxu0 0.0
  %688 = vmatpush1.msra.mxu0 0.0
  %689 = vmatprep.subr.mxu0 0.0
  %690 = vmatpush1.msra.mxu0 0.0
  %691 = vmatprep.subr.mxu0 0.0
  %692 = vmatpush1.msra.mxu0 0.0
  %693 = vmatprep.mubr.f32.mxu0 0.0
  %694 = vmatmul.mubr.f32.gmra.mrb[0].mxu0 %v627
  %v695 = vpop.f32.mrb[0].mxu0
  %v696 = vadd.f32 0.0, %v695
  %v697 = vpop.f32.mrb[0].mxu0
  %698 = vdwg.mxu0
  %v699 = vld [vmem:[%s6] sm:$0xff]
  %s700 = scalar_lea.vmem %s4, 32
  %v701 = vld [vmem:[%s700] sm:$0xff]
  %v702 = vld [vmem:[%s700 + $0x8] sm:$0xff]
  %v703 = vld [vmem:[%s700 + $0x10] sm:$0xff]
  %v704 = vld [vmem:[%s700 + $0x18] sm:$0xff]
  %s705 = scalar_lea.vmem %s5, 1
  %v706 = vld [vmem:[%s705] sm:$0x1]
  %v708 = vlaneseq
  %v709 = vshrl.u32 %v708, 7
  %v710 = vsub.s32 0, %v709
  %v711 = vrot.slane %v706, %v710
  %713 = vmatprep.subr.mxu0 0.0
  %714 = vmatpush1.msra.mxu0 %v701
  %715 = vmatprep.subr.mxu0 0.0
  %716 = vmatpush1.msra.mxu0 %v702
  %717 = vmatprep.subr.mxu0 0.0
  %718 = vmatpush1.msra.mxu0 %v703
  %719 = vmatprep.subr.mxu0 0.0
  %720 = vmatpush1.msra.mxu0 %v704
  %721 = vmatprep.subr.mxu0 0.0
  %722 = vmatpush1.msra.mxu0 0.0
  %723 = vmatprep.subr.mxu0 0.0
  %724 = vmatpush1.msra.mxu0 0.0
  %725 = vmatprep.subr.mxu0 0.0
  %726 = vmatpush1.msra.mxu0 0.0
  %727 = vmatprep.subr.mxu0 0.0
  %728 = vmatpush1.msra.mxu0 0.0
  %729 = vmatprep.subr.mxu0 0.0
  %730 = vmatpush1.msra.mxu0 0.0
  %731 = vmatprep.subr.mxu0 0.0
  %732 = vmatpush1.msra.mxu0 0.0
  %733 = vmatprep.subr.mxu0 0.0
  %734 = vmatpush1.msra.mxu0 0.0
  %735 = vmatprep.subr.mxu0 0.0
  %736 = vmatpush1.msra.mxu0 0.0
  %737 = vmatprep.subr.mxu0 0.0
  %738 = vmatpush1.msra.mxu0 0.0
  %739 = vmatprep.subr.mxu0 0.0
  %740 = vmatpush1.msra.mxu0 0.0
  %741 = vmatprep.subr.mxu0 0.0
  %742 = vmatpush1.msra.mxu0 0.0
  %743 = vmatprep.subr.mxu0 0.0
  %744 = vmatpush1.msra.mxu0 0.0
  %745 = vmatprep.subr.mxu0 0.0
  %746 = vmatpush1.msra.mxu0 0.0
  %747 = vmatprep.subr.mxu0 0.0
  %748 = vmatpush1.msra.mxu0 0.0
  %749 = vmatprep.subr.mxu0 0.0
  %750 = vmatpush1.msra.mxu0 0.0
  %751 = vmatprep.subr.mxu0 0.0
  %752 = vmatpush1.msra.mxu0 0.0
  %753 = vmatprep.subr.mxu0 0.0
  %754 = vmatpush1.msra.mxu0 0.0
  %755 = vmatprep.subr.mxu0 0.0
  %756 = vmatpush1.msra.mxu0 0.0
  %757 = vmatprep.subr.mxu0 0.0
  %758 = vmatpush1.msra.mxu0 0.0
  %759 = vmatprep.subr.mxu0 0.0
  %760 = vmatpush1.msra.mxu0 0.0
  %761 = vmatprep.subr.mxu0 0.0
  %762 = vmatpush1.msra.mxu0 0.0
  %763 = vmatprep.subr.mxu0 0.0
  %764 = vmatpush1.msra.mxu0 0.0
  %765 = vmatprep.subr.mxu0 0.0
  %766 = vmatpush1.msra.mxu0 0.0
  %767 = vmatprep.subr.mxu0 0.0
  %768 = vmatpush1.msra.mxu0 0.0
  %769 = vmatprep.subr.mxu0 0.0
  %770 = vmatpush1.msra.mxu0 0.0
  %771 = vmatprep.subr.mxu0 0.0
  %772 = vmatpush1.msra.mxu0 0.0
  %773 = vmatprep.subr.mxu0 0.0
  %774 = vmatpush1.msra.mxu0 0.0
  %775 = vmatprep.subr.mxu0 0.0
  %776 = vmatpush1.msra.mxu0 0.0
  %777 = vmatprep.mubr.f32.mxu0 0.0
  %778 = vmatmul.mubr.f32.gmra.mrb[0].mxu0 %v69
  %v779 = vpop.f32.mrb[0].mxu0
  %v780 = vadd.f32 %v711, %v779
  %v781 = vpop.f32.mrb[0].mxu0
  %782 = vmatprep.mubr.f32.mxu0 0.0
  %783 = vmatmul.mubr.f32.gmra.mrb[0].mxu0 %v72
  %v784 = vpop.f32.mrb[0].mxu0
  %v785 = vadd.f32 %v711, %v784
  %v786 = vpop.f32.mrb[0].mxu0
  %787 = vdwg.mxu0
  %s788 = scalar_lea.vmem %s4, 160
  %v789 = vld [vmem:[%s788] sm:$0xff]
  %v790 = vld [vmem:[%s788 + $0x8] sm:$0xff]
  %v791 = vld [vmem:[%s788 + $0x10] sm:$0xff]
  %v792 = vld [vmem:[%s788 + $0x18] sm:$0xff]
  %s793 = scalar_lea.vmem %s5, 5
  %v794 = vld [vmem:[%s793] sm:$0x1]
  %v796 = vlaneseq
  %v797 = vshrl.u32 %v796, 7
  %v798 = vsub.s32 0, %v797
  %v799 = vrot.slane %v794, %v798
  %801 = vmatprep.subr.mxu0 0.0
  %802 = vmatpush1.msra.mxu0 %v789
  %803 = vmatprep.subr.mxu0 0.0
  %804 = vmatpush1.msra.mxu0 %v790
  %805 = vmatprep.subr.mxu0 0.0
  %806 = vmatpush1.msra.mxu0 %v791
  %807 = vmatprep.subr.mxu0 0.0
  %808 = vmatpush1.msra.mxu0 %v792
  %809 = vmatprep.subr.mxu0 0.0
  %810 = vmatpush1.msra.mxu0 0.0
  %811 = vmatprep.subr.mxu0 0.0
  %812 = vmatpush1.msra.mxu0 0.0
  %813 = vmatprep.subr.mxu0 0.0
  %814 = vmatpush1.msra.mxu0 0.0
  %815 = vmatprep.subr.mxu0 0.0
  %816 = vmatpush1.msra.mxu0 0.0
  %817 = vmatprep.subr.mxu0 0.0
  %818 = vmatpush1.msra.mxu0 0.0
  %819 = vmatprep.subr.mxu0 0.0
  %820 = vmatpush1.msra.mxu0 0.0
  %821 = vmatprep.subr.mxu0 0.0
  %822 = vmatpush1.msra.mxu0 0.0
  %823 = vmatprep.subr.mxu0 0.0
  %824 = vmatpush1.msra.mxu0 0.0
  %825 = vmatprep.subr.mxu0 0.0
  %826 = vmatpush1.msra.mxu0 0.0
  %827 = vmatprep.subr.mxu0 0.0
  %828 = vmatpush1.msra.mxu0 0.0
  %829 = vmatprep.subr.mxu0 0.0
  %830 = vmatpush1.msra.mxu0 0.0
  %831 = vmatprep.subr.mxu0 0.0
  %832 = vmatpush1.msra.mxu0 0.0
  %833 = vmatprep.subr.mxu0 0.0
  %834 = vmatpush1.msra.mxu0 0.0
  %835 = vmatprep.subr.mxu0 0.0
  %836 = vmatpush1.msra.mxu0 0.0
  %837 = vmatprep.subr.mxu0 0.0
  %838 = vmatpush1.msra.mxu0 0.0
  %839 = vmatprep.subr.mxu0 0.0
  %840 = vmatpush1.msra.mxu0 0.0
  %841 = vmatprep.subr.mxu0 0.0
  %842 = vmatpush1.msra.mxu0 0.0
  %843 = vmatprep.subr.mxu0 0.0
  %844 = vmatpush1.msra.mxu0 0.0
  %845 = vmatprep.subr.mxu0 0.0
  %846 = vmatpush1.msra.mxu0 0.0
  %847 = vmatprep.subr.mxu0 0.0
  %848 = vmatpush1.msra.mxu0 0.0
  %849 = vmatprep.subr.mxu0 0.0
  %850 = vmatpush1.msra.mxu0 0.0
  %851 = vmatprep.subr.mxu0 0.0
  %852 = vmatpush1.msra.mxu0 0.0
  %853 = vmatprep.subr.mxu0 0.0
  %854 = vmatpush1.msra.mxu0 0.0
  %855 = vmatprep.subr.mxu0 0.0
  %856 = vmatpush1.msra.mxu0 0.0
  %857 = vmatprep.subr.mxu0 0.0
  %858 = vmatpush1.msra.mxu0 0.0
  %859 = vmatprep.subr.mxu0 0.0
  %860 = vmatpush1.msra.mxu0 0.0
  %861 = vmatprep.subr.mxu0 0.0
  %862 = vmatpush1.msra.mxu0 0.0
  %863 = vmatprep.subr.mxu0 0.0
  %864 = vmatpush1.msra.mxu0 0.0
  %865 = vmatprep.mubr.f32.mxu0 0.0
  %866 = vmatmul.mubr.f32.gmra.mrb[0].mxu0 %v163
  %v867 = vpop.f32.mrb[0].mxu0
  %v868 = vadd.f32 %v799, %v867
  %v869 = vpop.f32.mrb[0].mxu0
  %870 = vmatprep.mubr.f32.mxu0 0.0
  %871 = vmatmul.mubr.f32.gmra.mrb[0].mxu0 %v166
  %v872 = vpop.f32.mrb[0].mxu0
  %v873 = vadd.f32 %v799, %v872
  %v874 = vpop.f32.mrb[0].mxu0
  %875 = vmatprep.mubr.f32.mxu0 0.0
  %876 = vmatmul.mubr.f32.gmra.mrb[0].mxu0 %v169
  %v877 = vpop.f32.mrb[0].mxu0
  %v878 = vadd.f32 %v799, %v877
  %v879 = vpop.f32.mrb[0].mxu0
  %880 = vmatprep.mubr.f32.mxu0 0.0
  %881 = vmatmul.mubr.f32.gmra.mrb[0].mxu0 %v172
  %v882 = vpop.f32.mrb[0].mxu0
  %v883 = vadd.f32 %v799, %v882
  %v884 = vpop.f32.mrb[0].mxu0
  %885 = vdwg.mxu0
  %s886 = scalar_lea.vmem %s4, 288
  %v887 = vld [vmem:[%s886] sm:$0xff]
  %v888 = vld [vmem:[%s886 + $0x8] sm:$0xff]
  %v889 = vld [vmem:[%s886 + $0x10] sm:$0xff]
  %v890 = vld [vmem:[%s886 + $0x18] sm:$0xff]
  %s891 = scalar_lea.vmem %s5, 9
  %v892 = vld [vmem:[%s891] sm:$0x1]
  %v894 = vlaneseq
  %v895 = vshrl.u32 %v894, 7
  %v896 = vsub.s32 0, %v895
  %v897 = vrot.slane %v892, %v896
  %899 = vmatprep.subr.mxu0 0.0
  %900 = vmatpush1.msra.mxu0 %v887
  %901 = vmatprep.subr.mxu0 0.0
  %902 = vmatpush1.msra.mxu0 %v888
  %903 = vmatprep.subr.mxu0 0.0
  %904 = vmatpush1.msra.mxu0 %v889
  %905 = vmatprep.subr.mxu0 0.0
  %906 = vmatpush1.msra.mxu0 %v890
  %907 = vmatprep.subr.mxu0 0.0
  %908 = vmatpush1.msra.mxu0 0.0
  %909 = vmatprep.subr.mxu0 0.0
  %910 = vmatpush1.msra.mxu0 0.0
  %911 = vmatprep.subr.mxu0 0.0
  %912 = vmatpush1.msra.mxu0 0.0
  %913 = vmatprep.subr.mxu0 0.0
  %914 = vmatpush1.msra.mxu0 0.0
  %915 = vmatprep.subr.mxu0 0.0
  %916 = vmatpush1.msra.mxu0 0.0
  %917 = vmatprep.subr.mxu0 0.0
  %918 = vmatpush1.msra.mxu0 0.0
  %919 = vmatprep.subr.mxu0 0.0
  %920 = vmatpush1.msra.mxu0 0.0
  %921 = vmatprep.subr.mxu0 0.0
  %922 = vmatpush1.msra.mxu0 0.0
  %923 = vmatprep.subr.mxu0 0.0
  %924 = vmatpush1.msra.mxu0 0.0
  %925 = vmatprep.subr.mxu0 0.0
  %926 = vmatpush1.msra.mxu0 0.0
  %927 = vmatprep.subr.mxu0 0.0
  %928 = vmatpush1.msra.mxu0 0.0
  %929 = vmatprep.subr.mxu0 0.0
  %930 = vmatpush1.msra.mxu0 0.0
  %931 = vmatprep.subr.mxu0 0.0
  %932 = vmatpush1.msra.mxu0 0.0
  %933 = vmatprep.subr.mxu0 0.0
  %934 = vmatpush1.msra.mxu0 0.0
  %935 = vmatprep.subr.mxu0 0.0
  %936 = vmatpush1.msra.mxu0 0.0
  %937 = vmatprep.subr.mxu0 0.0
  %938 = vmatpush1.msra.mxu0 0.0
  %939 = vmatprep.subr.mxu0 0.0
  %940 = vmatpush1.msra.mxu0 0.0
  %941 = vmatprep.subr.mxu0 0.0
  %942 = vmatpush1.msra.mxu0 0.0
  %943 = vmatprep.subr.mxu0 0.0
  %944 = vmatpush1.msra.mxu0 0.0
  %945 = vmatprep.subr.mxu0 0.0
  %946 = vmatpush1.msra.mxu0 0.0
  %947 = vmatprep.subr.mxu0 0.0
  %948 = vmatpush1.msra.mxu0 0.0
  %949 = vmatprep.subr.mxu0 0.0
  %950 = vmatpush1.msra.mxu0 0.0
  %951 = vmatprep.subr.mxu0 0.0
  %952 = vmatpush1.msra.mxu0 0.0
  %953 = vmatprep.subr.mxu0 0.0
  %954 = vmatpush1.msra.mxu0 0.0
  %955 = vmatprep.subr.mxu0 0.0
  %956 = vmatpush1.msra.mxu0 0.0
  %957 = vmatprep.subr.mxu0 0.0
  %958 = vmatpush1.msra.mxu0 0.0
  %959 = vmatprep.subr.mxu0 0.0
  %960 = vmatpush1.msra.mxu0 0.0
  %961 = vmatprep.subr.mxu0 0.0
  %962 = vmatpush1.msra.mxu0 0.0
  %963 = vmatprep.mubr.f32.mxu0 0.0
  %964 = vmatmul.mubr.f32.gmra.mrb[0].mxu0 %v273
  %v965 = vpop.f32.mrb[0].mxu0
  %v966 = vadd.f32 %v897, %v965
  %v967 = vpop.f32.mrb[0].mxu0
  %968 = vmatprep.mubr.f32.mxu0 0.0
  %969 = vmatmul.mubr.f32.gmra.mrb[0].mxu0 %v276
  %v970 = vpop.f32.mrb[0].mxu0
  %v971 = vadd.f32 %v897, %v970
  %v972 = vpop.f32.mrb[0].mxu0
  %973 = vmatprep.mubr.f32.mxu0 0.0
  %974 = vmatmul.mubr.f32.gmra.mrb[0].mxu0 %v279
  %v975 = vpop.f32.mrb[0].mxu0
  %v976 = vadd.f32 %v897, %v975
  %v977 = vpop.f32.mrb[0].mxu0
  %978 = vmatprep.mubr.f32.mxu0 0.0
  %979 = vmatmul.mubr.f32.gmra.mrb[0].mxu0 %v282
  %v980 = vpop.f32.mrb[0].mxu0
  %v981 = vadd.f32 %v897, %v980
  %v982 = vpop.f32.mrb[0].mxu0
  %983 = vdwg.mxu0
  %v984 = vmul.f32 %v780, 0.35355338
  %v985 = vmul.f32 %v785, 0.35355338
  %v987 = vsel %vm371, %v984, 0
  %v990 = vsel %vm371, %v868, 0
  %v993 = vsel %vm371, %v873, 0
  %995 = vmatprep.subr.mxu0 0.0
  %996 = vmatpush1.xpose.msra.mxu0 %v990
  %997 = vmatprep.subr.mxu0 0.0
  %998 = vmatpush1.xpose.msra.mxu0 %v993
  %999 = vmatprep.subr.mxu0 0.0
  %1000 = vmatpush1.xpose.msra.mxu0 0.0
  %1001 = vmatprep.subr.mxu0 0.0
  %1002 = vmatpush1.xpose.msra.mxu0 0.0
  %1003 = vmatprep.subr.mxu0 0.0
  %1004 = vmatpush1.xpose.msra.mxu0 0.0
  %1005 = vmatprep.subr.mxu0 0.0
  %1006 = vmatpush1.xpose.msra.mxu0 0.0
  %1007 = vmatprep.subr.mxu0 0.0
  %1008 = vmatpush1.xpose.msra.mxu0 0.0
  %1009 = vmatprep.subr.mxu0 0.0
  %1010 = vmatpush1.xpose.msra.mxu0 0.0
  %1011 = vmatprep.subr.mxu0 0.0
  %1012 = vmatpush1.xpose.msra.mxu0 0.0
  %1013 = vmatprep.subr.mxu0 0.0
  %1014 = vmatpush1.xpose.msra.mxu0 0.0
  %1015 = vmatprep.subr.mxu0 0.0
  %1016 = vmatpush1.xpose.msra.mxu0 0.0
  %1017 = vmatprep.subr.mxu0 0.0
  %1018 = vmatpush1.xpose.msra.mxu0 0.0
  %1019 = vmatprep.subr.mxu0 0.0
  %1020 = vmatpush1.xpose.msra.mxu0 0.0
  %1021 = vmatprep.subr.mxu0 0.0
  %1022 = vmatpush1.xpose.msra.mxu0 0.0
  %1023 = vmatprep.subr.mxu0 0.0
  %1024 = vmatpush1.xpose.msra.mxu0 0.0
  %1025 = vmatprep.subr.mxu0 0.0
  %1026 = vmatpush1.xpose.msra.mxu0 0.0
  %1027 = vmatprep.subr.mxu0 0.0
  %1028 = vmatpush1.xpose.msra.mxu0 0.0
  %1029 = vmatprep.subr.mxu0 0.0
  %1030 = vmatpush1.xpose.msra.mxu0 0.0
  %1031 = vmatprep.subr.mxu0 0.0
  %1032 = vmatpush1.xpose.msra.mxu0 0.0
  %1033 = vmatprep.subr.mxu0 0.0
  %1034 = vmatpush1.xpose.msra.mxu0 0.0
  %1035 = vmatprep.subr.mxu0 0.0
  %1036 = vmatpush1.xpose.msra.mxu0 0.0
  %1037 = vmatprep.subr.mxu0 0.0
  %1038 = vmatpush1.xpose.msra.mxu0 0.0
  %1039 = vmatprep.subr.mxu0 0.0
  %1040 = vmatpush1.xpose.msra.mxu0 0.0
  %1041 = vmatprep.subr.mxu0 0.0
  %1042 = vmatpush1.xpose.msra.mxu0 0.0
  %1043 = vmatprep.subr.mxu0 0.0
  %1044 = vmatpush1.xpose.msra.mxu0 0.0
  %1045 = vmatprep.subr.mxu0 0.0
  %1046 = vmatpush1.xpose.msra.mxu0 0.0
  %1047 = vmatprep.subr.mxu0 0.0
  %1048 = vmatpush1.xpose.msra.mxu0 0.0
  %1049 = vmatprep.subr.mxu0 0.0
  %1050 = vmatpush1.xpose.msra.mxu0 0.0
  %1051 = vmatprep.subr.mxu0 0.0
  %1052 = vmatpush1.xpose.msra.mxu0 0.0
  %1053 = vmatprep.subr.mxu0 0.0
  %1054 = vmatpush1.xpose.msra.mxu0 0.0
  %1055 = vmatprep.subr.mxu0 0.0
  %1056 = vmatpush1.xpose.msra.mxu0 0.0
  %1057 = vmatprep.subr.mxu0 0.0
  %1058 = vmatpush1.xpose.msra.mxu0 0.0
  %1059 = vmatprep.mubr.f32.mxu0 0.0
  %1060 = vmatmul.mubr.f32.gmra.mrb[0].mxu0 %v987
  %v1061 = vpop.f32.mrb[0].mxu0
  %v1062 = vadd.f32 0.0, %v1061
  %v1063 = vpop.f32.mrb[0].mxu0
  %1064 = vdwg.mxu0
  %v1065 = vsel %vm451, %v1062, -inf
  %1066 = vmax.xlane.f32.xlu0 %v1065
  %v1067 = vpop.xlane.xlu0 %1066
  %v1068 = vsub.f32 %v1062, %v1067
  %v1069 = vmul.f32 %v1068, 1.442695
  %v1070 = vpow.pop %v1069
  %v1071 = vsel %vm451, %v1070, 0.0
  %1072 = vadd.xlane.f32.xlu0 %v1071
  %v1073 = vpop.xlane.xlu0 %1072
  %v1074 = vrcp.pop %v1073
  %v1075 = vmul.f32 %v1070, %v1074
  %v1077 = vsel %vm451, %v1075, 0
  %1079 = vmatprep.subr.mxu0 0.0
  %1080 = vmatpush1.msra.mxu0 %v966
  %1081 = vmatprep.subr.mxu0 0.0
  %1082 = vmatpush1.msra.mxu0 %v971
  %1083 = vmatprep.subr.mxu0 0.0
  %1084 = vmatpush1.msra.mxu0 0.0
  %1085 = vmatprep.subr.mxu0 0.0
  %1086 = vmatpush1.msra.mxu0 0.0
  %1087 = vmatprep.subr.mxu0 0.0
  %1088 = vmatpush1.msra.mxu0 0.0
  %1089 = vmatprep.subr.mxu0 0.0
  %1090 = vmatpush1.msra.mxu0 0.0
  %1091 = vmatprep.subr.mxu0 0.0
  %1092 = vmatpush1.msra.mxu0 0.0
  %1093 = vmatprep.subr.mxu0 0.0
  %1094 = vmatpush1.msra.mxu0 0.0
  %1095 = vmatprep.subr.mxu0 0.0
  %1096 = vmatpush1.msra.mxu0 0.0
  %1097 = vmatprep.subr.mxu0 0.0
  %1098 = vmatpush1.msra.mxu0 0.0
  %1099 = vmatprep.subr.mxu0 0.0
  %1100 = vmatpush1.msra.mxu0 0.0
  %1101 = vmatprep.subr.mxu0 0.0
  %1102 = vmatpush1.msra.mxu0 0.0
  %1103 = vmatprep.subr.mxu0 0.0
  %1104 = vmatpush1.msra.mxu0 0.0
  %1105 = vmatprep.subr.mxu0 0.0
  %1106 = vmatpush1.msra.mxu0 0.0
  %1107 = vmatprep.subr.mxu0 0.0
  %1108 = vmatpush1.msra.mxu0 0.0
  %1109 = vmatprep.subr.mxu0 0.0
  %1110 = vmatpush1.msra.mxu0 0.0
  %1111 = vmatprep.subr.mxu0 0.0
  %1112 = vmatpush1.msra.mxu0 0.0
  %1113 = vmatprep.subr.mxu0 0.0
  %1114 = vmatpush1.msra.mxu0 0.0
  %1115 = vmatprep.subr.mxu0 0.0
  %1116 = vmatpush1.msra.mxu0 0.0
  %1117 = vmatprep.subr.mxu0 0.0
  %1118 = vmatpush1.msra.mxu0 0.0
  %1119 = vmatprep.subr.mxu0 0.0
  %1120 = vmatpush1.msra.mxu0 0.0
  %1121 = vmatprep.subr.mxu0 0.0
  %1122 = vmatpush1.msra.mxu0 0.0
  %1123 = vmatprep.subr.mxu0 0.0
  %1124 = vmatpush1.msra.mxu0 0.0
  %1125 = vmatprep.subr.mxu0 0.0
  %1126 = vmatpush1.msra.mxu0 0.0
  %1127 = vmatprep.subr.mxu0 0.0
  %1128 = vmatpush1.msra.mxu0 0.0
  %1129 = vmatprep.subr.mxu0 0.0
  %1130 = vmatpush1.msra.mxu0 0.0
  %1131 = vmatprep.subr.mxu0 0.0
  %1132 = vmatpush1.msra.mxu0 0.0
  %1133 = vmatprep.subr.mxu0 0.0
  %1134 = vmatpush1.msra.mxu0 0.0
  %1135 = vmatprep.subr.mxu0 0.0
  %1136 = vmatpush1.msra.mxu0 0.0
  %1137 = vmatprep.subr.mxu0 0.0
  %1138 = vmatpush1.msra.mxu0 0.0
  %1139 = vmatprep.subr.mxu0 0.0
  %1140 = vmatpush1.msra.mxu0 0.0
  %1141 = vmatprep.subr.mxu0 0.0
  %1142 = vmatpush1.msra.mxu0 0.0
  %1143 = vmatprep.mubr.f32.mxu0 0.0
  %1144 = vmatmul.mubr.f32.gmra.mrb[0].mxu0 %v1077
  %v1145 = vpop.f32.mrb[0].mxu0
  %v1146 = vadd.f32 0.0, %v1145
  %v1147 = vpop.f32.mrb[0].mxu0
  %1148 = vdwg.mxu0
  %v1150 = vsel %vm371, %v985, 0
  %v1153 = vsel %vm371, %v878, 0
  %v1156 = vsel %vm371, %v883, 0
  %1158 = vmatprep.subr.mxu0 0.0
  %1159 = vmatpush1.xpose.msra.mxu0 %v1153
  %1160 = vmatprep.subr.mxu0 0.0
  %1161 = vmatpush1.xpose.msra.mxu0 %v1156
  %1162 = vmatprep.subr.mxu0 0.0
  %1163 = vmatpush1.xpose.msra.mxu0 0.0
  %1164 = vmatprep.subr.mxu0 0.0
  %1165 = vmatpush1.xpose.msra.mxu0 0.0
  %1166 = vmatprep.subr.mxu0 0.0
  %1167 = vmatpush1.xpose.msra.mxu0 0.0
  %1168 = vmatprep.subr.mxu0 0.0
  %1169 = vmatpush1.xpose.msra.mxu0 0.0
  %1170 = vmatprep.subr.mxu0 0.0
  %1171 = vmatpush1.xpose.msra.mxu0 0.0
  %1172 = vmatprep.subr.mxu0 0.0
  %1173 = vmatpush1.xpose.msra.mxu0 0.0
  %1174 = vmatprep.subr.mxu0 0.0
  %1175 = vmatpush1.xpose.msra.mxu0 0.0
  %1176 = vmatprep.subr.mxu0 0.0
  %1177 = vmatpush1.xpose.msra.mxu0 0.0
  %1178 = vmatprep.subr.mxu0 0.0
  %1179 = vmatpush1.xpose.msra.mxu0 0.0
  %1180 = vmatprep.subr.mxu0 0.0
  %1181 = vmatpush1.xpose.msra.mxu0 0.0
  %1182 = vmatprep.subr.mxu0 0.0
  %1183 = vmatpush1.xpose.msra.mxu0 0.0
  %1184 = vmatprep.subr.mxu0 0.0
  %1185 = vmatpush1.xpose.msra.mxu0 0.0
  %1186 = vmatprep.subr.mxu0 0.0
  %1187 = vmatpush1.xpose.msra.mxu0 0.0
  %1188 = vmatprep.subr.mxu0 0.0
  %1189 = vmatpush1.xpose.msra.mxu0 0.0
  %1190 = vmatprep.subr.mxu0 0.0
  %1191 = vmatpush1.xpose.msra.mxu0 0.0
  %1192 = vmatprep.subr.mxu0 0.0
  %1193 = vmatpush1.xpose.msra.mxu0 0.0
  %1194 = vmatprep.subr.mxu0 0.0
  %1195 = vmatpush1.xpose.msra.mxu0 0.0
  %1196 = vmatprep.subr.mxu0 0.0
  %1197 = vmatpush1.xpose.msra.mxu0 0.0
  %1198 = vmatprep.subr.mxu0 0.0
  %1199 = vmatpush1.xpose.msra.mxu0 0.0
  %1200 = vmatprep.subr.mxu0 0.0
  %1201 = vmatpush1.xpose.msra.mxu0 0.0
  %1202 = vmatprep.subr.mxu0 0.0
  %1203 = vmatpush1.xpose.msra.mxu0 0.0
  %1204 = vmatprep.subr.mxu0 0.0
  %1205 = vmatpush1.xpose.msra.mxu0 0.0
  %1206 = vmatprep.subr.mxu0 0.0
  %1207 = vmatpush1.xpose.msra.mxu0 0.0
  %1208 = vmatprep.subr.mxu0 0.0
  %1209 = vmatpush1.xpose.msra.mxu0 0.0
  %1210 = vmatprep.subr.mxu0 0.0
  %1211 = vmatpush1.xpose.msra.mxu0 0.0
  %1212 = vmatprep.subr.mxu0 0.0
  %1213 = vmatpush1.xpose.msra.mxu0 0.0
  %1214 = vmatprep.subr.mxu0 0.0
  %1215 = vmatpush1.xpose.msra.mxu0 0.0
  %1216 = vmatprep.subr.mxu0 0.0
  %1217 = vmatpush1.xpose.msra.mxu0 0.0
  %1218 = vmatprep.subr.mxu0 0.0
  %1219 = vmatpush1.xpose.msra.mxu0 0.0
  %1220 = vmatprep.subr.mxu0 0.0
  %1221 = vmatpush1.xpose.msra.mxu0 0.0
  %1222 = vmatprep.mubr.f32.mxu0 0.0
  %1223 = vmatmul.mubr.f32.gmra.mrb[0].mxu0 %v1150
  %v1224 = vpop.f32.mrb[0].mxu0
  %v1225 = vadd.f32 0.0, %v1224
  %v1226 = vpop.f32.mrb[0].mxu0
  %1227 = vdwg.mxu0
  %v1228 = vsel %vm451, %v1225, -inf
  %1229 = vmax.xlane.f32.xlu0 %v1228
  %v1230 = vpop.xlane.xlu0 %1229
  %v1231 = vsub.f32 %v1225, %v1230
  %v1232 = vmul.f32 %v1231, 1.442695
  %v1233 = vpow.pop %v1232
  %v1234 = vsel %vm451, %v1233, 0.0
  %1235 = vadd.xlane.f32.xlu0 %v1234
  %v1236 = vpop.xlane.xlu0 %1235
  %v1237 = vrcp.pop %v1236
  %v1238 = vmul.f32 %v1233, %v1237
  %v1240 = vsel %vm451, %v1238, 0
  %1242 = vmatprep.subr.mxu0 0.0
  %1243 = vmatpush1.msra.mxu0 %v976
  %1244 = vmatprep.subr.mxu0 0.0
  %1245 = vmatpush1.msra.mxu0 %v981
  %1246 = vmatprep.subr.mxu0 0.0
  %1247 = vmatpush1.msra.mxu0 0.0
  %1248 = vmatprep.subr.mxu0 0.0
  %1249 = vmatpush1.msra.mxu0 0.0
  %1250 = vmatprep.subr.mxu0 0.0
  %1251 = vmatpush1.msra.mxu0 0.0
  %1252 = vmatprep.subr.mxu0 0.0
  %1253 = vmatpush1.msra.mxu0 0.0
  %1254 = vmatprep.subr.mxu0 0.0
  %1255 = vmatpush1.msra.mxu0 0.0
  %1256 = vmatprep.subr.mxu0 0.0
  %1257 = vmatpush1.msra.mxu0 0.0
  %1258 = vmatprep.subr.mxu0 0.0
  %1259 = vmatpush1.msra.mxu0 0.0
  %1260 = vmatprep.subr.mxu0 0.0
  %1261 = vmatpush1.msra.mxu0 0.0
  %1262 = vmatprep.subr.mxu0 0.0
  %1263 = vmatpush1.msra.mxu0 0.0
  %1264 = vmatprep.subr.mxu0 0.0
  %1265 = vmatpush1.msra.mxu0 0.0
  %1266 = vmatprep.subr.mxu0 0.0
  %1267 = vmatpush1.msra.mxu0 0.0
  %1268 = vmatprep.subr.mxu0 0.0
  %1269 = vmatpush1.msra.mxu0 0.0
  %1270 = vmatprep.subr.mxu0 0.0
  %1271 = vmatpush1.msra.mxu0 0.0
  %1272 = vmatprep.subr.mxu0 0.0
  %1273 = vmatpush1.msra.mxu0 0.0
  %1274 = vmatprep.subr.mxu0 0.0
  %1275 = vmatpush1.msra.mxu0 0.0
  %1276 = vmatprep.subr.mxu0 0.0
  %1277 = vmatpush1.msra.mxu0 0.0
  %1278 = vmatprep.subr.mxu0 0.0
  %1279 = vmatpush1.msra.mxu0 0.0
  %1280 = vmatprep.subr.mxu0 0.0
  %1281 = vmatpush1.msra.mxu0 0.0
  %1282 = vmatprep.subr.mxu0 0.0
  %1283 = vmatpush1.msra.mxu0 0.0
  %1284 = vmatprep.subr.mxu0 0.0
  %1285 = vmatpush1.msra.mxu0 0.0
  %1286 = vmatprep.subr.mxu0 0.0
  %1287 = vmatpush1.msra.mxu0 0.0
  %1288 = vmatprep.subr.mxu0 0.0
  %1289 = vmatpush1.msra.mxu0 0.0
  %1290 = vmatprep.subr.mxu0 0.0
  %1291 = vmatpush1.msra.mxu0 0.0
  %1292 = vmatprep.subr.mxu0 0.0
  %1293 = vmatpush1.msra.mxu0 0.0
  %1294 = vmatprep.subr.mxu0 0.0
  %1295 = vmatpush1.msra.mxu0 0.0
  %1296 = vmatprep.subr.mxu0 0.0
  %1297 = vmatpush1.msra.mxu0 0.0
  %1298 = vmatprep.subr.mxu0 0.0
  %1299 = vmatpush1.msra.mxu0 0.0
  %1300 = vmatprep.subr.mxu0 0.0
  %1301 = vmatpush1.msra.mxu0 0.0
  %1302 = vmatprep.subr.mxu0 0.0
  %1303 = vmatpush1.msra.mxu0 0.0
  %1304 = vmatprep.subr.mxu0 0.0
  %1305 = vmatpush1.msra.mxu0 0.0
  %1306 = vmatprep.mubr.f32.mxu0 0.0
  %1307 = vmatmul.mubr.f32.gmra.mrb[0].mxu0 %v1240
  %v1308 = vpop.f32.mrb[0].mxu0
  %v1309 = vadd.f32 0.0, %v1308
  %v1310 = vpop.f32.mrb[0].mxu0
  %1311 = vdwg.mxu0
  %s1312 = scalar_lea.vmem %s6, 8
  %v1313 = vld [vmem:[%s1312] sm:$0xff]
  %v1315 = vsel %vm371, %v1146, 0
  %v1318 = vsel %vm371, %v1309, 0
  %1320 = vmatprep.subr.mxu0 0.0
  %1321 = vmatpush1.msra.mxu0 %v1313
  %1322 = vmatprep.subr.mxu0 0.0
  %1323 = vmatpush1.msra.mxu0 0.0
  %1324 = vmatprep.subr.mxu0 0.0
  %1325 = vmatpush1.msra.mxu0 0.0
  %1326 = vmatprep.subr.mxu0 0.0
  %1327 = vmatpush1.msra.mxu0 0.0
  %1328 = vmatprep.subr.mxu0 0.0
  %1329 = vmatpush1.msra.mxu0 0.0
  %1330 = vmatprep.subr.mxu0 0.0
  %1331 = vmatpush1.msra.mxu0 0.0
  %1332 = vmatprep.subr.mxu0 0.0
  %1333 = vmatpush1.msra.mxu0 0.0
  %1334 = vmatprep.subr.mxu0 0.0
  %1335 = vmatpush1.msra.mxu0 0.0
  %1336 = vmatprep.subr.mxu0 0.0
  %1337 = vmatpush1.msra.mxu0 0.0
  %1338 = vmatprep.subr.mxu0 0.0
  %1339 = vmatpush1.msra.mxu0 0.0
  %1340 = vmatprep.subr.mxu0 0.0
  %1341 = vmatpush1.msra.mxu0 0.0
  %1342 = vmatprep.subr.mxu0 0.0
  %1343 = vmatpush1.msra.mxu0 0.0
  %1344 = vmatprep.subr.mxu0 0.0
  %1345 = vmatpush1.msra.mxu0 0.0
  %1346 = vmatprep.subr.mxu0 0.0
  %1347 = vmatpush1.msra.mxu0 0.0
  %1348 = vmatprep.subr.mxu0 0.0
  %1349 = vmatpush1.msra.mxu0 0.0
  %1350 = vmatprep.subr.mxu0 0.0
  %1351 = vmatpush1.msra.mxu0 0.0
  %1352 = vmatprep.subr.mxu0 0.0
  %1353 = vmatpush1.msra.mxu0 0.0
  %1354 = vmatprep.subr.mxu0 0.0
  %1355 = vmatpush1.msra.mxu0 0.0
  %1356 = vmatprep.subr.mxu0 0.0
  %1357 = vmatpush1.msra.mxu0 0.0
  %1358 = vmatprep.subr.mxu0 0.0
  %1359 = vmatpush1.msra.mxu0 0.0
  %1360 = vmatprep.subr.mxu0 0.0
  %1361 = vmatpush1.msra.mxu0 0.0
  %1362 = vmatprep.subr.mxu0 0.0
  %1363 = vmatpush1.msra.mxu0 0.0
  %1364 = vmatprep.subr.mxu0 0.0
  %1365 = vmatpush1.msra.mxu0 0.0
  %1366 = vmatprep.subr.mxu0 0.0
  %1367 = vmatpush1.msra.mxu0 0.0
  %1368 = vmatprep.subr.mxu0 0.0
  %1369 = vmatpush1.msra.mxu0 0.0
  %1370 = vmatprep.subr.mxu0 0.0
  %1371 = vmatpush1.msra.mxu0 0.0
  %1372 = vmatprep.subr.mxu0 0.0
  %1373 = vmatpush1.msra.mxu0 0.0
  %1374 = vmatprep.subr.mxu0 0.0
  %1375 = vmatpush1.msra.mxu0 0.0
  %1376 = vmatprep.subr.mxu0 0.0
  %1377 = vmatpush1.msra.mxu0 0.0
  %1378 = vmatprep.subr.mxu0 0.0
  %1379 = vmatpush1.msra.mxu0 0.0
  %1380 = vmatprep.subr.mxu0 0.0
  %1381 = vmatpush1.msra.mxu0 0.0
  %1382 = vmatprep.subr.mxu0 0.0
  %1383 = vmatpush1.msra.mxu0 0.0
  %1384 = vmatprep.mubr.f32.mxu0 0.0
  %1385 = vmatmul.mubr.f32.gmra.mrb[0].mxu0 %v1315
  %v1386 = vpop.f32.mrb[0].mxu0
  %v1387 = vadd.f32 0.0, %v1386
  %v1388 = vpop.f32.mrb[0].mxu0
  %1389 = vmatprep.mubr.f32.mxu0 0.0
  %1390 = vmatmul.mubr.f32.gmra.mrb[0].mxu0 %v1318
  %v1391 = vpop.f32.mrb[0].mxu0
  %v1392 = vadd.f32 0.0, %v1391
  %v1393 = vpop.f32.mrb[0].mxu0
  %1394 = vdwg.mxu0
  %v1396 = vsel %vm371, %v533, 0
  %v1399 = vsel %vm371, %v696, 0
  %1401 = vmatprep.subr.mxu0 0.0
  %1402 = vmatpush1.msra.mxu0 %v699
  %1403 = vmatprep.subr.mxu0 0.0
  %1404 = vmatpush1.msra.mxu0 0.0
  %1405 = vmatprep.subr.mxu0 0.0
  %1406 = vmatpush1.msra.mxu0 0.0
  %1407 = vmatprep.subr.mxu0 0.0
  %1408 = vmatpush1.msra.mxu0 0.0
  %1409 = vmatprep.subr.mxu0 0.0
  %1410 = vmatpush1.msra.mxu0 0.0
  %1411 = vmatprep.subr.mxu0 0.0
  %1412 = vmatpush1.msra.mxu0 0.0
  %1413 = vmatprep.subr.mxu0 0.0
  %1414 = vmatpush1.msra.mxu0 0.0
  %1415 = vmatprep.subr.mxu0 0.0
  %1416 = vmatpush1.msra.mxu0 0.0
  %1417 = vmatprep.subr.mxu0 0.0
  %1418 = vmatpush1.msra.mxu0 0.0
  %1419 = vmatprep.subr.mxu0 0.0
  %1420 = vmatpush1.msra.mxu0 0.0
  %1421 = vmatprep.subr.mxu0 0.0
  %1422 = vmatpush1.msra.mxu0 0.0
  %1423 = vmatprep.subr.mxu0 0.0
  %1424 = vmatpush1.msra.mxu0 0.0
  %1425 = vmatprep.subr.mxu0 0.0
  %1426 = vmatpush1.msra.mxu0 0.0
  %1427 = vmatprep.subr.mxu0 0.0
  %1428 = vmatpush1.msra.mxu0 0.0
  %1429 = vmatprep.subr.mxu0 0.0
  %1430 = vmatpush1.msra.mxu0 0.0
  %1431 = vmatprep.subr.mxu0 0.0
  %1432 = vmatpush1.msra.mxu0 0.0
  %1433 = vmatprep.subr.mxu0 0.0
  %1434 = vmatpush1.msra.mxu0 0.0
  %1435 = vmatprep.subr.mxu0 0.0
  %1436 = vmatpush1.msra.mxu0 0.0
  %1437 = vmatprep.subr.mxu0 0.0
  %1438 = vmatpush1.msra.mxu0 0.0
  %1439 = vmatprep.subr.mxu0 0.0
  %1440 = vmatpush1.msra.mxu0 0.0
  %1441 = vmatprep.subr.mxu0 0.0
  %1442 = vmatpush1.msra.mxu0 0.0
  %1443 = vmatprep.subr.mxu0 0.0
  %1444 = vmatpush1.msra.mxu0 0.0
  %1445 = vmatprep.subr.mxu0 0.0
  %1446 = vmatpush1.msra.mxu0 0.0
  %1447 = vmatprep.subr.mxu0 0.0
  %1448 = vmatpush1.msra.mxu0 0.0
  %1449 = vmatprep.subr.mxu0 0.0
  %1450 = vmatpush1.msra.mxu0 0.0
  %1451 = vmatprep.subr.mxu0 0.0
  %1452 = vmatpush1.msra.mxu0 0.0
  %1453 = vmatprep.subr.mxu0 0.0
  %1454 = vmatpush1.msra.mxu0 0.0
  %1455 = vmatprep.subr.mxu0 0.0
  %1456 = vmatpush1.msra.mxu0 0.0
  %1457 = vmatprep.subr.mxu0 0.0
  %1458 = vmatpush1.msra.mxu0 0.0
  %1459 = vmatprep.subr.mxu0 0.0
  %1460 = vmatpush1.msra.mxu0 0.0
  %1461 = vmatprep.subr.mxu0 0.0
  %1462 = vmatpush1.msra.mxu0 0.0
  %1463 = vmatprep.subr.mxu0 0.0
  %1464 = vmatpush1.msra.mxu0 0.0
  %1465 = vmatprep.mubr.f32.mxu0 0.0
  %1466 = vmatmul.mubr.f32.gmra.mrb[0].mxu0 %v1396
  %v1467 = vpop.f32.mrb[0].mxu0
  %v1468 = vadd.f32 %v1387, %v1467
  %v1469 = vpop.f32.mrb[0].mxu0
  %1470 = vmatprep.mubr.f32.mxu0 0.0
  %1471 = vmatmul.mubr.f32.gmra.mrb[0].mxu0 %v1399
  %v1472 = vpop.f32.mrb[0].mxu0
  %v1473 = vadd.f32 %v1392, %v1472
  %v1474 = vpop.f32.mrb[0].mxu0
  %1475 = vdwg.mxu0
  %s1476 = scalar_lea.vmem %s4, 64
  %v1477 = vld [vmem:[%s1476] sm:$0xff]
  %v1478 = vld [vmem:[%s1476 + $0x8] sm:$0xff]
  %v1479 = vld [vmem:[%s1476 + $0x10] sm:$0xff]
  %v1480 = vld [vmem:[%s1476 + $0x18] sm:$0xff]
  %s1481 = scalar_lea.vmem %s5, 2
  %v1482 = vld [vmem:[%s1481] sm:$0x1]
  %v1484 = vlaneseq
  %v1485 = vshrl.u32 %v1484, 7
  %v1486 = vsub.s32 0, %v1485
  %v1487 = vrot.slane %v1482, %v1486
  %1489 = vmatprep.subr.mxu0 0.0
  %1490 = vmatpush1.msra.mxu0 %v1477
  %1491 = vmatprep.subr.mxu0 0.0
  %1492 = vmatpush1.msra.mxu0 %v1478
  %1493 = vmatprep.subr.mxu0 0.0
  %1494 = vmatpush1.msra.mxu0 %v1479
  %1495 = vmatprep.subr.mxu0 0.0
  %1496 = vmatpush1.msra.mxu0 %v1480
  %1497 = vmatprep.subr.mxu0 0.0
  %1498 = vmatpush1.msra.mxu0 0.0
  %1499 = vmatprep.subr.mxu0 0.0
  %1500 = vmatpush1.msra.mxu0 0.0
  %1501 = vmatprep.subr.mxu0 0.0
  %1502 = vmatpush1.msra.mxu0 0.0
  %1503 = vmatprep.subr.mxu0 0.0
  %1504 = vmatpush1.msra.mxu0 0.0
  %1505 = vmatprep.subr.mxu0 0.0
  %1506 = vmatpush1.msra.mxu0 0.0
  %1507 = vmatprep.subr.mxu0 0.0
  %1508 = vmatpush1.msra.mxu0 0.0
  %1509 = vmatprep.subr.mxu0 0.0
  %1510 = vmatpush1.msra.mxu0 0.0
  %1511 = vmatprep.subr.mxu0 0.0
  %1512 = vmatpush1.msra.mxu0 0.0
  %1513 = vmatprep.subr.mxu0 0.0
  %1514 = vmatpush1.msra.mxu0 0.0
  %1515 = vmatprep.subr.mxu0 0.0
  %1516 = vmatpush1.msra.mxu0 0.0
  %1517 = vmatprep.subr.mxu0 0.0
  %1518 = vmatpush1.msra.mxu0 0.0
  %1519 = vmatprep.subr.mxu0 0.0
  %1520 = vmatpush1.msra.mxu0 0.0
  %1521 = vmatprep.subr.mxu0 0.0
  %1522 = vmatpush1.msra.mxu0 0.0
  %1523 = vmatprep.subr.mxu0 0.0
  %1524 = vmatpush1.msra.mxu0 0.0
  %1525 = vmatprep.subr.mxu0 0.0
  %1526 = vmatpush1.msra.mxu0 0.0
  %1527 = vmatprep.subr.mxu0 0.0
  %1528 = vmatpush1.msra.mxu0 0.0
  %1529 = vmatprep.subr.mxu0 0.0
  %1530 = vmatpush1.msra.mxu0 0.0
  %1531 = vmatprep.subr.mxu0 0.0
  %1532 = vmatpush1.msra.mxu0 0.0
  %1533 = vmatprep.subr.mxu0 0.0
  %1534 = vmatpush1.msra.mxu0 0.0
  %1535 = vmatprep.subr.mxu0 0.0
  %1536 = vmatpush1.msra.mxu0 0.0
  %1537 = vmatprep.subr.mxu0 0.0
  %1538 = vmatpush1.msra.mxu0 0.0
  %1539 = vmatprep.subr.mxu0 0.0
  %1540 = vmatpush1.msra.mxu0 0.0
  %1541 = vmatprep.subr.mxu0 0.0
  %1542 = vmatpush1.msra.mxu0 0.0
  %1543 = vmatprep.subr.mxu0 0.0
  %1544 = vmatpush1.msra.mxu0 0.0
  %1545 = vmatprep.subr.mxu0 0.0
  %1546 = vmatpush1.msra.mxu0 0.0
  %1547 = vmatprep.subr.mxu0 0.0
  %1548 = vmatpush1.msra.mxu0 0.0
  %1549 = vmatprep.subr.mxu0 0.0
  %1550 = vmatpush1.msra.mxu0 0.0
  %1551 = vmatprep.subr.mxu0 0.0
  %1552 = vmatpush1.msra.mxu0 0.0
  %1553 = vmatprep.mubr.f32.mxu0 0.0
  %1554 = vmatmul.mubr.f32.gmra.mrb[0].mxu0 %v69
  %v1555 = vpop.f32.mrb[0].mxu0
  %v1556 = vadd.f32 %v1487, %v1555
  %v1557 = vpop.f32.mrb[0].mxu0
  %1558 = vmatprep.mubr.f32.mxu0 0.0
  %1559 = vmatmul.mubr.f32.gmra.mrb[0].mxu0 %v72
  %v1560 = vpop.f32.mrb[0].mxu0
  %v1561 = vadd.f32 %v1487, %v1560
  %v1562 = vpop.f32.mrb[0].mxu0
  %1563 = vdwg.mxu0
  %s1564 = scalar_lea.vmem %s4, 192
  %v1565 = vld [vmem:[%s1564] sm:$0xff]
  %v1566 = vld [vmem:[%s1564 + $0x8] sm:$0xff]
  %v1567 = vld [vmem:[%s1564 + $0x10] sm:$0xff]
  %v1568 = vld [vmem:[%s1564 + $0x18] sm:$0xff]
  %s1569 = scalar_lea.vmem %s5, 6
  %v1570 = vld [vmem:[%s1569] sm:$0x1]
  %v1572 = vlaneseq
  %v1573 = vshrl.u32 %v1572, 7
  %v1574 = vsub.s32 0, %v1573
  %v1575 = vrot.slane %v1570, %v1574
  %1577 = vmatprep.subr.mxu0 0.0
  %1578 = vmatpush1.msra.mxu0 %v1565
  %1579 = vmatprep.subr.mxu0 0.0
  %1580 = vmatpush1.msra.mxu0 %v1566
  %1581 = vmatprep.subr.mxu0 0.0
  %1582 = vmatpush1.msra.mxu0 %v1567
  %1583 = vmatprep.subr.mxu0 0.0
  %1584 = vmatpush1.msra.mxu0 %v1568
  %1585 = vmatprep.subr.mxu0 0.0
  %1586 = vmatpush1.msra.mxu0 0.0
  %1587 = vmatprep.subr.mxu0 0.0
  %1588 = vmatpush1.msra.mxu0 0.0
  %1589 = vmatprep.subr.mxu0 0.0
  %1590 = vmatpush1.msra.mxu0 0.0
  %1591 = vmatprep.subr.mxu0 0.0
  %1592 = vmatpush1.msra.mxu0 0.0
  %1593 = vmatprep.subr.mxu0 0.0
  %1594 = vmatpush1.msra.mxu0 0.0
  %1595 = vmatprep.subr.mxu0 0.0
  %1596 = vmatpush1.msra.mxu0 0.0
  %1597 = vmatprep.subr.mxu0 0.0
  %1598 = vmatpush1.msra.mxu0 0.0
  %1599 = vmatprep.subr.mxu0 0.0
  %1600 = vmatpush1.msra.mxu0 0.0
  %1601 = vmatprep.subr.mxu0 0.0
  %1602 = vmatpush1.msra.mxu0 0.0
  %1603 = vmatprep.subr.mxu0 0.0
  %1604 = vmatpush1.msra.mxu0 0.0
  %1605 = vmatprep.subr.mxu0 0.0
  %1606 = vmatpush1.msra.mxu0 0.0
  %1607 = vmatprep.subr.mxu0 0.0
  %1608 = vmatpush1.msra.mxu0 0.0
  %1609 = vmatprep.subr.mxu0 0.0
  %1610 = vmatpush1.msra.mxu0 0.0
  %1611 = vmatprep.subr.mxu0 0.0
  %1612 = vmatpush1.msra.mxu0 0.0
  %1613 = vmatprep.subr.mxu0 0.0
  %1614 = vmatpush1.msra.mxu0 0.0
  %1615 = vmatprep.subr.mxu0 0.0
  %1616 = vmatpush1.msra.mxu0 0.0
  %1617 = vmatprep.subr.mxu0 0.0
  %1618 = vmatpush1.msra.mxu0 0.0
  %1619 = vmatprep.subr.mxu0 0.0
  %1620 = vmatpush1.msra.mxu0 0.0
  %1621 = vmatprep.subr.mxu0 0.0
  %1622 = vmatpush1.msra.mxu0 0.0
  %1623 = vmatprep.subr.mxu0 0.0
  %1624 = vmatpush1.msra.mxu0 0.0
  %1625 = vmatprep.subr.mxu0 0.0
  %1626 = vmatpush1.msra.mxu0 0.0
  %1627 = vmatprep.subr.mxu0 0.0
  %1628 = vmatpush1.msra.mxu0 0.0
  %1629 = vmatprep.subr.mxu0 0.0
  %1630 = vmatpush1.msra.mxu0 0.0
  %1631 = vmatprep.subr.mxu0 0.0
  %1632 = vmatpush1.msra.mxu0 0.0
  %1633 = vmatprep.subr.mxu0 0.0
  %1634 = vmatpush1.msra.mxu0 0.0
  %1635 = vmatprep.subr.mxu0 0.0
  %1636 = vmatpush1.msra.mxu0 0.0
  %1637 = vmatprep.subr.mxu0 0.0
  %1638 = vmatpush1.msra.mxu0 0.0
  %1639 = vmatprep.subr.mxu0 0.0
  %1640 = vmatpush1.msra.mxu0 0.0
  %1641 = vmatprep.mubr.f32.mxu0 0.0
  %1642 = vmatmul.mubr.f32.gmra.mrb[0].mxu0 %v163
  %v1643 = vpop.f32.mrb[0].mxu0
  %v1644 = vadd.f32 %v1575, %v1643
  %v1645 = vpop.f32.mrb[0].mxu0
  %1646 = vmatprep.mubr.f32.mxu0 0.0
  %1647 = vmatmul.mubr.f32.gmra.mrb[0].mxu0 %v166
  %v1648 = vpop.f32.mrb[0].mxu0
  %v1649 = vadd.f32 %v1575, %v1648
  %v1650 = vpop.f32.mrb[0].mxu0
  %1651 = vmatprep.mubr.f32.mxu0 0.0
  %1652 = vmatmul.mubr.f32.gmra.mrb[0].mxu0 %v169
  %v1653 = vpop.f32.mrb[0].mxu0
  %v1654 = vadd.f32 %v1575, %v1653
  %v1655 = vpop.f32.mrb[0].mxu0
  %1656 = vmatprep.mubr.f32.mxu0 0.0
  %1657 = vmatmul.mubr.f32.gmra.mrb[0].mxu0 %v172
  %v1658 = vpop.f32.mrb[0].mxu0
  %v1659 = vadd.f32 %v1575, %v1658
  %v1660 = vpop.f32.mrb[0].mxu0
  %1661 = vdwg.mxu0
  %s1662 = scalar_lea.vmem %s4, 320
  %v1663 = vld [vmem:[%s1662] sm:$0xff]
  %v1664 = vld [vmem:[%s1662 + $0x8] sm:$0xff]
  %v1665 = vld [vmem:[%s1662 + $0x10] sm:$0xff]
  %v1666 = vld [vmem:[%s1662 + $0x18] sm:$0xff]
  %s1667 = scalar_lea.vmem %s5, 10
  %v1668 = vld [vmem:[%s1667] sm:$0x1]
  %v1670 = vlaneseq
  %v1671 = vshrl.u32 %v1670, 7
  %v1672 = vsub.s32 0, %v1671
  %v1673 = vrot.slane %v1668, %v1672
  %1675 = vmatprep.subr.mxu0 0.0
  %1676 = vmatpush1.msra.mxu0 %v1663
  %1677 = vmatprep.subr.mxu0 0.0
  %1678 = vmatpush1.msra.mxu0 %v1664
  %1679 = vmatprep.subr.mxu0 0.0
  %1680 = vmatpush1.msra.mxu0 %v1665
  %1681 = vmatprep.subr.mxu0 0.0
  %1682 = vmatpush1.msra.mxu0 %v1666
  %1683 = vmatprep.subr.mxu0 0.0
  %1684 = vmatpush1.msra.mxu0 0.0
  %1685 = vmatprep.subr.mxu0 0.0
  %1686 = vmatpush1.msra.mxu0 0.0
  %1687 = vmatprep.subr.mxu0 0.0
  %1688 = vmatpush1.msra.mxu0 0.0
  %1689 = vmatprep.subr.mxu0 0.0
  %1690 = vmatpush1.msra.mxu0 0.0
  %1691 = vmatprep.subr.mxu0 0.0
  %1692 = vmatpush1.msra.mxu0 0.0
  %1693 = vmatprep.subr.mxu0 0.0
  %1694 = vmatpush1.msra.mxu0 0.0
  %1695 = vmatprep.subr.mxu0 0.0
  %1696 = vmatpush1.msra.mxu0 0.0
  %1697 = vmatprep.subr.mxu0 0.0
  %1698 = vmatpush1.msra.mxu0 0.0
  %1699 = vmatprep.subr.mxu0 0.0
  %1700 = vmatpush1.msra.mxu0 0.0
  %1701 = vmatprep.subr.mxu0 0.0
  %1702 = vmatpush1.msra.mxu0 0.0
  %1703 = vmatprep.subr.mxu0 0.0
  %1704 = vmatpush1.msra.mxu0 0.0
  %1705 = vmatprep.subr.mxu0 0.0
  %1706 = vmatpush1.msra.mxu0 0.0
  %1707 = vmatprep.subr.mxu0 0.0
  %1708 = vmatpush1.msra.mxu0 0.0
  %1709 = vmatprep.subr.mxu0 0.0
  %1710 = vmatpush1.msra.mxu0 0.0
  %1711 = vmatprep.subr.mxu0 0.0
  %1712 = vmatpush1.msra.mxu0 0.0
  %1713 = vmatprep.subr.mxu0 0.0
  %1714 = vmatpush1.msra.mxu0 0.0
  %1715 = vmatprep.subr.mxu0 0.0
  %1716 = vmatpush1.msra.mxu0 0.0
  %1717 = vmatprep.subr.mxu0 0.0
  %1718 = vmatpush1.msra.mxu0 0.0
  %1719 = vmatprep.subr.mxu0 0.0
  %1720 = vmatpush1.msra.mxu0 0.0
  %1721 = vmatprep.subr.mxu0 0.0
  %1722 = vmatpush1.msra.mxu0 0.0
  %1723 = vmatprep.subr.mxu0 0.0
  %1724 = vmatpush1.msra.mxu0 0.0
  %1725 = vmatprep.subr.mxu0 0.0
  %1726 = vmatpush1.msra.mxu0 0.0
  %1727 = vmatprep.subr.mxu0 0.0
  %1728 = vmatpush1.msra.mxu0 0.0
  %1729 = vmatprep.subr.mxu0 0.0
  %1730 = vmatpush1.msra.mxu0 0.0
  %1731 = vmatprep.subr.mxu0 0.0
  %1732 = vmatpush1.msra.mxu0 0.0
  %1733 = vmatprep.subr.mxu0 0.0
  %1734 = vmatpush1.msra.mxu0 0.0
  %1735 = vmatprep.subr.mxu0 0.0
  %1736 = vmatpush1.msra.mxu0 0.0
  %1737 = vmatprep.subr.mxu0 0.0
  %1738 = vmatpush1.msra.mxu0 0.0
  %1739 = vmatprep.mubr.f32.mxu0 0.0
  %1740 = vmatmul.mubr.f32.gmra.mrb[0].mxu0 %v273
  %v1741 = vpop.f32.mrb[0].mxu0
  %v1742 = vadd.f32 %v1673, %v1741
  %v1743 = vpop.f32.mrb[0].mxu0
  %1744 = vmatprep.mubr.f32.mxu0 0.0
  %1745 = vmatmul.mubr.f32.gmra.mrb[0].mxu0 %v276
  %v1746 = vpop.f32.mrb[0].mxu0
  %v1747 = vadd.f32 %v1673, %v1746
  %v1748 = vpop.f32.mrb[0].mxu0
  %1749 = vmatprep.mubr.f32.mxu0 0.0
  %1750 = vmatmul.mubr.f32.gmra.mrb[0].mxu0 %v279
  %v1751 = vpop.f32.mrb[0].mxu0
  %v1752 = vadd.f32 %v1673, %v1751
  %v1753 = vpop.f32.mrb[0].mxu0
  %1754 = vmatprep.mubr.f32.mxu0 0.0
  %1755 = vmatmul.mubr.f32.gmra.mrb[0].mxu0 %v282
  %v1756 = vpop.f32.mrb[0].mxu0
  %v1757 = vadd.f32 %v1673, %v1756
  %v1758 = vpop.f32.mrb[0].mxu0
  %1759 = vdwg.mxu0
  %v1760 = vmul.f32 %v1556, 0.35355338
  %v1761 = vmul.f32 %v1561, 0.35355338
  %v1763 = vsel %vm371, %v1760, 0
  %v1766 = vsel %vm371, %v1644, 0
  %v1769 = vsel %vm371, %v1649, 0
  %1771 = vmatprep.subr.mxu0 0.0
  %1772 = vmatpush1.xpose.msra.mxu0 %v1766
  %1773 = vmatprep.subr.mxu0 0.0
  %1774 = vmatpush1.xpose.msra.mxu0 %v1769
  %1775 = vmatprep.subr.mxu0 0.0
  %1776 = vmatpush1.xpose.msra.mxu0 0.0
  %1777 = vmatprep.subr.mxu0 0.0
  %1778 = vmatpush1.xpose.msra.mxu0 0.0
  %1779 = vmatprep.subr.mxu0 0.0
  %1780 = vmatpush1.xpose.msra.mxu0 0.0
  %1781 = vmatprep.subr.mxu0 0.0
  %1782 = vmatpush1.xpose.msra.mxu0 0.0
  %1783 = vmatprep.subr.mxu0 0.0
  %1784 = vmatpush1.xpose.msra.mxu0 0.0
  %1785 = vmatprep.subr.mxu0 0.0
  %1786 = vmatpush1.xpose.msra.mxu0 0.0
  %1787 = vmatprep.subr.mxu0 0.0
  %1788 = vmatpush1.xpose.msra.mxu0 0.0
  %1789 = vmatprep.subr.mxu0 0.0
  %1790 = vmatpush1.xpose.msra.mxu0 0.0
  %1791 = vmatprep.subr.mxu0 0.0
  %1792 = vmatpush1.xpose.msra.mxu0 0.0
  %1793 = vmatprep.subr.mxu0 0.0
  %1794 = vmatpush1.xpose.msra.mxu0 0.0
  %1795 = vmatprep.subr.mxu0 0.0
  %1796 = vmatpush1.xpose.msra.mxu0 0.0
  %1797 = vmatprep.subr.mxu0 0.0
  %1798 = vmatpush1.xpose.msra.mxu0 0.0
  %1799 = vmatprep.subr.mxu0 0.0
  %1800 = vmatpush1.xpose.msra.mxu0 0.0
  %1801 = vmatprep.subr.mxu0 0.0
  %1802 = vmatpush1.xpose.msra.mxu0 0.0
  %1803 = vmatprep.subr.mxu0 0.0
  %1804 = vmatpush1.xpose.msra.mxu0 0.0
  %1805 = vmatprep.subr.mxu0 0.0
  %1806 = vmatpush1.xpose.msra.mxu0 0.0
  %1807 = vmatprep.subr.mxu0 0.0
  %1808 = vmatpush1.xpose.msra.mxu0 0.0
  %1809 = vmatprep.subr.mxu0 0.0
  %1810 = vmatpush1.xpose.msra.mxu0 0.0
  %1811 = vmatprep.subr.mxu0 0.0
  %1812 = vmatpush1.xpose.msra.mxu0 0.0
  %1813 = vmatprep.subr.mxu0 0.0
  %1814 = vmatpush1.xpose.msra.mxu0 0.0
  %1815 = vmatprep.subr.mxu0 0.0
  %1816 = vmatpush1.xpose.msra.mxu0 0.0
  %1817 = vmatprep.subr.mxu0 0.0
  %1818 = vmatpush1.xpose.msra.mxu0 0.0
  %1819 = vmatprep.subr.mxu0 0.0
  %1820 = vmatpush1.xpose.msra.mxu0 0.0
  %1821 = vmatprep.subr.mxu0 0.0
  %1822 = vmatpush1.xpose.msra.mxu0 0.0
  %1823 = vmatprep.subr.mxu0 0.0
  %1824 = vmatpush1.xpose.msra.mxu0 0.0
  %1825 = vmatprep.subr.mxu0 0.0
  %1826 = vmatpush1.xpose.msra.mxu0 0.0
  %1827 = vmatprep.subr.mxu0 0.0
  %1828 = vmatpush1.xpose.msra.mxu0 0.0
  %1829 = vmatprep.subr.mxu0 0.0
  %1830 = vmatpush1.xpose.msra.mxu0 0.0
  %1831 = vmatprep.subr.mxu0 0.0
  %1832 = vmatpush1.xpose.msra.mxu0 0.0
  %1833 = vmatprep.subr.mxu0 0.0
  %1834 = vmatpush1.xpose.msra.mxu0 0.0
  %1835 = vmatprep.mubr.f32.mxu0 0.0
  %1836 = vmatmul.mubr.f32.gmra.mrb[0].mxu0 %v1763
  %v1837 = vpop.f32.mrb[0].mxu0
  %v1838 = vadd.f32 0.0, %v1837
  %v1839 = vpop.f32.mrb[0].mxu0
  %1840 = vdwg.mxu0
  %v1841 = vsel %vm451, %v1838, -inf
  %1842 = vmax.xlane.f32.xlu0 %v1841
  %v1843 = vpop.xlane.xlu0 %1842
  %v1844 = vsub.f32 %v1838, %v1843
  %v1845 = vmul.f32 %v1844, 1.442695
  %v1846 = vpow.pop %v1845
  %v1847 = vsel %vm451, %v1846, 0.0
  %1848 = vadd.xlane.f32.xlu0 %v1847
  %v1849 = vpop.xlane.xlu0 %1848
  %v1850 = vrcp.pop %v1849
  %v1851 = vmul.f32 %v1846, %v1850
  %v1853 = vsel %vm451, %v1851, 0
  %1855 = vmatprep.subr.mxu0 0.0
  %1856 = vmatpush1.msra.mxu0 %v1742
  %1857 = vmatprep.subr.mxu0 0.0
  %1858 = vmatpush1.msra.mxu0 %v1747
  %1859 = vmatprep.subr.mxu0 0.0
  %1860 = vmatpush1.msra.mxu0 0.0
  %1861 = vmatprep.subr.mxu0 0.0
  %1862 = vmatpush1.msra.mxu0 0.0
  %1863 = vmatprep.subr.mxu0 0.0
  %1864 = vmatpush1.msra.mxu0 0.0
  %1865 = vmatprep.subr.mxu0 0.0
  %1866 = vmatpush1.msra.mxu0 0.0
  %1867 = vmatprep.subr.mxu0 0.0
  %1868 = vmatpush1.msra.mxu0 0.0
  %1869 = vmatprep.subr.mxu0 0.0
  %1870 = vmatpush1.msra.mxu0 0.0
  %1871 = vmatprep.subr.mxu0 0.0
  %1872 = vmatpush1.msra.mxu0 0.0
  %1873 = vmatprep.subr.mxu0 0.0
  %1874 = vmatpush1.msra.mxu0 0.0
  %1875 = vmatprep.subr.mxu0 0.0
  %1876 = vmatpush1.msra.mxu0 0.0
  %1877 = vmatprep.subr.mxu0 0.0
  %1878 = vmatpush1.msra.mxu0 0.0
  %1879 = vmatprep.subr.mxu0 0.0
  %1880 = vmatpush1.msra.mxu0 0.0
  %1881 = vmatprep.subr.mxu0 0.0
  %1882 = vmatpush1.msra.mxu0 0.0
  %1883 = vmatprep.subr.mxu0 0.0
  %1884 = vmatpush1.msra.mxu0 0.0
  %1885 = vmatprep.subr.mxu0 0.0
  %1886 = vmatpush1.msra.mxu0 0.0
  %1887 = vmatprep.subr.mxu0 0.0
  %1888 = vmatpush1.msra.mxu0 0.0
  %1889 = vmatprep.subr.mxu0 0.0
  %1890 = vmatpush1.msra.mxu0 0.0
  %1891 = vmatprep.subr.mxu0 0.0
  %1892 = vmatpush1.msra.mxu0 0.0
  %1893 = vmatprep.subr.mxu0 0.0
  %1894 = vmatpush1.msra.mxu0 0.0
  %1895 = vmatprep.subr.mxu0 0.0
  %1896 = vmatpush1.msra.mxu0 0.0
  %1897 = vmatprep.subr.mxu0 0.0
  %1898 = vmatpush1.msra.mxu0 0.0
  %1899 = vmatprep.subr.mxu0 0.0
  %1900 = vmatpush1.msra.mxu0 0.0
  %1901 = vmatprep.subr.mxu0 0.0
  %1902 = vmatpush1.msra.mxu0 0.0
  %1903 = vmatprep.subr.mxu0 0.0
  %1904 = vmatpush1.msra.mxu0 0.0
  %1905 = vmatprep.subr.mxu0 0.0
  %1906 = vmatpush1.msra.mxu0 0.0
  %1907 = vmatprep.subr.mxu0 0.0
  %1908 = vmatpush1.msra.mxu0 0.0
  %1909 = vmatprep.subr.mxu0 0.0
  %1910 = vmatpush1.msra.mxu0 0.0
  %1911 = vmatprep.subr.mxu0 0.0
  %1912 = vmatpush1.msra.mxu0 0.0
  %1913 = vmatprep.subr.mxu0 0.0
  %1914 = vmatpush1.msra.mxu0 0.0
  %1915 = vmatprep.subr.mxu0 0.0
  %1916 = vmatpush1.msra.mxu0 0.0
  %1917 = vmatprep.subr.mxu0 0.0
  %1918 = vmatpush1.msra.mxu0 0.0
  %1919 = vmatprep.mubr.f32.mxu0 0.0
  %1920 = vmatmul.mubr.f32.gmra.mrb[0].mxu0 %v1853
  %v1921 = vpop.f32.mrb[0].mxu0
  %v1922 = vadd.f32 0.0, %v1921
  %v1923 = vpop.f32.mrb[0].mxu0
  %1924 = vdwg.mxu0
  %v1926 = vsel %vm371, %v1761, 0
  %v1929 = vsel %vm371, %v1654, 0
  %v1932 = vsel %vm371, %v1659, 0
  %1934 = vmatprep.subr.mxu0 0.0
  %1935 = vmatpush1.xpose.msra.mxu0 %v1929
  %1936 = vmatprep.subr.mxu0 0.0
  %1937 = vmatpush1.xpose.msra.mxu0 %v1932
  %1938 = vmatprep.subr.mxu0 0.0
  %1939 = vmatpush1.xpose.msra.mxu0 0.0
  %1940 = vmatprep.subr.mxu0 0.0
  %1941 = vmatpush1.xpose.msra.mxu0 0.0
  %1942 = vmatprep.subr.mxu0 0.0
  %1943 = vmatpush1.xpose.msra.mxu0 0.0
  %1944 = vmatprep.subr.mxu0 0.0
  %1945 = vmatpush1.xpose.msra.mxu0 0.0
  %1946 = vmatprep.subr.mxu0 0.0
  %1947 = vmatpush1.xpose.msra.mxu0 0.0
  %1948 = vmatprep.subr.mxu0 0.0
  %1949 = vmatpush1.xpose.msra.mxu0 0.0
  %1950 = vmatprep.subr.mxu0 0.0
  %1951 = vmatpush1.xpose.msra.mxu0 0.0
  %1952 = vmatprep.subr.mxu0 0.0
  %1953 = vmatpush1.xpose.msra.mxu0 0.0
  %1954 = vmatprep.subr.mxu0 0.0
  %1955 = vmatpush1.xpose.msra.mxu0 0.0
  %1956 = vmatprep.subr.mxu0 0.0
  %1957 = vmatpush1.xpose.msra.mxu0 0.0
  %1958 = vmatprep.subr.mxu0 0.0
  %1959 = vmatpush1.xpose.msra.mxu0 0.0
  %1960 = vmatprep.subr.mxu0 0.0
  %1961 = vmatpush1.xpose.msra.mxu0 0.0
  %1962 = vmatprep.subr.mxu0 0.0
  %1963 = vmatpush1.xpose.msra.mxu0 0.0
  %1964 = vmatprep.subr.mxu0 0.0
  %1965 = vmatpush1.xpose.msra.mxu0 0.0
  %1966 = vmatprep.subr.mxu0 0.0
  %1967 = vmatpush1.xpose.msra.mxu0 0.0
  %1968 = vmatprep.subr.mxu0 0.0
  %1969 = vmatpush1.xpose.msra.mxu0 0.0
  %1970 = vmatprep.subr.mxu0 0.0
  %1971 = vmatpush1.xpose.msra.mxu0 0.0
  %1972 = vmatprep.subr.mxu0 0.0
  %1973 = vmatpush1.xpose.msra.mxu0 0.0
  %1974 = vmatprep.subr.mxu0 0.0
  %1975 = vmatpush1.xpose.msra.mxu0 0.0
  %1976 = vmatprep.subr.mxu0 0.0
  %1977 = vmatpush1.xpose.msra.mxu0 0.0
  %1978 = vmatprep.subr.mxu0 0.0
  %1979 = vmatpush1.xpose.msra.mxu0 0.0
  %1980 = vmatprep.subr.mxu0 0.0
  %1981 = vmatpush1.xpose.msra.mxu0 0.0
  %1982 = vmatprep.subr.mxu0 0.0
  %1983 = vmatpush1.xpose.msra.mxu0 0.0
  %1984 = vmatprep.subr.mxu0 0.0
  %1985 = vmatpush1.xpose.msra.mxu0 0.0
  %1986 = vmatprep.subr.mxu0 0.0
  %1987 = vmatpush1.xpose.msra.mxu0 0.0
  %1988 = vmatprep.subr.mxu0 0.0
  %1989 = vmatpush1.xpose.msra.mxu0 0.0
  %1990 = vmatprep.subr.mxu0 0.0
  %1991 = vmatpush1.xpose.msra.mxu0 0.0
  %1992 = vmatprep.subr.mxu0 0.0
  %1993 = vmatpush1.xpose.msra.mxu0 0.0
  %1994 = vmatprep.subr.mxu0 0.0
  %1995 = vmatpush1.xpose.msra.mxu0 0.0
  %1996 = vmatprep.subr.mxu0 0.0
  %1997 = vmatpush1.xpose.msra.mxu0 0.0
  %1998 = vmatprep.mubr.f32.mxu0 0.0
  %1999 = vmatmul.mubr.f32.gmra.mrb[0].mxu0 %v1926
  %v2000 = vpop.f32.mrb[0].mxu0
  %v2001 = vadd.f32 0.0, %v2000
  %v2002 = vpop.f32.mrb[0].mxu0
  %2003 = vdwg.mxu0
  %v2004 = vsel %vm451, %v2001, -inf
  %2005 = vmax.xlane.f32.xlu0 %v2004
  %v2006 = vpop.xlane.xlu0 %2005
  %v2007 = vsub.f32 %v2001, %v2006
  %v2008 = vmul.f32 %v2007, 1.442695
  %v2009 = vpow.pop %v2008
  %v2010 = vsel %vm451, %v2009, 0.0
  %2011 = vadd.xlane.f32.xlu0 %v2010
  %v2012 = vpop.xlane.xlu0 %2011
  %v2013 = vrcp.pop %v2012
  %v2014 = vmul.f32 %v2009, %v2013
  %v2016 = vsel %vm451, %v2014, 0
  %2018 = vmatprep.subr.mxu0 0.0
  %2019 = vmatpush1.msra.mxu0 %v1752
  %2020 = vmatprep.subr.mxu0 0.0
  %2021 = vmatpush1.msra.mxu0 %v1757
  %2022 = vmatprep.subr.mxu0 0.0
  %2023 = vmatpush1.msra.mxu0 0.0
  %2024 = vmatprep.subr.mxu0 0.0
  %2025 = vmatpush1.msra.mxu0 0.0
  %2026 = vmatprep.subr.mxu0 0.0
  %2027 = vmatpush1.msra.mxu0 0.0
  %2028 = vmatprep.subr.mxu0 0.0
  %2029 = vmatpush1.msra.mxu0 0.0
  %2030 = vmatprep.subr.mxu0 0.0
  %2031 = vmatpush1.msra.mxu0 0.0
  %2032 = vmatprep.subr.mxu0 0.0
  %2033 = vmatpush1.msra.mxu0 0.0
  %2034 = vmatprep.subr.mxu0 0.0
  %2035 = vmatpush1.msra.mxu0 0.0
  %2036 = vmatprep.subr.mxu0 0.0
  %2037 = vmatpush1.msra.mxu0 0.0
  %2038 = vmatprep.subr.mxu0 0.0
  %2039 = vmatpush1.msra.mxu0 0.0
  %2040 = vmatprep.subr.mxu0 0.0
  %2041 = vmatpush1.msra.mxu0 0.0
  %2042 = vmatprep.subr.mxu0 0.0
  %2043 = vmatpush1.msra.mxu0 0.0
  %2044 = vmatprep.subr.mxu0 0.0
  %2045 = vmatpush1.msra.mxu0 0.0
  %2046 = vmatprep.subr.mxu0 0.0
  %2047 = vmatpush1.msra.mxu0 0.0
  %2048 = vmatprep.subr.mxu0 0.0
  %2049 = vmatpush1.msra.mxu0 0.0
  %2050 = vmatprep.subr.mxu0 0.0
  %2051 = vmatpush1.msra.mxu0 0.0
  %2052 = vmatprep.subr.mxu0 0.0
  %2053 = vmatpush1.msra.mxu0 0.0
  %2054 = vmatprep.subr.mxu0 0.0
  %2055 = vmatpush1.msra.mxu0 0.0
  %2056 = vmatprep.subr.mxu0 0.0
  %2057 = vmatpush1.msra.mxu0 0.0
  %2058 = vmatprep.subr.mxu0 0.0
  %2059 = vmatpush1.msra.mxu0 0.0
  %2060 = vmatprep.subr.mxu0 0.0
  %2061 = vmatpush1.msra.mxu0 0.0
  %2062 = vmatprep.subr.mxu0 0.0
  %2063 = vmatpush1.msra.mxu0 0.0
  %2064 = vmatprep.subr.mxu0 0.0
  %2065 = vmatpush1.msra.mxu0 0.0
  %2066 = vmatprep.subr.mxu0 0.0
  %2067 = vmatpush1.msra.mxu0 0.0
  %2068 = vmatprep.subr.mxu0 0.0
  %2069 = vmatpush1.msra.mxu0 0.0
  %2070 = vmatprep.subr.mxu0 0.0
  %2071 = vmatpush1.msra.mxu0 0.0
  %2072 = vmatprep.subr.mxu0 0.0
  %2073 = vmatpush1.msra.mxu0 0.0
  %2074 = vmatprep.subr.mxu0 0.0
  %2075 = vmatpush1.msra.mxu0 0.0
  %2076 = vmatprep.subr.mxu0 0.0
  %2077 = vmatpush1.msra.mxu0 0.0
  %2078 = vmatprep.subr.mxu0 0.0
  %2079 = vmatpush1.msra.mxu0 0.0
  %2080 = vmatprep.subr.mxu0 0.0
  %2081 = vmatpush1.msra.mxu0 0.0
  %2082 = vmatprep.mubr.f32.mxu0 0.0
  %2083 = vmatmul.mubr.f32.gmra.mrb[0].mxu0 %v2016
  %v2084 = vpop.f32.mrb[0].mxu0
  %v2085 = vadd.f32 0.0, %v2084
  %v2086 = vpop.f32.mrb[0].mxu0
  %2087 = vdwg.mxu0
  %s2088 = scalar_lea.vmem %s6, 16
  %v2089 = vld [vmem:[%s2088] sm:$0xff]
  %v2091 = vsel %vm371, %v1922, 0
  %v2094 = vsel %vm371, %v2085, 0
  %2096 = vmatprep.subr.mxu0 0.0
  %2097 = vmatpush1.msra.mxu0 %v2089
  %2098 = vmatprep.subr.mxu0 0.0
  %2099 = vmatpush1.msra.mxu0 0.0
  %2100 = vmatprep.subr.mxu0 0.0
  %2101 = vmatpush1.msra.mxu0 0.0
  %2102 = vmatprep.subr.mxu0 0.0
  %2103 = vmatpush1.msra.mxu0 0.0
  %2104 = vmatprep.subr.mxu0 0.0
  %2105 = vmatpush1.msra.mxu0 0.0
  %2106 = vmatprep.subr.mxu0 0.0
  %2107 = vmatpush1.msra.mxu0 0.0
  %2108 = vmatprep.subr.mxu0 0.0
  %2109 = vmatpush1.msra.mxu0 0.0
  %2110 = vmatprep.subr.mxu0 0.0
  %2111 = vmatpush1.msra.mxu0 0.0
  %2112 = vmatprep.subr.mxu0 0.0
  %2113 = vmatpush1.msra.mxu0 0.0
  %2114 = vmatprep.subr.mxu0 0.0
  %2115 = vmatpush1.msra.mxu0 0.0
  %2116 = vmatprep.subr.mxu0 0.0
  %2117 = vmatpush1.msra.mxu0 0.0
  %2118 = vmatprep.subr.mxu0 0.0
  %2119 = vmatpush1.msra.mxu0 0.0
  %2120 = vmatprep.subr.mxu0 0.0
  %2121 = vmatpush1.msra.mxu0 0.0
  %2122 = vmatprep.subr.mxu0 0.0
  %2123 = vmatpush1.msra.mxu0 0.0
  %2124 = vmatprep.subr.mxu0 0.0
  %2125 = vmatpush1.msra.mxu0 0.0
  %2126 = vmatprep.subr.mxu0 0.0
  %2127 = vmatpush1.msra.mxu0 0.0
  %2128 = vmatprep.subr.mxu0 0.0
  %2129 = vmatpush1.msra.mxu0 0.0
  %2130 = vmatprep.subr.mxu0 0.0
  %2131 = vmatpush1.msra.mxu0 0.0
  %2132 = vmatprep.subr.mxu0 0.0
  %2133 = vmatpush1.msra.mxu0 0.0
  %2134 = vmatprep.subr.mxu0 0.0
  %2135 = vmatpush1.msra.mxu0 0.0
  %2136 = vmatprep.subr.mxu0 0.0
  %2137 = vmatpush1.msra.mxu0 0.0
  %2138 = vmatprep.subr.mxu0 0.0
  %2139 = vmatpush1.msra.mxu0 0.0
  %2140 = vmatprep.subr.mxu0 0.0
  %2141 = vmatpush1.msra.mxu0 0.0
  %2142 = vmatprep.subr.mxu0 0.0
  %2143 = vmatpush1.msra.mxu0 0.0
  %2144 = vmatprep.subr.mxu0 0.0
  %2145 = vmatpush1.msra.mxu0 0.0
  %2146 = vmatprep.subr.mxu0 0.0
  %2147 = vmatpush1.msra.mxu0 0.0
  %2148 = vmatprep.subr.mxu0 0.0
  %2149 = vmatpush1.msra.mxu0 0.0
  %2150 = vmatprep.subr.mxu0 0.0
  %2151 = vmatpush1.msra.mxu0 0.0
  %2152 = vmatprep.subr.mxu0 0.0
  %2153 = vmatpush1.msra.mxu0 0.0
  %2154 = vmatprep.subr.mxu0 0.0
  %2155 = vmatpush1.msra.mxu0 0.0
  %2156 = vmatprep.subr.mxu0 0.0
  %2157 = vmatpush1.msra.mxu0 0.0
  %2158 = vmatprep.subr.mxu0 0.0
  %2159 = vmatpush1.msra.mxu0 0.0
  %2160 = vmatprep.mubr.f32.mxu0 0.0
  %2161 = vmatmul.mubr.f32.gmra.mrb[0].mxu0 %v2091
  %v2162 = vpop.f32.mrb[0].mxu0
  %v2163 = vadd.f32 0.0, %v2162
  %v2164 = vpop.f32.mrb[0].mxu0
  %2165 = vmatprep.mubr.f32.mxu0 0.0
  %2166 = vmatmul.mubr.f32.gmra.mrb[0].mxu0 %v2094
  %v2167 = vpop.f32.mrb[0].mxu0
  %v2168 = vadd.f32 0.0, %v2167
  %v2169 = vpop.f32.mrb[0].mxu0
  %2170 = vdwg.mxu0
  %v2171 = vadd.f32 %v1468, %v2163
  %v2172 = vadd.f32 %v1473, %v2168
  %s2173 = scalar_lea.vmem %s4, 96
  %v2174 = vld [vmem:[%s2173] sm:$0xff]
  %v2175 = vld [vmem:[%s2173 + $0x8] sm:$0xff]
  %v2176 = vld [vmem:[%s2173 + $0x10] sm:$0xff]
  %v2177 = vld [vmem:[%s2173 + $0x18] sm:$0xff]
  %s2178 = scalar_lea.vmem %s5, 3
  %v2179 = vld [vmem:[%s2178] sm:$0x1]
  %v2181 = vlaneseq
  %v2182 = vshrl.u32 %v2181, 7
  %v2183 = vsub.s32 0, %v2182
  %v2184 = vrot.slane %v2179, %v2183
  %2186 = vmatprep.subr.mxu0 0.0
  %2187 = vmatpush1.msra.mxu0 %v2174
  %2188 = vmatprep.subr.mxu0 0.0
  %2189 = vmatpush1.msra.mxu0 %v2175
  %2190 = vmatprep.subr.mxu0 0.0
  %2191 = vmatpush1.msra.mxu0 %v2176
  %2192 = vmatprep.subr.mxu0 0.0
  %2193 = vmatpush1.msra.mxu0 %v2177
  %2194 = vmatprep.subr.mxu0 0.0
  %2195 = vmatpush1.msra.mxu0 0.0
  %2196 = vmatprep.subr.mxu0 0.0
  %2197 = vmatpush1.msra.mxu0 0.0
  %2198 = vmatprep.subr.mxu0 0.0
  %2199 = vmatpush1.msra.mxu0 0.0
  %2200 = vmatprep.subr.mxu0 0.0
  %2201 = vmatpush1.msra.mxu0 0.0
  %2202 = vmatprep.subr.mxu0 0.0
  %2203 = vmatpush1.msra.mxu0 0.0
  %2204 = vmatprep.subr.mxu0 0.0
  %2205 = vmatpush1.msra.mxu0 0.0
  %2206 = vmatprep.subr.mxu0 0.0
  %2207 = vmatpush1.msra.mxu0 0.0
  %2208 = vmatprep.subr.mxu0 0.0
  %2209 = vmatpush1.msra.mxu0 0.0
  %2210 = vmatprep.subr.mxu0 0.0
  %2211 = vmatpush1.msra.mxu0 0.0
  %2212 = vmatprep.subr.mxu0 0.0
  %2213 = vmatpush1.msra.mxu0 0.0
  %2214 = vmatprep.subr.mxu0 0.0
  %2215 = vmatpush1.msra.mxu0 0.0
  %2216 = vmatprep.subr.mxu0 0.0
  %2217 = vmatpush1.msra.mxu0 0.0
  %2218 = vmatprep.subr.mxu0 0.0
  %2219 = vmatpush1.msra.mxu0 0.0
  %2220 = vmatprep.subr.mxu0 0.0
  %2221 = vmatpush1.msra.mxu0 0.0
  %2222 = vmatprep.subr.mxu0 0.0
  %2223 = vmatpush1.msra.mxu0 0.0
  %2224 = vmatprep.subr.mxu0 0.0
  %2225 = vmatpush1.msra.mxu0 0.0
  %2226 = vmatprep.subr.mxu0 0.0
  %2227 = vmatpush1.msra.mxu0 0.0
  %2228 = vmatprep.subr.mxu0 0.0
  %2229 = vmatpush1.msra.mxu0 0.0
  %2230 = vmatprep.subr.mxu0 0.0
  %2231 = vmatpush1.msra.mxu0 0.0
  %2232 = vmatprep.subr.mxu0 0.0
  %2233 = vmatpush1.msra.mxu0 0.0
  %2234 = vmatprep.subr.mxu0 0.0
  %2235 = vmatpush1.msra.mxu0 0.0
  %2236 = vmatprep.subr.mxu0 0.0
  %2237 = vmatpush1.msra.mxu0 0.0
  %2238 = vmatprep.subr.mxu0 0.0
  %2239 = vmatpush1.msra.mxu0 0.0
  %2240 = vmatprep.subr.mxu0 0.0
  %2241 = vmatpush1.msra.mxu0 0.0
  %2242 = vmatprep.subr.mxu0 0.0
  %2243 = vmatpush1.msra.mxu0 0.0
  %2244 = vmatprep.subr.mxu0 0.0
  %2245 = vmatpush1.msra.mxu0 0.0
  %2246 = vmatprep.subr.mxu0 0.0
  %2247 = vmatpush1.msra.mxu0 0.0
  %2248 = vmatprep.subr.mxu0 0.0
  %2249 = vmatpush1.msra.mxu0 0.0
  %2250 = vmatprep.mubr.f32.mxu0 0.0
  %2251 = vmatmul.mubr.f32.gmra.mrb[0].mxu0 %v69
  %v2252 = vpop.f32.mrb[0].mxu0
  %v2253 = vadd.f32 %v2184, %v2252
  %v2254 = vpop.f32.mrb[0].mxu0
  %2255 = vmatprep.mubr.f32.mxu0 0.0
  %2256 = vmatmul.mubr.f32.gmra.mrb[0].mxu0 %v72
  %v2257 = vpop.f32.mrb[0].mxu0
  %v2258 = vadd.f32 %v2184, %v2257
  %v2259 = vpop.f32.mrb[0].mxu0
  %2260 = vdwg.mxu0
  %s2261 = scalar_lea.vmem %s4, 224
  %v2262 = vld [vmem:[%s2261] sm:$0xff]
  %v2263 = vld [vmem:[%s2261 + $0x8] sm:$0xff]
  %v2264 = vld [vmem:[%s2261 + $0x10] sm:$0xff]
  %v2265 = vld [vmem:[%s2261 + $0x18] sm:$0xff]
  %s2266 = scalar_lea.vmem %s5, 7
  %v2267 = vld [vmem:[%s2266] sm:$0x1]
  %v2269 = vlaneseq
  %v2270 = vshrl.u32 %v2269, 7
  %v2271 = vsub.s32 0, %v2270
  %v2272 = vrot.slane %v2267, %v2271
  %2274 = vmatprep.subr.mxu0 0.0
  %2275 = vmatpush1.msra.mxu0 %v2262
  %2276 = vmatprep.subr.mxu0 0.0
  %2277 = vmatpush1.msra.mxu0 %v2263
  %2278 = vmatprep.subr.mxu0 0.0
  %2279 = vmatpush1.msra.mxu0 %v2264
  %2280 = vmatprep.subr.mxu0 0.0
  %2281 = vmatpush1.msra.mxu0 %v2265
  %2282 = vmatprep.subr.mxu0 0.0
  %2283 = vmatpush1.msra.mxu0 0.0
  %2284 = vmatprep.subr.mxu0 0.0
  %2285 = vmatpush1.msra.mxu0 0.0
  %2286 = vmatprep.subr.mxu0 0.0
  %2287 = vmatpush1.msra.mxu0 0.0
  %2288 = vmatprep.subr.mxu0 0.0
  %2289 = vmatpush1.msra.mxu0 0.0
  %2290 = vmatprep.subr.mxu0 0.0
  %2291 = vmatpush1.msra.mxu0 0.0
  %2292 = vmatprep.subr.mxu0 0.0
  %2293 = vmatpush1.msra.mxu0 0.0
  %2294 = vmatprep.subr.mxu0 0.0
  %2295 = vmatpush1.msra.mxu0 0.0
  %2296 = vmatprep.subr.mxu0 0.0
  %2297 = vmatpush1.msra.mxu0 0.0
  %2298 = vmatprep.subr.mxu0 0.0
  %2299 = vmatpush1.msra.mxu0 0.0
  %2300 = vmatprep.subr.mxu0 0.0
  %2301 = vmatpush1.msra.mxu0 0.0
  %2302 = vmatprep.subr.mxu0 0.0
  %2303 = vmatpush1.msra.mxu0 0.0
  %2304 = vmatprep.subr.mxu0 0.0
  %2305 = vmatpush1.msra.mxu0 0.0
  %2306 = vmatprep.subr.mxu0 0.0
  %2307 = vmatpush1.msra.mxu0 0.0
  %2308 = vmatprep.subr.mxu0 0.0
  %2309 = vmatpush1.msra.mxu0 0.0
  %2310 = vmatprep.subr.mxu0 0.0
  %2311 = vmatpush1.msra.mxu0 0.0
  %2312 = vmatprep.subr.mxu0 0.0
  %2313 = vmatpush1.msra.mxu0 0.0
  %2314 = vmatprep.subr.mxu0 0.0
  %2315 = vmatpush1.msra.mxu0 0.0
  %2316 = vmatprep.subr.mxu0 0.0
  %2317 = vmatpush1.msra.mxu0 0.0
  %2318 = vmatprep.subr.mxu0 0.0
  %2319 = vmatpush1.msra.mxu0 0.0
  %2320 = vmatprep.subr.mxu0 0.0
  %2321 = vmatpush1.msra.mxu0 0.0
  %2322 = vmatprep.subr.mxu0 0.0
  %2323 = vmatpush1.msra.mxu0 0.0
  %2324 = vmatprep.subr.mxu0 0.0
  %2325 = vmatpush1.msra.mxu0 0.0
  %2326 = vmatprep.subr.mxu0 0.0
  %2327 = vmatpush1.msra.mxu0 0.0
  %2328 = vmatprep.subr.mxu0 0.0
  %2329 = vmatpush1.msra.mxu0 0.0
  %2330 = vmatprep.subr.mxu0 0.0
  %2331 = vmatpush1.msra.mxu0 0.0
  %2332 = vmatprep.subr.mxu0 0.0
  %2333 = vmatpush1.msra.mxu0 0.0
  %2334 = vmatprep.subr.mxu0 0.0
  %2335 = vmatpush1.msra.mxu0 0.0
  %2336 = vmatprep.subr.mxu0 0.0
  %2337 = vmatpush1.msra.mxu0 0.0
  %2338 = vmatprep.mubr.f32.mxu0 0.0
  %2339 = vmatmul.mubr.f32.gmra.mrb[0].mxu0 %v163
  %v2340 = vpop.f32.mrb[0].mxu0
  %v2341 = vadd.f32 %v2272, %v2340
  %v2342 = vpop.f32.mrb[0].mxu0
  %2343 = vmatprep.mubr.f32.mxu0 0.0
  %2344 = vmatmul.mubr.f32.gmra.mrb[0].mxu0 %v166
  %v2345 = vpop.f32.mrb[0].mxu0
  %v2346 = vadd.f32 %v2272, %v2345
  %v2347 = vpop.f32.mrb[0].mxu0
  %2348 = vmatprep.mubr.f32.mxu0 0.0
  %2349 = vmatmul.mubr.f32.gmra.mrb[0].mxu0 %v169
  %v2350 = vpop.f32.mrb[0].mxu0
  %v2351 = vadd.f32 %v2272, %v2350
  %v2352 = vpop.f32.mrb[0].mxu0
  %2353 = vmatprep.mubr.f32.mxu0 0.0
  %2354 = vmatmul.mubr.f32.gmra.mrb[0].mxu0 %v172
  %v2355 = vpop.f32.mrb[0].mxu0
  %v2356 = vadd.f32 %v2272, %v2355
  %v2357 = vpop.f32.mrb[0].mxu0
  %2358 = vdwg.mxu0
  %s2359 = scalar_lea.vmem %s4, 352
  %v2360 = vld [vmem:[%s2359] sm:$0xff]
  %v2361 = vld [vmem:[%s2359 + $0x8] sm:$0xff]
  %v2362 = vld [vmem:[%s2359 + $0x10] sm:$0xff]
  %v2363 = vld [vmem:[%s2359 + $0x18] sm:$0xff]
  %s2364 = scalar_lea.vmem %s5, 11
  %v2365 = vld [vmem:[%s2364] sm:$0x1]
  %v2367 = vlaneseq
  %v2368 = vshrl.u32 %v2367, 7
  %v2369 = vsub.s32 0, %v2368
  %v2370 = vrot.slane %v2365, %v2369
  %2372 = vmatprep.subr.mxu0 0.0
  %2373 = vmatpush1.msra.mxu0 %v2360
  %2374 = vmatprep.subr.mxu0 0.0
  %2375 = vmatpush1.msra.mxu0 %v2361
  %2376 = vmatprep.subr.mxu0 0.0
  %2377 = vmatpush1.msra.mxu0 %v2362
  %2378 = vmatprep.subr.mxu0 0.0
  %2379 = vmatpush1.msra.mxu0 %v2363
  %2380 = vmatprep.subr.mxu0 0.0
  %2381 = vmatpush1.msra.mxu0 0.0
  %2382 = vmatprep.subr.mxu0 0.0
  %2383 = vmatpush1.msra.mxu0 0.0
  %2384 = vmatprep.subr.mxu0 0.0
  %2385 = vmatpush1.msra.mxu0 0.0
  %2386 = vmatprep.subr.mxu0 0.0
  %2387 = vmatpush1.msra.mxu0 0.0
  %2388 = vmatprep.subr.mxu0 0.0
  %2389 = vmatpush1.msra.mxu0 0.0
  %2390 = vmatprep.subr.mxu0 0.0
  %2391 = vmatpush1.msra.mxu0 0.0
  %2392 = vmatprep.subr.mxu0 0.0
  %2393 = vmatpush1.msra.mxu0 0.0
  %2394 = vmatprep.subr.mxu0 0.0
  %2395 = vmatpush1.msra.mxu0 0.0
  %2396 = vmatprep.subr.mxu0 0.0
  %2397 = vmatpush1.msra.mxu0 0.0
  %2398 = vmatprep.subr.mxu0 0.0
  %2399 = vmatpush1.msra.mxu0 0.0
  %2400 = vmatprep.subr.mxu0 0.0
  %2401 = vmatpush1.msra.mxu0 0.0
  %2402 = vmatprep.subr.mxu0 0.0
  %2403 = vmatpush1.msra.mxu0 0.0
  %2404 = vmatprep.subr.mxu0 0.0
  %2405 = vmatpush1.msra.mxu0 0.0
  %2406 = vmatprep.subr.mxu0 0.0
  %2407 = vmatpush1.msra.mxu0 0.0
  %2408 = vmatprep.subr.mxu0 0.0
  %2409 = vmatpush1.msra.mxu0 0.0
  %2410 = vmatprep.subr.mxu0 0.0
  %2411 = vmatpush1.msra.mxu0 0.0
  %2412 = vmatprep.subr.mxu0 0.0
  %2413 = vmatpush1.msra.mxu0 0.0
  %2414 = vmatprep.subr.mxu0 0.0
  %2415 = vmatpush1.msra.mxu0 0.0
  %2416 = vmatprep.subr.mxu0 0.0
  %2417 = vmatpush1.msra.mxu0 0.0
  %2418 = vmatprep.subr.mxu0 0.0
  %2419 = vmatpush1.msra.mxu0 0.0
  %2420 = vmatprep.subr.mxu0 0.0
  %2421 = vmatpush1.msra.mxu0 0.0
  %2422 = vmatprep.subr.mxu0 0.0
  %2423 = vmatpush1.msra.mxu0 0.0
  %2424 = vmatprep.subr.mxu0 0.0
  %2425 = vmatpush1.msra.mxu0 0.0
  %2426 = vmatprep.subr.mxu0 0.0
  %2427 = vmatpush1.msra.mxu0 0.0
  %2428 = vmatprep.subr.mxu0 0.0
  %2429 = vmatpush1.msra.mxu0 0.0
  %2430 = vmatprep.subr.mxu0 0.0
  %2431 = vmatpush1.msra.mxu0 0.0
  %2432 = vmatprep.subr.mxu0 0.0
  %2433 = vmatpush1.msra.mxu0 0.0
  %2434 = vmatprep.subr.mxu0 0.0
  %2435 = vmatpush1.msra.mxu0 0.0
  %2436 = vmatprep.mubr.f32.mxu0 0.0
  %2437 = vmatmul.mubr.f32.gmra.mrb[0].mxu0 %v273
  %v2438 = vpop.f32.mrb[0].mxu0
  %v2439 = vadd.f32 %v2370, %v2438
  %v2440 = vpop.f32.mrb[0].mxu0
  %2441 = vmatprep.mubr.f32.mxu0 0.0
  %2442 = vmatmul.mubr.f32.gmra.mrb[0].mxu0 %v276
  %v2443 = vpop.f32.mrb[0].mxu0
  %v2444 = vadd.f32 %v2370, %v2443
  %v2445 = vpop.f32.mrb[0].mxu0
  %2446 = vmatprep.mubr.f32.mxu0 0.0
  %2447 = vmatmul.mubr.f32.gmra.mrb[0].mxu0 %v279
  %v2448 = vpop.f32.mrb[0].mxu0
  %v2449 = vadd.f32 %v2370, %v2448
  %v2450 = vpop.f32.mrb[0].mxu0
  %2451 = vmatprep.mubr.f32.mxu0 0.0
  %2452 = vmatmul.mubr.f32.gmra.mrb[0].mxu0 %v282
  %v2453 = vpop.f32.mrb[0].mxu0
  %v2454 = vadd.f32 %v2370, %v2453
  %v2455 = vpop.f32.mrb[0].mxu0
  %2456 = vdwg.mxu0
  %v2457 = vmul.f32 %v2253, 0.35355338
  %v2458 = vmul.f32 %v2258, 0.35355338
  %v2460 = vsel %vm371, %v2457, 0
  %v2463 = vsel %vm371, %v2341, 0
  %v2466 = vsel %vm371, %v2346, 0
  %2468 = vmatprep.subr.mxu0 0.0
  %2469 = vmatpush1.xpose.msra.mxu0 %v2463
  %2470 = vmatprep.subr.mxu0 0.0
  %2471 = vmatpush1.xpose.msra.mxu0 %v2466
  %2472 = vmatprep.subr.mxu0 0.0
  %2473 = vmatpush1.xpose.msra.mxu0 0.0
  %2474 = vmatprep.subr.mxu0 0.0
  %2475 = vmatpush1.xpose.msra.mxu0 0.0
  %2476 = vmatprep.subr.mxu0 0.0
  %2477 = vmatpush1.xpose.msra.mxu0 0.0
  %2478 = vmatprep.subr.mxu0 0.0
  %2479 = vmatpush1.xpose.msra.mxu0 0.0
  %2480 = vmatprep.subr.mxu0 0.0
  %2481 = vmatpush1.xpose.msra.mxu0 0.0
  %2482 = vmatprep.subr.mxu0 0.0
  %2483 = vmatpush1.xpose.msra.mxu0 0.0
  %2484 = vmatprep.subr.mxu0 0.0
  %2485 = vmatpush1.xpose.msra.mxu0 0.0
  %2486 = vmatprep.subr.mxu0 0.0
  %2487 = vmatpush1.xpose.msra.mxu0 0.0
  %2488 = vmatprep.subr.mxu0 0.0
  %2489 = vmatpush1.xpose.msra.mxu0 0.0
  %2490 = vmatprep.subr.mxu0 0.0
  %2491 = vmatpush1.xpose.msra.mxu0 0.0
  %2492 = vmatprep.subr.mxu0 0.0
  %2493 = vmatpush1.xpose.msra.mxu0 0.0
  %2494 = vmatprep.subr.mxu0 0.0
  %2495 = vmatpush1.xpose.msra.mxu0 0.0
  %2496 = vmatprep.subr.mxu0 0.0
  %2497 = vmatpush1.xpose.msra.mxu0 0.0
  %2498 = vmatprep.subr.mxu0 0.0
  %2499 = vmatpush1.xpose.msra.mxu0 0.0
  %2500 = vmatprep.subr.mxu0 0.0
  %2501 = vmatpush1.xpose.msra.mxu0 0.0
  %2502 = vmatprep.subr.mxu0 0.0
  %2503 = vmatpush1.xpose.msra.mxu0 0.0
  %2504 = vmatprep.subr.mxu0 0.0
  %2505 = vmatpush1.xpose.msra.mxu0 0.0
  %2506 = vmatprep.subr.mxu0 0.0
  %2507 = vmatpush1.xpose.msra.mxu0 0.0
  %2508 = vmatprep.subr.mxu0 0.0
  %2509 = vmatpush1.xpose.msra.mxu0 0.0
  %2510 = vmatprep.subr.mxu0 0.0
  %2511 = vmatpush1.xpose.msra.mxu0 0.0
  %2512 = vmatprep.subr.mxu0 0.0
  %2513 = vmatpush1.xpose.msra.mxu0 0.0
  %2514 = vmatprep.subr.mxu0 0.0
  %2515 = vmatpush1.xpose.msra.mxu0 0.0
  %2516 = vmatprep.subr.mxu0 0.0
  %2517 = vmatpush1.xpose.msra.mxu0 0.0
  %2518 = vmatprep.subr.mxu0 0.0
  %2519 = vmatpush1.xpose.msra.mxu0 0.0
  %2520 = vmatprep.subr.mxu0 0.0
  %2521 = vmatpush1.xpose.msra.mxu0 0.0
  %2522 = vmatprep.subr.mxu0 0.0
  %2523 = vmatpush1.xpose.msra.mxu0 0.0
  %2524 = vmatprep.subr.mxu0 0.0
  %2525 = vmatpush1.xpose.msra.mxu0 0.0
  %2526 = vmatprep.subr.mxu0 0.0
  %2527 = vmatpush1.xpose.msra.mxu0 0.0
  %2528 = vmatprep.subr.mxu0 0.0
  %2529 = vmatpush1.xpose.msra.mxu0 0.0
  %2530 = vmatprep.subr.mxu0 0.0
  %2531 = vmatpush1.xpose.msra.mxu0 0.0
  %2532 = vmatprep.mubr.f32.mxu0 0.0
  %2533 = vmatmul.mubr.f32.gmra.mrb[0].mxu0 %v2460
  %v2534 = vpop.f32.mrb[0].mxu0
  %v2535 = vadd.f32 0.0, %v2534
  %v2536 = vpop.f32.mrb[0].mxu0
  %2537 = vdwg.mxu0
  %v2538 = vsel %vm451, %v2535, -inf
  %2539 = vmax.xlane.f32.xlu0 %v2538
  %v2540 = vpop.xlane.xlu0 %2539
  %v2541 = vsub.f32 %v2535, %v2540
  %v2542 = vmul.f32 %v2541, 1.442695
  %v2543 = vpow.pop %v2542
  %v2544 = vsel %vm451, %v2543, 0.0
  %2545 = vadd.xlane.f32.xlu0 %v2544
  %v2546 = vpop.xlane.xlu0 %2545
  %v2547 = vrcp.pop %v2546
  %v2548 = vmul.f32 %v2543, %v2547
  %v2550 = vsel %vm451, %v2548, 0
  %2552 = vmatprep.subr.mxu0 0.0
  %2553 = vmatpush1.msra.mxu0 %v2439
  %2554 = vmatprep.subr.mxu0 0.0
  %2555 = vmatpush1.msra.mxu0 %v2444
  %2556 = vmatprep.subr.mxu0 0.0
  %2557 = vmatpush1.msra.mxu0 0.0
  %2558 = vmatprep.subr.mxu0 0.0
  %2559 = vmatpush1.msra.mxu0 0.0
  %2560 = vmatprep.subr.mxu0 0.0
  %2561 = vmatpush1.msra.mxu0 0.0
  %2562 = vmatprep.subr.mxu0 0.0
  %2563 = vmatpush1.msra.mxu0 0.0
  %2564 = vmatprep.subr.mxu0 0.0
  %2565 = vmatpush1.msra.mxu0 0.0
  %2566 = vmatprep.subr.mxu0 0.0
  %2567 = vmatpush1.msra.mxu0 0.0
  %2568 = vmatprep.subr.mxu0 0.0
  %2569 = vmatpush1.msra.mxu0 0.0
  %2570 = vmatprep.subr.mxu0 0.0
  %2571 = vmatpush1.msra.mxu0 0.0
  %2572 = vmatprep.subr.mxu0 0.0
  %2573 = vmatpush1.msra.mxu0 0.0
  %2574 = vmatprep.subr.mxu0 0.0
  %2575 = vmatpush1.msra.mxu0 0.0
  %2576 = vmatprep.subr.mxu0 0.0
  %2577 = vmatpush1.msra.mxu0 0.0
  %2578 = vmatprep.subr.mxu0 0.0
  %2579 = vmatpush1.msra.mxu0 0.0
  %2580 = vmatprep.subr.mxu0 0.0
  %2581 = vmatpush1.msra.mxu0 0.0
  %2582 = vmatprep.subr.mxu0 0.0
  %2583 = vmatpush1.msra.mxu0 0.0
  %2584 = vmatprep.subr.mxu0 0.0
  %2585 = vmatpush1.msra.mxu0 0.0
  %2586 = vmatprep.subr.mxu0 0.0
  %2587 = vmatpush1.msra.mxu0 0.0
  %2588 = vmatprep.subr.mxu0 0.0
  %2589 = vmatpush1.msra.mxu0 0.0
  %2590 = vmatprep.subr.mxu0 0.0
  %2591 = vmatpush1.msra.mxu0 0.0
  %2592 = vmatprep.subr.mxu0 0.0
  %2593 = vmatpush1.msra.mxu0 0.0
  %2594 = vmatprep.subr.mxu0 0.0
  %2595 = vmatpush1.msra.mxu0 0.0
  %2596 = vmatprep.subr.mxu0 0.0
  %2597 = vmatpush1.msra.mxu0 0.0
  %2598 = vmatprep.subr.mxu0 0.0
  %2599 = vmatpush1.msra.mxu0 0.0
  %2600 = vmatprep.subr.mxu0 0.0
  %2601 = vmatpush1.msra.mxu0 0.0
  %2602 = vmatprep.subr.mxu0 0.0
  %2603 = vmatpush1.msra.mxu0 0.0
  %2604 = vmatprep.subr.mxu0 0.0
  %2605 = vmatpush1.msra.mxu0 0.0
  %2606 = vmatprep.subr.mxu0 0.0
  %2607 = vmatpush1.msra.mxu0 0.0
  %2608 = vmatprep.subr.mxu0 0.0
  %2609 = vmatpush1.msra.mxu0 0.0
  %2610 = vmatprep.subr.mxu0 0.0
  %2611 = vmatpush1.msra.mxu0 0.0
  %2612 = vmatprep.subr.mxu0 0.0
  %2613 = vmatpush1.msra.mxu0 0.0
  %2614 = vmatprep.subr.mxu0 0.0
  %2615 = vmatpush1.msra.mxu0 0.0
  %2616 = vmatprep.mubr.f32.mxu0 0.0
  %2617 = vmatmul.mubr.f32.gmra.mrb[0].mxu0 %v2550
  %v2618 = vpop.f32.mrb[0].mxu0
  %v2619 = vadd.f32 0.0, %v2618
  %v2620 = vpop.f32.mrb[0].mxu0
  %2621 = vdwg.mxu0
  %v2623 = vsel %vm371, %v2458, 0
  %v2626 = vsel %vm371, %v2351, 0
  %v2629 = vsel %vm371, %v2356, 0
  %2631 = vmatprep.subr.mxu0 0.0
  %2632 = vmatpush1.xpose.msra.mxu0 %v2626
  %2633 = vmatprep.subr.mxu0 0.0
  %2634 = vmatpush1.xpose.msra.mxu0 %v2629
  %2635 = vmatprep.subr.mxu0 0.0
  %2636 = vmatpush1.xpose.msra.mxu0 0.0
  %2637 = vmatprep.subr.mxu0 0.0
  %2638 = vmatpush1.xpose.msra.mxu0 0.0
  %2639 = vmatprep.subr.mxu0 0.0
  %2640 = vmatpush1.xpose.msra.mxu0 0.0
  %2641 = vmatprep.subr.mxu0 0.0
  %2642 = vmatpush1.xpose.msra.mxu0 0.0
  %2643 = vmatprep.subr.mxu0 0.0
  %2644 = vmatpush1.xpose.msra.mxu0 0.0
  %2645 = vmatprep.subr.mxu0 0.0
  %2646 = vmatpush1.xpose.msra.mxu0 0.0
  %2647 = vmatprep.subr.mxu0 0.0
  %2648 = vmatpush1.xpose.msra.mxu0 0.0
  %2649 = vmatprep.subr.mxu0 0.0
  %2650 = vmatpush1.xpose.msra.mxu0 0.0
  %2651 = vmatprep.subr.mxu0 0.0
  %2652 = vmatpush1.xpose.msra.mxu0 0.0
  %2653 = vmatprep.subr.mxu0 0.0
  %2654 = vmatpush1.xpose.msra.mxu0 0.0
  %2655 = vmatprep.subr.mxu0 0.0
  %2656 = vmatpush1.xpose.msra.mxu0 0.0
  %2657 = vmatprep.subr.mxu0 0.0
  %2658 = vmatpush1.xpose.msra.mxu0 0.0
  %2659 = vmatprep.subr.mxu0 0.0
  %2660 = vmatpush1.xpose.msra.mxu0 0.0
  %2661 = vmatprep.subr.mxu0 0.0
  %2662 = vmatpush1.xpose.msra.mxu0 0.0
  %2663 = vmatprep.subr.mxu0 0.0
  %2664 = vmatpush1.xpose.msra.mxu0 0.0
  %2665 = vmatprep.subr.mxu0 0.0
  %2666 = vmatpush1.xpose.msra.mxu0 0.0
  %2667 = vmatprep.subr.mxu0 0.0
  %2668 = vmatpush1.xpose.msra.mxu0 0.0
  %2669 = vmatprep.subr.mxu0 0.0
  %2670 = vmatpush1.xpose.msra.mxu0 0.0
  %2671 = vmatprep.subr.mxu0 0.0
  %2672 = vmatpush1.xpose.msra.mxu0 0.0
  %2673 = vmatprep.subr.mxu0 0.0
  %2674 = vmatpush1.xpose.msra.mxu0 0.0
  %2675 = vmatprep.subr.mxu0 0.0
  %2676 = vmatpush1.xpose.msra.mxu0 0.0
  %2677 = vmatprep.subr.mxu0 0.0
  %2678 = vmatpush1.xpose.msra.mxu0 0.0
  %2679 = vmatprep.subr.mxu0 0.0
  %2680 = vmatpush1.xpose.msra.mxu0 0.0
  %2681 = vmatprep.subr.mxu0 0.0
  %2682 = vmatpush1.xpose.msra.mxu0 0.0
  %2683 = vmatprep.subr.mxu0 0.0
  %2684 = vmatpush1.xpose.msra.mxu0 0.0
  %2685 = vmatprep.subr.mxu0 0.0
  %2686 = vmatpush1.xpose.msra.mxu0 0.0
  %2687 = vmatprep.subr.mxu0 0.0
  %2688 = vmatpush1.xpose.msra.mxu0 0.0
  %2689 = vmatprep.subr.mxu0 0.0
  %2690 = vmatpush1.xpose.msra.mxu0 0.0
  %2691 = vmatprep.subr.mxu0 0.0
  %2692 = vmatpush1.xpose.msra.mxu0 0.0
  %2693 = vmatprep.subr.mxu0 0.0
  %2694 = vmatpush1.xpose.msra.mxu0 0.0
  %2695 = vmatprep.mubr.f32.mxu0 0.0
  %2696 = vmatmul.mubr.f32.gmra.mrb[0].mxu0 %v2623
  %v2697 = vpop.f32.mrb[0].mxu0
  %v2698 = vadd.f32 0.0, %v2697
  %v2699 = vpop.f32.mrb[0].mxu0
  %2700 = vdwg.mxu0
  %v2701 = vsel %vm451, %v2698, -inf
  %2702 = vmax.xlane.f32.xlu0 %v2701
  %v2703 = vpop.xlane.xlu0 %2702
  %v2704 = vsub.f32 %v2698, %v2703
  %v2705 = vmul.f32 %v2704, 1.442695
  %v2706 = vpow.pop %v2705
  %v2707 = vsel %vm451, %v2706, 0.0
  %2708 = vadd.xlane.f32.xlu0 %v2707
  %v2709 = vpop.xlane.xlu0 %2708
  %v2710 = vrcp.pop %v2709
  %v2711 = vmul.f32 %v2706, %v2710
  %v2713 = vsel %vm451, %v2711, 0
  %2715 = vmatprep.subr.mxu0 0.0
  %2716 = vmatpush1.msra.mxu0 %v2449
  %2717 = vmatprep.subr.mxu0 0.0
  %2718 = vmatpush1.msra.mxu0 %v2454
  %2719 = vmatprep.subr.mxu0 0.0
  %2720 = vmatpush1.msra.mxu0 0.0
  %2721 = vmatprep.subr.mxu0 0.0
  %2722 = vmatpush1.msra.mxu0 0.0
  %2723 = vmatprep.subr.mxu0 0.0
  %2724 = vmatpush1.msra.mxu0 0.0
  %2725 = vmatprep.subr.mxu0 0.0
  %2726 = vmatpush1.msra.mxu0 0.0
  %2727 = vmatprep.subr.mxu0 0.0
  %2728 = vmatpush1.msra.mxu0 0.0
  %2729 = vmatprep.subr.mxu0 0.0
  %2730 = vmatpush1.msra.mxu0 0.0
  %2731 = vmatprep.subr.mxu0 0.0
  %2732 = vmatpush1.msra.mxu0 0.0
  %2733 = vmatprep.subr.mxu0 0.0
  %2734 = vmatpush1.msra.mxu0 0.0
  %2735 = vmatprep.subr.mxu0 0.0
  %2736 = vmatpush1.msra.mxu0 0.0
  %2737 = vmatprep.subr.mxu0 0.0
  %2738 = vmatpush1.msra.mxu0 0.0
  %2739 = vmatprep.subr.mxu0 0.0
  %2740 = vmatpush1.msra.mxu0 0.0
  %2741 = vmatprep.subr.mxu0 0.0
  %2742 = vmatpush1.msra.mxu0 0.0
  %2743 = vmatprep.subr.mxu0 0.0
  %2744 = vmatpush1.msra.mxu0 0.0
  %2745 = vmatprep.subr.mxu0 0.0
  %2746 = vmatpush1.msra.mxu0 0.0
  %2747 = vmatprep.subr.mxu0 0.0
  %2748 = vmatpush1.msra.mxu0 0.0
  %2749 = vmatprep.subr.mxu0 0.0
  %2750 = vmatpush1.msra.mxu0 0.0
  %2751 = vmatprep.subr.mxu0 0.0
  %2752 = vmatpush1.msra.mxu0 0.0
  %2753 = vmatprep.subr.mxu0 0.0
  %2754 = vmatpush1.msra.mxu0 0.0
  %2755 = vmatprep.subr.mxu0 0.0
  %2756 = vmatpush1.msra.mxu0 0.0
  %2757 = vmatprep.subr.mxu0 0.0
  %2758 = vmatpush1.msra.mxu0 0.0
  %2759 = vmatprep.subr.mxu0 0.0
  %2760 = vmatpush1.msra.mxu0 0.0
  %2761 = vmatprep.subr.mxu0 0.0
  %2762 = vmatpush1.msra.mxu0 0.0
  %2763 = vmatprep.subr.mxu0 0.0
  %2764 = vmatpush1.msra.mxu0 0.0
  %2765 = vmatprep.subr.mxu0 0.0
  %2766 = vmatpush1.msra.mxu0 0.0
  %2767 = vmatprep.subr.mxu0 0.0
  %2768 = vmatpush1.msra.mxu0 0.0
  %2769 = vmatprep.subr.mxu0 0.0
  %2770 = vmatpush1.msra.mxu0 0.0
  %2771 = vmatprep.subr.mxu0 0.0
  %2772 = vmatpush1.msra.mxu0 0.0
  %2773 = vmatprep.subr.mxu0 0.0
  %2774 = vmatpush1.msra.mxu0 0.0
  %2775 = vmatprep.subr.mxu0 0.0
  %2776 = vmatpush1.msra.mxu0 0.0
  %2777 = vmatprep.subr.mxu0 0.0
  %2778 = vmatpush1.msra.mxu0 0.0
  %2779 = vmatprep.mubr.f32.mxu0 0.0
  %2780 = vmatmul.mubr.f32.gmra.mrb[0].mxu0 %v2713
  %v2781 = vpop.f32.mrb[0].mxu0
  %v2782 = vadd.f32 0.0, %v2781
  %v2783 = vpop.f32.mrb[0].mxu0
  %2784 = vdwg.mxu0
  %s2785 = scalar_lea.vmem %s6, 24
  %v2786 = vld [vmem:[%s2785] sm:$0xff]
  %v2788 = vsel %vm371, %v2619, 0
  %v2791 = vsel %vm371, %v2782, 0
  %2793 = vmatprep.subr.mxu0 0.0
  %2794 = vmatpush1.msra.mxu0 %v2786
  %2795 = vmatprep.subr.mxu0 0.0
  %2796 = vmatpush1.msra.mxu0 0.0
  %2797 = vmatprep.subr.mxu0 0.0
  %2798 = vmatpush1.msra.mxu0 0.0
  %2799 = vmatprep.subr.mxu0 0.0
  %2800 = vmatpush1.msra.mxu0 0.0
  %2801 = vmatprep.subr.mxu0 0.0
  %2802 = vmatpush1.msra.mxu0 0.0
  %2803 = vmatprep.subr.mxu0 0.0
  %2804 = vmatpush1.msra.mxu0 0.0
  %2805 = vmatprep.subr.mxu0 0.0
  %2806 = vmatpush1.msra.mxu0 0.0
  %2807 = vmatprep.subr.mxu0 0.0
  %2808 = vmatpush1.msra.mxu0 0.0
  %2809 = vmatprep.subr.mxu0 0.0
  %2810 = vmatpush1.msra.mxu0 0.0
  %2811 = vmatprep.subr.mxu0 0.0
  %2812 = vmatpush1.msra.mxu0 0.0
  %2813 = vmatprep.subr.mxu0 0.0
  %2814 = vmatpush1.msra.mxu0 0.0
  %2815 = vmatprep.subr.mxu0 0.0
  %2816 = vmatpush1.msra.mxu0 0.0
  %2817 = vmatprep.subr.mxu0 0.0
  %2818 = vmatpush1.msra.mxu0 0.0
  %2819 = vmatprep.subr.mxu0 0.0
  %2820 = vmatpush1.msra.mxu0 0.0
  %2821 = vmatprep.subr.mxu0 0.0
  %2822 = vmatpush1.msra.mxu0 0.0
  %2823 = vmatprep.subr.mxu0 0.0
  %2824 = vmatpush1.msra.mxu0 0.0
  %2825 = vmatprep.subr.mxu0 0.0
  %2826 = vmatpush1.msra.mxu0 0.0
  %2827 = vmatprep.subr.mxu0 0.0
  %2828 = vmatpush1.msra.mxu0 0.0
  %2829 = vmatprep.subr.mxu0 0.0
  %2830 = vmatpush1.msra.mxu0 0.0
  %2831 = vmatprep.subr.mxu0 0.0
  %2832 = vmatpush1.msra.mxu0 0.0
  %2833 = vmatprep.subr.mxu0 0.0
  %2834 = vmatpush1.msra.mxu0 0.0
  %2835 = vmatprep.subr.mxu0 0.0
  %2836 = vmatpush1.msra.mxu0 0.0
  %2837 = vmatprep.subr.mxu0 0.0
  %2838 = vmatpush1.msra.mxu0 0.0
  %2839 = vmatprep.subr.mxu0 0.0
  %2840 = vmatpush1.msra.mxu0 0.0
  %2841 = vmatprep.subr.mxu0 0.0
  %2842 = vmatpush1.msra.mxu0 0.0
  %2843 = vmatprep.subr.mxu0 0.0
  %2844 = vmatpush1.msra.mxu0 0.0
  %2845 = vmatprep.subr.mxu0 0.0
  %2846 = vmatpush1.msra.mxu0 0.0
  %2847 = vmatprep.subr.mxu0 0.0
  %2848 = vmatpush1.msra.mxu0 0.0
  %2849 = vmatprep.subr.mxu0 0.0
  %2850 = vmatpush1.msra.mxu0 0.0
  %2851 = vmatprep.subr.mxu0 0.0
  %2852 = vmatpush1.msra.mxu0 0.0
  %2853 = vmatprep.subr.mxu0 0.0
  %2854 = vmatpush1.msra.mxu0 0.0
  %2855 = vmatprep.subr.mxu0 0.0
  %2856 = vmatpush1.msra.mxu0 0.0
  %2857 = vmatprep.mubr.f32.mxu0 0.0
  %2858 = vmatmul.mubr.f32.gmra.mrb[0].mxu0 %v2788
  %v2859 = vpop.f32.mrb[0].mxu0
  %v2860 = vadd.f32 0.0, %v2859
  %v2861 = vpop.f32.mrb[0].mxu0
  %2862 = vmatprep.mubr.f32.mxu0 0.0
  %2863 = vmatmul.mubr.f32.gmra.mrb[0].mxu0 %v2791
  %v2864 = vpop.f32.mrb[0].mxu0
  %v2865 = vadd.f32 0.0, %v2864
  %v2866 = vpop.f32.mrb[0].mxu0
  %2867 = vdwg.mxu0
  %v2868 = vadd.f32 %v2171, %v2860
  %v2869 = vadd.f32 %v2172, %v2865
  %v2870 = vld [vmem:[%s10] sm:$0x1]
  %v2872 = vlaneseq
  %v2873 = vshrl.u32 %v2872, 7
  %v2874 = vsub.s32 0, %v2873
  %v2875 = vrot.slane %v2870, %v2874
  %v2877 = vadd.f32 %v2868, %v2875
  %v2878 = vadd.f32 %v2869, %v2875
  %v2879 = vadd.f32 %v38, %v2877
  %v2880 = vadd.f32 %v39, %v2878
  %s2881 = scalar_lea.vmem %s10, 2
  %v2882 = vld [vmem:[%s2881] sm:$0x1]
  %s2883 = scalar_lea.vmem %s10, 3
  %v2884 = vld [vmem:[%s2883] sm:$0x1]
  %v2885 = vsel %vm67, %v2879, 0.0
  %2886 = vadd.xlane.f32.xlu0 %v2885
  %v2887 = vpop.xlane.xlu0 %2886
  %v2888 = vsel %vm67, %v2880, 0.0
  %2889 = vadd.xlane.f32.xlu0 %v2888
  %v2890 = vpop.xlane.xlu0 %2889
  %v2891 = vrcp.pop 32.0
  %v2892 = vmul.f32 %v2887, %v2891
  %v2893 = vmul.f32 %v2890, %v2891
  %v2894 = vsub.f32 %v2879, %v2892
  %v2895 = vsub.f32 %v2880, %v2893
  %v2896 = vmul.f32 %v2894, %v2894
  %v2897 = vmul.f32 %v2895, %v2895
  %v2898 = vsel %vm67, %v2896, 0.0
  %2899 = vadd.xlane.f32.xlu0 %v2898
  %v2900 = vpop.xlane.xlu0 %2899
  %v2901 = vsel %vm67, %v2897, 0.0
  %2902 = vadd.xlane.f32.xlu0 %v2901
  %v2903 = vpop.xlane.xlu0 %2902
  %v2904 = vmul.f32 %v2900, %v2891
  %v2905 = vmul.f32 %v2903, %v2891
  %v2906 = vadd.f32 %v2904, 1e-05
  %v2907 = vadd.f32 %v2905, 1e-05
  %v2908 = vrsqrt.pop %v2906
  %v2909 = vrsqrt.pop %v2907
  %v2910 = vmul.f32 %v2894, %v2908
  %v2911 = vmul.f32 %v2895, %v2909
  %v2913 = vlaneseq
  %v2914 = vshrl.u32 %v2913, 7
  %v2915 = vsub.s32 0, %v2914
  %v2916 = vrot.slane %v2882, %v2915
  %v2918 = vmul.f32 %v2910, %v2916
  %v2919 = vmul.f32 %v2911, %v2916
  %v2921 = vlaneseq
  %v2922 = vshrl.u32 %v2921, 7
  %v2923 = vsub.s32 0, %v2922
  %v2924 = vrot.slane %v2884, %v2923
  %v2926 = vadd.f32 %v2918, %v2924
  %v2927 = vadd.f32 %v2919, %v2924
  %v2928 = vld [vmem:[%s7] sm:$0xff]
  %v2929 = vld [vmem:[%s7 + $0x8] sm:$0xff]
  %v2930 = vld [vmem:[%s7 + $0x10] sm:$0xff]
  %v2931 = vld [vmem:[%s7 + $0x18] sm:$0xff]
  %v2932 = vld [vmem:[%s8] sm:$0x1]
  %v2934 = vlaneseq
  %v2935 = vshrl.u32 %v2934, 7
  %v2936 = vsub.s32 0, %v2935
  %v2937 = vrot.slane %v2932, %v2936
  %v2940 = vsel %vm67, %v2926, 0
  %v2943 = vsel %vm67, %v2927, 0
  %2945 = vmatprep.subr.mxu0 0.0
  %2946 = vmatpush1.msra.mxu0 %v2928
  %2947 = vmatprep.subr.mxu0 0.0
  %2948 = vmatpush1.msra.mxu0 %v2929
  %2949 = vmatprep.subr.mxu0 0.0
  %2950 = vmatpush1.msra.mxu0 %v2930
  %2951 = vmatprep.subr.mxu0 0.0
  %2952 = vmatpush1.msra.mxu0 %v2931
  %2953 = vmatprep.subr.mxu0 0.0
  %2954 = vmatpush1.msra.mxu0 0.0
  %2955 = vmatprep.subr.mxu0 0.0
  %2956 = vmatpush1.msra.mxu0 0.0
  %2957 = vmatprep.subr.mxu0 0.0
  %2958 = vmatpush1.msra.mxu0 0.0
  %2959 = vmatprep.subr.mxu0 0.0
  %2960 = vmatpush1.msra.mxu0 0.0
  %2961 = vmatprep.subr.mxu0 0.0
  %2962 = vmatpush1.msra.mxu0 0.0
  %2963 = vmatprep.subr.mxu0 0.0
  %2964 = vmatpush1.msra.mxu0 0.0
  %2965 = vmatprep.subr.mxu0 0.0
  %2966 = vmatpush1.msra.mxu0 0.0
  %2967 = vmatprep.subr.mxu0 0.0
  %2968 = vmatpush1.msra.mxu0 0.0
  %2969 = vmatprep.subr.mxu0 0.0
  %2970 = vmatpush1.msra.mxu0 0.0
  %2971 = vmatprep.subr.mxu0 0.0
  %2972 = vmatpush1.msra.mxu0 0.0
  %2973 = vmatprep.subr.mxu0 0.0
  %2974 = vmatpush1.msra.mxu0 0.0
  %2975 = vmatprep.subr.mxu0 0.0
  %2976 = vmatpush1.msra.mxu0 0.0
  %2977 = vmatprep.subr.mxu0 0.0
  %2978 = vmatpush1.msra.mxu0 0.0
  %2979 = vmatprep.subr.mxu0 0.0
  %2980 = vmatpush1.msra.mxu0 0.0
  %2981 = vmatprep.subr.mxu0 0.0
  %2982 = vmatpush1.msra.mxu0 0.0
  %2983 = vmatprep.subr.mxu0 0.0
  %2984 = vmatpush1.msra.mxu0 0.0
  %2985 = vmatprep.subr.mxu0 0.0
  %2986 = vmatpush1.msra.mxu0 0.0
  %2987 = vmatprep.subr.mxu0 0.0
  %2988 = vmatpush1.msra.mxu0 0.0
  %2989 = vmatprep.subr.mxu0 0.0
  %2990 = vmatpush1.msra.mxu0 0.0
  %2991 = vmatprep.subr.mxu0 0.0
  %2992 = vmatpush1.msra.mxu0 0.0
  %2993 = vmatprep.subr.mxu0 0.0
  %2994 = vmatpush1.msra.mxu0 0.0
  %2995 = vmatprep.subr.mxu0 0.0
  %2996 = vmatpush1.msra.mxu0 0.0
  %2997 = vmatprep.subr.mxu0 0.0
  %2998 = vmatpush1.msra.mxu0 0.0
  %2999 = vmatprep.subr.mxu0 0.0
  %3000 = vmatpush1.msra.mxu0 0.0
  %3001 = vmatprep.subr.mxu0 0.0
  %3002 = vmatpush1.msra.mxu0 0.0
  %3003 = vmatprep.subr.mxu0 0.0
  %3004 = vmatpush1.msra.mxu0 0.0
  %3005 = vmatprep.subr.mxu0 0.0
  %3006 = vmatpush1.msra.mxu0 0.0
  %3007 = vmatprep.subr.mxu0 0.0
  %3008 = vmatpush1.msra.mxu0 0.0
  %3009 = vmatprep.mubr.f32.mxu0 0.0
  %3010 = vmatmul.mubr.f32.gmra.mrb[0].mxu0 %v2940
  %v3011 = vpop.f32.mrb[0].mxu0
  %v3012 = vadd.f32 %v2937, %v3011
  %v3013 = vpop.f32.mrb[0].mxu0
  %3014 = vmatprep.mubr.f32.mxu0 0.0
  %3015 = vmatmul.mubr.f32.gmra.mrb[0].mxu0 %v2943
  %v3016 = vpop.f32.mrb[0].mxu0
  %v3017 = vadd.f32 %v2937, %v3016
  %v3018 = vpop.f32.mrb[0].mxu0
  %3019 = vdwg.mxu0
  %v3020 = vmax.f32 %v3012, 0.0
  %v3021 = vmax.f32 %v3017, 0.0
  %v3022 = vld [vmem:[%s9] sm:$0xff]
  %v3023 = vld [vmem:[%s9 + $0x8] sm:$0xff]
  %v3024 = vld [vmem:[%s9 + $0x10] sm:$0xff]
  %v3025 = vld [vmem:[%s9 + $0x18] sm:$0xff]
  %v3026 = vld [vmem:[%s9 + $0x20] sm:$0xff]
  %v3027 = vld [vmem:[%s9 + $0x28] sm:$0xff]
  %v3028 = vld [vmem:[%s9 + $0x30] sm:$0xff]
  %v3029 = vld [vmem:[%s9 + $0x38] sm:$0xff]
  %s3030 = scalar_lea.vmem %s10, 1
  %v3031 = vld [vmem:[%s3030] sm:$0x1]
  %v3033 = vlaneseq
  %v3034 = vshrl.u32 %v3033, 7
  %v3035 = vsub.s32 0, %v3034
  %v3036 = vrot.slane %v3031, %v3035
  %vm3038 = vcmask 523264
  %v3040 = vsel %vm3038, %v3020, 0
  %v3043 = vsel %vm3038, %v3021, 0
  %3045 = vmatprep.subr.mxu0 0.0
  %3046 = vmatpush1.msra.mxu0 %v3022
  %3047 = vmatprep.subr.mxu0 0.0
  %3048 = vmatpush1.msra.mxu0 %v3023
  %3049 = vmatprep.subr.mxu0 0.0
  %3050 = vmatpush1.msra.mxu0 %v3024
  %3051 = vmatprep.subr.mxu0 0.0
  %3052 = vmatpush1.msra.mxu0 %v3025
  %3053 = vmatprep.subr.mxu0 0.0
  %3054 = vmatpush1.msra.mxu0 %v3026
  %3055 = vmatprep.subr.mxu0 0.0
  %3056 = vmatpush1.msra.mxu0 %v3027
  %3057 = vmatprep.subr.mxu0 0.0
  %3058 = vmatpush1.msra.mxu0 %v3028
  %3059 = vmatprep.subr.mxu0 0.0
  %3060 = vmatpush1.msra.mxu0 %v3029
  %3061 = vmatprep.subr.mxu0 0.0
  %3062 = vmatpush1.msra.mxu0 0.0
  %3063 = vmatprep.subr.mxu0 0.0
  %3064 = vmatpush1.msra.mxu0 0.0
  %3065 = vmatprep.subr.mxu0 0.0
  %3066 = vmatpush1.msra.mxu0 0.0
  %3067 = vmatprep.subr.mxu0 0.0
  %3068 = vmatpush1.msra.mxu0 0.0
  %3069 = vmatprep.subr.mxu0 0.0
  %3070 = vmatpush1.msra.mxu0 0.0
  %3071 = vmatprep.subr.mxu0 0.0
  %3072 = vmatpush1.msra.mxu0 0.0
  %3073 = vmatprep.subr.mxu0 0.0
  %3074 = vmatpush1.msra.mxu0 0.0
  %3075 = vmatprep.subr.mxu0 0.0
  %3076 = vmatpush1.msra.mxu0 0.0
  %3077 = vmatprep.subr.mxu0 0.0
  %3078 = vmatpush1.msra.mxu0 0.0
  %3079 = vmatprep.subr.mxu0 0.0
  %3080 = vmatpush1.msra.mxu0 0.0
  %3081 = vmatprep.subr.mxu0 0.0
  %3082 = vmatpush1.msra.mxu0 0.0
  %3083 = vmatprep.subr.mxu0 0.0
  %3084 = vmatpush1.msra.mxu0 0.0
  %3085 = vmatprep.subr.mxu0 0.0
  %3086 = vmatpush1.msra.mxu0 0.0
  %3087 = vmatprep.subr.mxu0 0.0
  %3088 = vmatpush1.msra.mxu0 0.0
  %3089 = vmatprep.subr.mxu0 0.0
  %3090 = vmatpush1.msra.mxu0 0.0
  %3091 = vmatprep.subr.mxu0 0.0
  %3092 = vmatpush1.msra.mxu0 0.0
  %3093 = vmatprep.subr.mxu0 0.0
  %3094 = vmatpush1.msra.mxu0 0.0
  %3095 = vmatprep.subr.mxu0 0.0
  %3096 = vmatpush1.msra.mxu0 0.0
  %3097 = vmatprep.subr.mxu0 0.0
  %3098 = vmatpush1.msra.mxu0 0.0
  %3099 = vmatprep.subr.mxu0 0.0
  %3100 = vmatpush1.msra.mxu0 0.0
  %3101 = vmatprep.subr.mxu0 0.0
  %3102 = vmatpush1.msra.mxu0 0.0
  %3103 = vmatprep.subr.mxu0 0.0
  %3104 = vmatpush1.msra.mxu0 0.0
  %3105 = vmatprep.subr.mxu0 0.0
  %3106 = vmatpush1.msra.mxu0 0.0
  %3107 = vmatprep.subr.mxu0 0.0
  %3108 = vmatpush1.msra.mxu0 0.0
  %3109 = vmatprep.mubr.f32.mxu0 0.0
  %3110 = vmatmul.mubr.f32.gmra.mrb[0].mxu0 %v3040
  %v3111 = vpop.f32.mrb[0].mxu0
  %v3112 = vadd.f32 %v3036, %v3111
  %v3113 = vpop.f32.mrb[0].mxu0
  %3114 = vmatprep.mubr.f32.mxu0 0.0
  %3115 = vmatmul.mubr.f32.gmra.mrb[0].mxu0 %v3043
  %v3116 = vpop.f32.mrb[0].mxu0
  %v3117 = vadd.f32 %v3036, %v3116
  %v3118 = vpop.f32.mrb[0].mxu0
  %3119 = vdwg.mxu0
  %v3120 = vadd.f32 %v2926, %v3112
  %v3121 = vadd.f32 %v2927, %v3117
  %s3122 = scalar_lea.vmem %s10, 4
  %v3123 = vld [vmem:[%s3122] sm:$0x1]
  %s3124 = scalar_lea.vmem %s10, 5
  %v3125 = vld [vmem:[%s3124] sm:$0x1]
  %v3126 = vsel %vm67, %v3120, 0.0
  %3127 = vadd.xlane.f32.xlu0 %v3126
  %v3128 = vpop.xlane.xlu0 %3127
  %v3129 = vsel %vm67, %v3121, 0.0
  %3130 = vadd.xlane.f32.xlu0 %v3129
  %v3131 = vpop.xlane.xlu0 %3130
  %v3132 = vmul.f32 %v3128, %v2891
  %v3133 = vmul.f32 %v3131, %v2891
  %v3134 = vsub.f32 %v3120, %v3132
  %v3135 = vsub.f32 %v3121, %v3133
  %v3136 = vmul.f32 %v3134, %v3134
  %v3137 = vmul.f32 %v3135, %v3135
  %v3138 = vsel %vm67, %v3136, 0.0
  %3139 = vadd.xlane.f32.xlu0 %v3138
  %v3140 = vpop.xlane.xlu0 %3139
  %v3141 = vsel %vm67, %v3137, 0.0
  %3142 = vadd.xlane.f32.xlu0 %v3141
  %v3143 = vpop.xlane.xlu0 %3142
  %v3144 = vmul.f32 %v3140, %v2891
  %v3145 = vmul.f32 %v3143, %v2891
  %v3146 = vadd.f32 %v3144, 1e-05
  %v3147 = vadd.f32 %v3145, 1e-05
  %v3148 = vrsqrt.pop %v3146
  %v3149 = vrsqrt.pop %v3147
  %v3150 = vmul.f32 %v3134, %v3148
  %v3151 = vmul.f32 %v3135, %v3149
  %v3153 = vlaneseq
  %v3154 = vshrl.u32 %v3153, 7
  %v3155 = vsub.s32 0, %v3154
  %v3156 = vrot.slane %v3123, %v3155
  %v3158 = vmul.f32 %v3150, %v3156
  %v3159 = vmul.f32 %v3151, %v3156
  %v3161 = vlaneseq
  %v3162 = vshrl.u32 %v3161, 7
  %v3163 = vsub.s32 0, %v3162
  %v3164 = vrot.slane %v3125, %v3163
  %v3166 = vadd.f32 %v3158, %v3164
  %v3167 = vadd.f32 %v3159, %v3164
  %3168 = vst.msk [vmem:[%s11] sm:$0xff] %vm67, %v3166
  %3169 = vst.msk [vmem:[%s11 + $0x8] sm:$0xff] %vm67, %v3167
  // Predicated region
  $region46: #{decoder_forward.1} parent=0 // pred_check
    _
  $region47: #{decoder_forward.1} parent=0 // pred_check_branch
    %3171 = sbr.rel (0) target = $region49
  $region48: #{decoder_forward.1} parent=0 // pred_region
    _
  $region49: #{decoder_forward.1} parent=0 // pred_fallthru
    _
  // Predicated region
  $region50: #{decoder_forward.1} parent=0 // pred_check
    _
  $region51: #{decoder_forward.1} parent=0 // pred_check_branch
    %3173 = sbr.rel (0) target = $region53
  $region52: #{decoder_forward.1} parent=0 // pred_region
    _
  $region53: #{decoder_forward.1} parent=0 // pred_fallthru
    _

</llo_original>
